<compile_context>
chip_gen: v6e
topology: v6e:2x2x1
jax: 0.10.0
libtpu: 0.0.40
codegen_flags: <defaults>
</compile_context>

<pallas_src>
import numpy as np
import jax
import jax.numpy as jnp
from jax.experimental import pallas as pl
from jax.experimental.pallas import tpu as pltpu

C_OUT = 128  # output channels of every branch (5 * 128 = 640 total)


# --------------------------------------------------------------------------
# Fused Pallas kernel: one grid step == one batch element, all 5 branches
# --------------------------------------------------------------------------
def _aspp_kernel(taps_ref, pooled_ref,
                 w1_ref, b1_ref, w2_ref, b2_ref, w3_ref, b3_ref,
                 w1p_ref, b1p_ref, w2p_ref, b2p_ref, up_ref,
                 out_ref):
    four_co = w3_ref.shape[0]                                   # 4 * 128

    # ---- branches 0..3: merged block-structured 3-matmul path ------------
    taps = taps_ref[0]                                          # (128, T) bf16
    t = jnp.dot(w1_ref[...], taps, preferred_element_type=jnp.float32)
    t = jnp.maximum(t + b1_ref[...], 0.0)                       # (4C, T) f32
    t = jnp.dot(w2_ref[...], t.astype(jnp.bfloat16),
                preferred_element_type=jnp.float32)
    t = jnp.maximum(t + b2_ref[...], 0.0)                       # (4C, T) f32
    # nn.Dropout(p=0.5): identity in eval mode.
    t = jnp.dot(w3_ref[...], t.astype(jnp.bfloat16),
                preferred_element_type=jnp.float32)
    out_ref[0, 0:four_co, :] = jnp.maximum(t + b3_ref[...], 0.0)  # (512, T)

    # ---- branch 4: conv_block2 on pooled tokens + bicubic x2 upsample ----
    p = pooled_ref[0]                                           # (C, hw) bf16
    u = jnp.dot(w1p_ref[...], p, preferred_element_type=jnp.float32)
    u = jnp.maximum(u + b1p_ref[...], 0.0)                      # (C, hw) f32
    # nn.Dropout(p=0.5): identity in eval mode.
    u = jnp.dot(w2p_ref[...], u.astype(jnp.bfloat16),
                preferred_element_type=jnp.float32)
    u = jnp.maximum(u + b2p_ref[...], 0.0)                      # (128, hw) f32
    # bicubic x2 upsample == fixed linear map on tokens: (128,hw)@(hw,T), f32
    out_ref[0, four_co:, :] = jnp.dot(u, up_ref[...],
                                      preferred_element_type=jnp.float32)


# --------------------------------------------------------------------------
# PyTorch-matching bicubic (align_corners=False, a = -0.75) as a linear map
# --------------------------------------------------------------------------
def _cubic_weights(t, a=-0.75):
    def w_near(x):   # |x| <= 1
        return ((a + 2.0) * x - (a + 3.0)) * x * x + 1.0

    def w_far(x):    # 1 < |x| < 2
        return (((x - 5.0) * x + 8.0) * x - 4.0) * a

    return np.array([w_far(1.0 + t), w_near(t), w_near(1.0 - t), w_far(2.0 - t)])


def bicubic_matrix(out_size, in_size):
    scale = in_size / out_size
    M = np.zeros((out_size, in_size), dtype=np.float64)
    for o in range(out_size):
        src = (o + 0.5) * scale - 0.5
        i0 = int(np.floor(src))
        t = src - i0
        w = _cubic_weights(t)
        for k in range(4):
            idx = min(max(i0 - 1 + k, 0), in_size - 1)   # clamped (PyTorch)
            M[o, idx] += w[k]
    return M


# --------------------------------------------------------------------------
# Parameter initialization (deterministic, synthetic), packed block-structured
# --------------------------------------------------------------------------
def init_params(key, c_in, H, W, c_out=C_OUT):
    keys = jax.random.split(key, 40)
    it = iter(keys)

    def rnd(shape):
        return 0.1 * jax.random.normal(next(it), shape, dtype=jnp.float32)

    C = c_in
    k_taps = ((27 * C + 127) // 128) * 128        # 108 -> 128 for C=4

    # per-branch raw weights (same parameterisation as the PyTorch module)
    w_s1, b_s1, w_s2, b_s2, w_s3, b_s3 = [], [], [], [], [], []
    for _d in (18, 12, 6):
        conv1 = rnd((C, C, 3, 3))                                # (co,ci,kh,kw)
        # rows of the tap slab are ordered (kh*3+kw)*C + ci
        w_s1.append(jnp.transpose(conv1, (0, 2, 3, 1)).reshape(C, 9 * C))
        b_s1.append(rnd((C, 1)))
        w_s2.append(rnd((C, C))); b_s2.append(rnd((C, 1)))
        w_s3.append(rnd((c_out, C))); b_s3.append(rnd((c_out, 1)))
    # conv_block1
    w1_b1 = rnd((C, C)); b_s1.append(rnd((C, 1)))
    w_s2.append(rnd((C, C))); b_s2.append(rnd((C, 1)))
    w_s3.append(rnd((c_out, C))); b_s3.append(rnd((c_out, 1)))

    # ---- pack branches 0..3 into 3 block-structured merged matrices ------
    W1 = jnp.zeros((4 * C, k_taps), jnp.float32)
    for b in range(3):
        W1 = W1.at[b * C:(b + 1) * C, b * 9 * C:(b + 1) * 9 * C].set(w_s1[b])
    # conv_block1's first 1x1 acts on the raw input == centre tap of the d=6
    # slab (tap index 4), i.e. columns 2*9C + 4C : 2*9C + 5C.
    W1 = W1.at[3 * C:4 * C, 2 * 9 * C + 4 * C: 2 * 9 * C + 5 * C].set(w1_b1)
    B1 = jnp.concatenate(b_s1, axis=0)                            # (4C, 1)

    W2 = jnp.zeros((4 * C, 4 * C), jnp.float32)
    for b in range(4):
        W2 = W2.at[b * C:(b + 1) * C, b * C:(b + 1) * C].set(w_s2[b])
    B2 = jnp.concatenate(b_s2, axis=0)                            # (4C, 1)

    W3 = jnp.zeros((4 * c_out, 4 * C), jnp.float32)
    for b in range(4):
        W3 = W3.at[b * c_out:(b + 1) * c_out, b * C:(b + 1) * C].set(w_s3[b])
    B3 = jnp.concatenate(b_s3, axis=0)                            # (512, 1)

    params = dict(
        w1=W1.astype(jnp.bfloat16), b1=B1,
        w2=W2.astype(jnp.bfloat16), b2=B2,
        w3=W3.astype(jnp.bfloat16), b3=B3,
        w1p=rnd((C, C)).astype(jnp.bfloat16), b1p=rnd((C, 1)),
        w2p=rnd((c_out, C)).astype(jnp.bfloat16), b2p=rnd((c_out, 1)),
    )
    # upsample map U[(i*w+j), (Y*W+X)] = Bh[Y,i] * Bw[X,j]  (kept in f32)
    Bh = bicubic_matrix(H, H // 2)
    Bw = bicubic_matrix(W, W // 2)
    params["up"] = jnp.asarray(np.kron(Bh, Bw).T, dtype=jnp.float32)
    return params


# --------------------------------------------------------------------------
# ASPP forward
# --------------------------------------------------------------------------
def aspp_forward(x_nchw, params):
    N, C, H, W = x_nchw.shape
    assert H % 2 == 0 and W % 2 == 0, "AvgPool2d(2) path assumes even H, W"
    assert H > 18 and W > 18, "reflect padding 18 requires H, W > 18 (as in PyTorch)"
    T = H * W
    hw = (H // 2) * (W // 2)
    k_taps = params["w1"].shape[1]
    PAD = 18

    # ---- XLA-side glue (small, done once) --------------------------------
    # One reflect pad with the largest dilation serves all three dilations:
    # the reflect pad of a smaller dilation is an interior slab of this one.
    x_bf = x_nchw.astype(jnp.bfloat16)
    xpad = jnp.pad(x_bf, ((0, 0), (0, 0), (PAD, PAD), (PAD, PAD)), mode="reflect")

    slabs = []
    for d in (18, 12, 6):
        taps = [xpad[:, :,
                     PAD + (kh - 1) * d: PAD + (kh - 1) * d + H,
                     PAD + (kw - 1) * d: PAD + (kw - 1) * d + W]
                for kh in range(3) for kw in range(3)]
        slabs.append(jnp.concatenate(taps, axis=1).reshape(N, 9 * C, T))
    taps_all = jnp.concatenate(slabs, axis=1)                    # (N, 27C, T)
    taps_all = jnp.pad(taps_all, ((0, 0), (0, k_taps - 27 * C), (0, 0)))

    # AvgPool2d(2) as a plain XLA reduce (tiny), tokens-on-lanes layout.
    pooled = x_nchw.reshape(N, C, H // 2, 2, W // 2, 2).mean(axis=(3, 5))
    pooled = pooled.reshape(N, C, hw).astype(jnp.bfloat16)

    # ---- one fused pallas_call, grid = (N,) ------------------------------
    batch3 = lambda n: (n, 0, 0)
    fixed2 = lambda n: (0, 0)

    out = pl.pallas_call(
        _aspp_kernel,
        out_shape=jax.ShapeDtypeStruct((N, 5 * C_OUT, T), jnp.float32),
        grid=(N,),
        in_specs=[
            pl.BlockSpec((1, k_taps, T), batch3),                # taps (bf16)
            pl.BlockSpec((1, C, hw), batch3),                    # pooled (bf16)
            pl.BlockSpec((4 * C, k_taps), fixed2),               # w1 (merged)
            pl.BlockSpec((4 * C, 1), fixed2),                    # b1
            pl.BlockSpec((4 * C, 4 * C), fixed2),                # w2 (merged)
            pl.BlockSpec((4 * C, 1), fixed2),                    # b2
            pl.BlockSpec((4 * C_OUT, 4 * C), fixed2),            # w3 (merged)
            pl.BlockSpec((4 * C_OUT, 1), fixed2),                # b3
            pl.BlockSpec((C, C), fixed2),                        # w1p
            pl.BlockSpec((C, 1), fixed2),                        # b1p
            pl.BlockSpec((C_OUT, C), fixed2),                    # w2p
            pl.BlockSpec((C_OUT, 1), fixed2),                    # b2p
            pl.BlockSpec((hw, T), fixed2),                       # up (f32)
        ],
        out_specs=pl.BlockSpec((1, 5 * C_OUT, T), batch3),
        compiler_params=pltpu.CompilerParams(
            dimension_semantics=("parallel",),
            vmem_limit_bytes=32 * 1024 * 1024),
    )(taps_all, pooled,
      params["w1"], params["b1"], params["w2"], params["b2"],
      params["w3"], params["b3"],
      params["w1p"], params["b1p"], params["w2p"], params["b2p"],
      params["up"])

    # (N, 640, H*W) is already NCHW tokens -> free reshape, no transpose.
    return out.reshape(N, 5 * C_OUT, H, W)


# --------------------------------------------------------------------------
if __name__ == "__main__":
    key = jax.random.PRNGKey(0)
    # H, W must exceed the largest reflect padding (18) -- same constraint as
    # the PyTorch module; 32x32 also keeps H*W a multiple of 128 (lane-dense).
    N, C, H, W = 2, 4, 32, 32
    kx, kp = jax.random.split(key)
    x = jax.random.normal(kx, (N, C, H, W), dtype=jnp.float32)
    params = init_params(kp, C, H, W)

    out = jax.jit(aspp_forward)(x, params)
    out = jax.block_until_ready(out)

    assert out.shape == (N, 5 * 128, H, W), out.shape
    assert bool(jnp.all(jnp.isfinite(out)))
    print("KERNEL_OK")
</pallas_src>

<mosaic_0001>
module attributes {stable_mosaic.version = 11 : i64} {
  func.func @_aspp_kernel(%arg0: i32, %arg1: memref<1x128x1024xbf16, #tpu.memory_space<vmem>>, %arg2: memref<1x4x256xbf16, #tpu.memory_space<vmem>>, %arg3: memref<16x128xbf16, #tpu.memory_space<vmem>>, %arg4: memref<16x1xf32, #tpu.memory_space<vmem>>, %arg5: memref<16x16xbf16, #tpu.memory_space<vmem>>, %arg6: memref<16x1xf32, #tpu.memory_space<vmem>>, %arg7: memref<512x16xbf16, #tpu.memory_space<vmem>>, %arg8: memref<512x1xf32, #tpu.memory_space<vmem>>, %arg9: memref<4x4xbf16, #tpu.memory_space<vmem>>, %arg10: memref<4x1xf32, #tpu.memory_space<vmem>>, %arg11: memref<128x4xbf16, #tpu.memory_space<vmem>>, %arg12: memref<128x1xf32, #tpu.memory_space<vmem>>, %arg13: memref<256x1024xf32, #tpu.memory_space<vmem>>, %arg14: memref<1x640x1024xf32, #tpu.memory_space<vmem>>) attributes {dimension_semantics = [#tpu.dimension_semantics<parallel>], iteration_bounds = array<i64: 2>, scalar_prefetch = 0 : i64, scratch_operands = 0 : i64, tpu.core_type = #tpu.core_type<tc>, window_params = [{transform_indices = @transform_0, window_bounds = array<i64: 1, 128, 1024>}, {transform_indices = @transform_1, window_bounds = array<i64: 1, 4, 256>}, {pipeline_mode = #tpu.pipeline_mode<synchronous>, transform_indices = @transform_2, window_bounds = array<i64: 16, 128>}, {pipeline_mode = #tpu.pipeline_mode<synchronous>, transform_indices = @transform_3, window_bounds = array<i64: 16, 1>}, {pipeline_mode = #tpu.pipeline_mode<synchronous>, transform_indices = @transform_4, window_bounds = array<i64: 16, 16>}, {pipeline_mode = #tpu.pipeline_mode<synchronous>, transform_indices = @transform_5, window_bounds = array<i64: 16, 1>}, {pipeline_mode = #tpu.pipeline_mode<synchronous>, transform_indices = @transform_6, window_bounds = array<i64: 512, 16>}, {pipeline_mode = #tpu.pipeline_mode<synchronous>, transform_indices = @transform_7, window_bounds = array<i64: 512, 1>}, {pipeline_mode = #tpu.pipeline_mode<synchronous>, transform_indices = @transform_8, window_bounds = array<i64: 4, 4>}, {pipeline_mode = #tpu.pipeline_mode<synchronous>, transform_indices = @transform_9, window_bounds = array<i64: 4, 1>}, {pipeline_mode = #tpu.pipeline_mode<synchronous>, transform_indices = @transform_10, window_bounds = array<i64: 128, 4>}, {pipeline_mode = #tpu.pipeline_mode<synchronous>, transform_indices = @transform_11, window_bounds = array<i64: 128, 1>}, {pipeline_mode = #tpu.pipeline_mode<synchronous>, transform_indices = @transform_12, window_bounds = array<i64: 256, 1024>}, {transform_indices = @transform_13, window_bounds = array<i64: 1, 640, 1024>}]} {
    %c0 = arith.constant 0 : index
    %c0_0 = arith.constant 0 : index
    %c0_1 = arith.constant 0 : index
    %0 = vector.load %arg1[%c0, %c0_0, %c0_1] : memref<1x128x1024xbf16, #tpu.memory_space<vmem>>, vector<1x128x1024xbf16>
    %1 = vector.shape_cast %0 : vector<1x128x1024xbf16> to vector<128x1024xbf16>
    %c0_2 = arith.constant 0 : index
    %c0_3 = arith.constant 0 : index
    %2 = vector.load %arg3[%c0_2, %c0_3] : memref<16x128xbf16, #tpu.memory_space<vmem>>, vector<16x128xbf16>
    %cst = arith.constant dense<0.000000e+00> : vector<16x1024xf32>
    %3 = tpu.matmul %2, %1, %cst {dimension_numbers = #tpu.dot_dimension_numbers<[1], [0], [0], [1], [0, 0, 1, 1], [], []>} : vector<16x128xbf16>, vector<128x1024xbf16>, vector<16x1024xf32> -> vector<16x1024xf32>
    %c0_4 = arith.constant 0 : index
    %c0_5 = arith.constant 0 : index
    %4 = vector.load %arg4[%c0_4, %c0_5] : memref<16x1xf32, #tpu.memory_space<vmem>>, vector<16x1xf32>
    %5 = vector.broadcast %4 : vector<16x1xf32> to vector<16x1024xf32>
    %6 = arith.addf %3, %5 : vector<16x1024xf32>
    %cst_6 = arith.constant 0.000000e+00 : f32
    %7 = vector.broadcast %cst_6 : f32 to vector<16x1024xf32>
    %8 = arith.maximumf %6, %7 : vector<16x1024xf32>
    %c0_7 = arith.constant 0 : index
    %c0_8 = arith.constant 0 : index
    %9 = vector.load %arg5[%c0_7, %c0_8] : memref<16x16xbf16, #tpu.memory_space<vmem>>, vector<16x16xbf16>
    %10 = arith.truncf %8 : vector<16x1024xf32> to vector<16x1024xbf16>
    %cst_9 = arith.constant dense<0.000000e+00> : vector<16x1024xf32>
    %11 = tpu.matmul %9, %10, %cst_9 {dimension_numbers = #tpu.dot_dimension_numbers<[1], [0], [0], [1], [0, 0, 1, 1], [], []>} : vector<16x16xbf16>, vector<16x1024xbf16>, vector<16x1024xf32> -> vector<16x1024xf32>
    %c0_10 = arith.constant 0 : index
    %c0_11 = arith.constant 0 : index
    %12 = vector.load %arg6[%c0_10, %c0_11] : memref<16x1xf32, #tpu.memory_space<vmem>>, vector<16x1xf32>
    %13 = vector.broadcast %12 : vector<16x1xf32> to vector<16x1024xf32>
    %14 = arith.addf %11, %13 : vector<16x1024xf32>
    %cst_12 = arith.constant 0.000000e+00 : f32
    %15 = vector.broadcast %cst_12 : f32 to vector<16x1024xf32>
    %16 = arith.maximumf %14, %15 : vector<16x1024xf32>
    %c0_13 = arith.constant 0 : index
    %c0_14 = arith.constant 0 : index
    %17 = vector.load %arg7[%c0_13, %c0_14] : memref<512x16xbf16, #tpu.memory_space<vmem>>, vector<512x16xbf16>
    %18 = arith.truncf %16 : vector<16x1024xf32> to vector<16x1024xbf16>
    %cst_15 = arith.constant dense<0.000000e+00> : vector<512x1024xf32>
    %19 = tpu.matmul %17, %18, %cst_15 {dimension_numbers = #tpu.dot_dimension_numbers<[1], [0], [0], [1], [0, 0, 1, 1], [], []>} : vector<512x16xbf16>, vector<16x1024xbf16>, vector<512x1024xf32> -> vector<512x1024xf32>
    %c0_16 = arith.constant 0 : index
    %c0_17 = arith.constant 0 : index
    %20 = vector.load %arg8[%c0_16, %c0_17] : memref<512x1xf32, #tpu.memory_space<vmem>>, vector<512x1xf32>
    %21 = vector.broadcast %20 : vector<512x1xf32> to vector<512x1024xf32>
    %22 = arith.addf %19, %21 : vector<512x1024xf32>
    %cst_18 = arith.constant 0.000000e+00 : f32
    %23 = vector.broadcast %cst_18 : f32 to vector<512x1024xf32>
    %24 = arith.maximumf %22, %23 : vector<512x1024xf32>
    %c0_19 = arith.constant 0 : index
    %c0_20 = arith.constant 0 : index
    %c0_21 = arith.constant 0 : index
    %25 = vector.load %arg14[%c0_19, %c0_20, %c0_21] : memref<1x640x1024xf32, #tpu.memory_space<vmem>>, vector<1x512x1024xf32>
    %26 = vector.shape_cast %25 : vector<1x512x1024xf32> to vector<512x1024xf32>
    %27 = vector.shape_cast %24 : vector<512x1024xf32> to vector<1x512x1024xf32>
    tpu.vector_store %arg14[%c0_19, %c0_20, %c0_21], %27 {strides = array<i32>} : memref<1x640x1024xf32, #tpu.memory_space<vmem>>, vector<1x512x1024xf32>,
    %c0_22 = arith.constant 0 : index
    %c0_23 = arith.constant 0 : index
    %c0_24 = arith.constant 0 : index
    %28 = vector.load %arg2[%c0_22, %c0_23, %c0_24] : memref<1x4x256xbf16, #tpu.memory_space<vmem>>, vector<1x4x256xbf16>
    %29 = vector.shape_cast %28 : vector<1x4x256xbf16> to vector<4x256xbf16>
    %c0_25 = arith.constant 0 : index
    %c0_26 = arith.constant 0 : index
    %30 = vector.load %arg9[%c0_25, %c0_26] : memref<4x4xbf16, #tpu.memory_space<vmem>>, vector<4x4xbf16>
    %cst_27 = arith.constant dense<0.000000e+00> : vector<4x256xf32>
    %31 = tpu.matmul %30, %29, %cst_27 {dimension_numbers = #tpu.dot_dimension_numbers<[1], [0], [0], [1], [0, 0, 1, 1], [], []>} : vector<4x4xbf16>, vector<4x256xbf16>, vector<4x256xf32> -> vector<4x256xf32>
    %c0_28 = arith.constant 0 : index
    %c0_29 = arith.constant 0 : index
    %32 = vector.load %arg10[%c0_28, %c0_29] : memref<4x1xf32, #tpu.memory_space<vmem>>, vector<4x1xf32>
    %33 = vector.broadcast %32 : vector<4x1xf32> to vector<4x256xf32>
    %34 = arith.addf %31, %33 : vector<4x256xf32>
    %cst_30 = arith.constant 0.000000e+00 : f32
    %35 = vector.broadcast %cst_30 : f32 to vector<4x256xf32>
    %36 = arith.maximumf %34, %35 : vector<4x256xf32>
    %c0_31 = arith.constant 0 : index
    %c0_32 = arith.constant 0 : index
    %37 = vector.load %arg11[%c0_31, %c0_32] : memref<128x4xbf16, #tpu.memory_space<vmem>>, vector<128x4xbf16>
    %38 = arith.truncf %36 : vector<4x256xf32> to vector<4x256xbf16>
    %cst_33 = arith.constant dense<0.000000e+00> : vector<128x256xf32>
    %39 = tpu.matmul %37, %38, %cst_33 {dimension_numbers = #tpu.dot_dimension_numbers<[1], [0], [0], [1], [0, 0, 1, 1], [], []>} : vector<128x4xbf16>, vector<4x256xbf16>, vector<128x256xf32> -> vector<128x256xf32>
    %c0_34 = arith.constant 0 : index
    %c0_35 = arith.constant 0 : index
    %40 = vector.load %arg12[%c0_34, %c0_35] : memref<128x1xf32, #tpu.memory_space<vmem>>, vector<128x1xf32>
    %41 = vector.broadcast %40 : vector<128x1xf32> to vector<128x256xf32>
    %42 = arith.addf %39, %41 : vector<128x256xf32>
    %cst_36 = arith.constant 0.000000e+00 : f32
    %43 = vector.broadcast %cst_36 : f32 to vector<128x256xf32>
    %44 = arith.maximumf %42, %43 : vector<128x256xf32>
    %c0_37 = arith.constant 0 : index
    %c0_38 = arith.constant 0 : index
    %45 = vector.load %arg13[%c0_37, %c0_38] : memref<256x1024xf32, #tpu.memory_space<vmem>>, vector<256x1024xf32>
    %cst_39 = arith.constant dense<0.000000e+00> : vector<128x1024xf32>
    %46 = tpu.matmul %44, %45, %cst_39 {dimension_numbers = #tpu.dot_dimension_numbers<[1], [0], [0], [1], [0, 0, 1, 1], [], []>} : vector<128x256xf32>, vector<256x1024xf32>, vector<128x1024xf32> -> vector<128x1024xf32>
    %c0_40 = arith.constant 0 : index
    %c512 = arith.constant 512 : index
    %c0_41 = arith.constant 0 : index
    %47 = vector.load %arg14[%c0_40, %c512, %c0_41] : memref<1x640x1024xf32, #tpu.memory_space<vmem>>, vector<1x128x1024xf32>
    %48 = vector.shape_cast %47 : vector<1x128x1024xf32> to vector<128x1024xf32>
    %49 = vector.shape_cast %46 : vector<128x1024xf32> to vector<1x128x1024xf32>
    tpu.vector_store %arg14[%c0_40, %c512, %c0_41], %49 {strides = array<i32>} : memref<1x640x1024xf32, #tpu.memory_space<vmem>>, vector<1x128x1024xf32>,
    return
  }
  func.func @transform_0(%arg0: i32) -> (i32, i32, i32) {
    %c0_i32 = arith.constant 0 : i32
    %c0_i32_0 = arith.constant 0 : i32
    %c0_i32_1 = arith.constant 0 : i32
    return %arg0, %c0_i32, %c0_i32_0 : i32, i32, i32
  }
  func.func @transform_1(%arg0: i32) -> (i32, i32, i32) {
    %c0_i32 = arith.constant 0 : i32
    %c0_i32_0 = arith.constant 0 : i32
    %c0_i32_1 = arith.constant 0 : i32
    return %arg0, %c0_i32, %c0_i32_0 : i32, i32, i32
  }
  func.func @transform_2(%arg0: i32) -> (i32, i32) {
    %c0_i32 = arith.constant 0 : i32
    %c0_i32_0 = arith.constant 0 : i32
    %c0_i32_1 = arith.constant 0 : i32
    return %c0_i32, %c0_i32_0 : i32, i32
  }
  func.func @transform_3(%arg0: i32) -> (i32, i32) {
    %c0_i32 = arith.constant 0 : i32
    %c0_i32_0 = arith.constant 0 : i32
    %c0_i32_1 = arith.constant 0 : i32
    return %c0_i32, %c0_i32_0 : i32, i32
  }
  func.func @transform_4(%arg0: i32) -> (i32, i32) {
    %c0_i32 = arith.constant 0 : i32
    %c0_i32_0 = arith.constant 0 : i32
    %c0_i32_1 = arith.constant 0 : i32
    return %c0_i32, %c0_i32_0 : i32, i32
  }
  func.func @transform_5(%arg0: i32) -> (i32, i32) {
    %c0_i32 = arith.constant 0 : i32
    %c0_i32_0 = arith.constant 0 : i32
    %c0_i32_1 = arith.constant 0 : i32
    return %c0_i32, %c0_i32_0 : i32, i32
  }
  func.func @transform_6(%arg0: i32) -> (i32, i32) {
    %c0_i32 = arith.constant 0 : i32
    %c0_i32_0 = arith.constant 0 : i32
    %c0_i32_1 = arith.constant 0 : i32
    return %c0_i32, %c0_i32_0 : i32, i32
  }
  func.func @transform_7(%arg0: i32) -> (i32, i32) {
    %c0_i32 = arith.constant 0 : i32
    %c0_i32_0 = arith.constant 0 : i32
    %c0_i32_1 = arith.constant 0 : i32
    return %c0_i32, %c0_i32_0 : i32, i32
  }
  func.func @transform_8(%arg0: i32) -> (i32, i32) {
    %c0_i32 = arith.constant 0 : i32
    %c0_i32_0 = arith.constant 0 : i32
    %c0_i32_1 = arith.constant 0 : i32
    return %c0_i32, %c0_i32_0 : i32, i32
  }
  func.func @transform_9(%arg0: i32) -> (i32, i32) {
    %c0_i32 = arith.constant 0 : i32
    %c0_i32_0 = arith.constant 0 : i32
    %c0_i32_1 = arith.constant 0 : i32
    return %c0_i32, %c0_i32_0 : i32, i32
  }
  func.func @transform_10(%arg0: i32) -> (i32, i32) {
    %c0_i32 = arith.constant 0 : i32
    %c0_i32_0 = arith.constant 0 : i32
    %c0_i32_1 = arith.constant 0 : i32
    return %c0_i32, %c0_i32_0 : i32, i32
  }
  func.func @transform_11(%arg0: i32) -> (i32, i32) {
    %c0_i32 = arith.constant 0 : i32
    %c0_i32_0 = arith.constant 0 : i32
    %c0_i32_1 = arith.constant 0 : i32
    return %c0_i32, %c0_i32_0 : i32, i32
  }
  func.func @transform_12(%arg0: i32) -> (i32, i32) {
    %c0_i32 = arith.constant 0 : i32
    %c0_i32_0 = arith.constant 0 : i32
    %c0_i32_1 = arith.constant 0 : i32
    return %c0_i32, %c0_i32_0 : i32, i32
  }
  func.func @transform_13(%arg0: i32) -> (i32, i32, i32) {
    %c0_i32 = arith.constant 0 : i32
    %c0_i32_0 = arith.constant 0 : i32
    %c0_i32_1 = arith.constant 0 : i32
    return %arg0, %c0_i32, %c0_i32_0 : i32, i32, i32
  }
}

</mosaic_0001>

<llo_original>
// kernel: aspp_forward.1
$region0: #{aspp_forward.1}
  #allocation0 [shape = 'u32[]', space=smem, size = 0x4, offset = 0x4, fixed_abs, tag = 'smem constant byte address 0x4 - core index']
  #allocation1 [shape = 'u32[144,128]{1,0:T(1,128)}', space=vmem, size = 0x12000, scoped, tag = 'internal scratch']
  %s0 = inlined_call_operand.vmem [shape: bf16[2,128,1024], index: 0, kind: input, shape index: {}]
  %s1 = inlined_call_operand.vmem [shape: bf16[2,4,256], index: 1, kind: input, shape index: {}]
  %s2 = inlined_call_operand.vmem [shape: bf16[16,128], index: 2, kind: input, shape index: {}]
  %s3 = inlined_call_operand.vmem [shape: f32[16,1], index: 3, kind: input, shape index: {}]
  %s4 = inlined_call_operand.vmem [shape: bf16[16,16], index: 4, kind: input, shape index: {}]
  %s5 = inlined_call_operand.vmem [shape: f32[16,1], index: 5, kind: input, shape index: {}]
  %s6 = inlined_call_operand.vmem [shape: bf16[512,16], index: 6, kind: input, shape index: {}]
  %s7 = inlined_call_operand.vmem [shape: f32[512,1], index: 7, kind: input, shape index: {}]
  %s8 = inlined_call_operand.vmem [shape: bf16[4,4], index: 8, kind: input, shape index: {}]
  %s9 = inlined_call_operand.vmem [shape: f32[4,1], index: 9, kind: input, shape index: {}]
  %s10 = inlined_call_operand.vmem [shape: bf16[128,4], index: 10, kind: input, shape index: {}]
  %s11 = inlined_call_operand.vmem [shape: f32[128,1], index: 11, kind: input, shape index: {}]
  %s12 = inlined_call_operand.vmem [shape: f32[256,1024], index: 12, kind: input, shape index: {}]
  %s13 = inlined_call_operand.vmem [shape: f32[2,640,1024], index: 13, kind: output, shape index: {}]
  %s14 = sld [smem:[#allocation0]]
  $region85: #{aspp_forward.1} parent=0
    _
  %s16 = ssub.s32 1, %s14
  %s17 = scalar_select 0, %s16, %s14
  loop: start=0, step=1, limit=4
  $region2: #{aspp_forward.1} parent=0 // loop_pre_header
    _
  $region3: #{aspp_forward.1} parent=0 // loop_header
    %s19 = sphi 0, %s23
    %p20 = scmp.ge.s32.totalorder %s19, 4
    %s29 = sphi 0, %s31
    %s32 = sphi 0, %s29
    %s33 = sphi 0, %s32
    %s49 = sphi 0, %s33
    %s55 = sphi 0, %s57
    %s58 = sphi 0, %s55
    %s59 = sphi 0, %s58
    %s75 = sphi 0, %s59
    %s79 = sphi 0, %s79
    %s81 = sphi 0, %s79
    %s82 = sphi 0, %s81
    %s96 = sphi 0, %s82
    %s100 = sphi 0, %s100
    %s102 = sphi 0, %s100
    %s103 = sphi 0, %s102
    %s117 = sphi 0, %s103
    %s121 = sphi 0, %s121
    %s123 = sphi 0, %s121
    %s124 = sphi 0, %s123
    %s138 = sphi 0, %s124
    %s142 = sphi 0, %s142
    %s144 = sphi 0, %s142
    %s145 = sphi 0, %s144
    %s159 = sphi 0, %s145
    %s163 = sphi 0, %s163
    %s165 = sphi 0, %s163
    %s166 = sphi 0, %s165
    %s180 = sphi 0, %s166
    %s184 = sphi 0, %s184
    %s186 = sphi 0, %s184
    %s187 = sphi 0, %s186
    %s201 = sphi 0, %s187
    %s205 = sphi 0, %s205
    %s207 = sphi 0, %s205
    %s208 = sphi 0, %s207
    %s222 = sphi 0, %s208
    %s226 = sphi 0, %s226
    %s228 = sphi 0, %s226
    %s229 = sphi 0, %s228
    %s243 = sphi 0, %s229
    %s247 = sphi 0, %s247
    %s249 = sphi 0, %s247
    %s250 = sphi 0, %s249
    %s264 = sphi 0, %s250
    %s268 = sphi 0, %s268
    %s270 = sphi 0, %s268
    %s271 = sphi 0, %s270
    %s285 = sphi 0, %s271
    %s289 = sphi 0, %s289
    %s291 = sphi 0, %s289
    %s292 = sphi 0, %s291
    %s306 = sphi 0, %s292
    %s312 = sphi 0, %s314
    %s315 = sphi 0, %s312
    %s316 = sphi 0, %s315
    %s332 = sphi 0, %s316
  $region4: #{aspp_forward.1} parent=0 // loop_header_branch
    %22 = sbr.rel (%p20) target = $region8
  $region5: #{aspp_forward.1} parent=0 // loop_body
    %s24 = ssub.s32 %s19, 1
    %s25 = ssub.s32 %s19, 2
    %s26 = sadd.s32 %s19, 1
    %s27 = ssub.s32 %s19, %s26
    %p28 = scmp.eq.s32.totalorder %s27, 0
    %s30 = sadd.s32 %s29, 1
    %s31 = scalar_select %p28, %s29, %s30
    %p34 = pneg %p28
    %p35 = scmp.eq.s32.totalorder %s19, 1
    %p36 = por %p34, %p35
    %p37 = scmp.ne.s32.totalorder %s29, %s32
    %p38 = scmp.eq.s32.totalorder %s19, 0
    %p39 = por %p37, %p38
    %p40 = scmp.ne.s32.totalorder %s29, %s32
    %p41 = scmp.eq.s32.totalorder %s24, 1
    %p42 = por %p40, %p41
    %p43 = scmp.ne.s32.totalorder %s32, %s33
    %p44 = scmp.eq.s32.totalorder %s24, 0
    %p45 = por %p43, %p44
    %p46 = scmp.ne.s32.totalorder %s32, %s33
    %p47 = scmp.eq.s32.totalorder %s25, 1
    %p48 = por %p46, %p47
    %p50 = scmp.ne.s32.totalorder %s33, %s49
    %p51 = scmp.eq.s32.totalorder %s25, 0
    %p52 = por %p50, %p51
    %s53 = ssub.s32 %s19, %s26
    %p54 = scmp.eq.s32.totalorder %s53, 0
    %s56 = sadd.s32 %s55, 1
    %s57 = scalar_select %p54, %s55, %s56
    %p60 = pneg %p54
    %p61 = scmp.eq.s32.totalorder %s19, 1
    %p62 = por %p60, %p61
    %p63 = scmp.ne.s32.totalorder %s55, %s58
    %p64 = scmp.eq.s32.totalorder %s19, 0
    %p65 = por %p63, %p64
    %p66 = scmp.ne.s32.totalorder %s55, %s58
    %p67 = scmp.eq.s32.totalorder %s24, 1
    %p68 = por %p66, %p67
    %p69 = scmp.ne.s32.totalorder %s58, %s59
    %p70 = scmp.eq.s32.totalorder %s24, 0
    %p71 = por %p69, %p70
    %p72 = scmp.ne.s32.totalorder %s58, %s59
    %p73 = scmp.eq.s32.totalorder %s25, 1
    %p74 = por %p72, %p73
    %p76 = scmp.ne.s32.totalorder %s59, %s75
    %p77 = scmp.eq.s32.totalorder %s25, 0
    %p78 = por %p76, %p77
    %s80 = sadd.s32 %s79, 1
    %p83 = scmp.eq.s32.totalorder %s19, 1
    %p84 = scmp.ne.s32.totalorder %s79, %s81
    %p85 = scmp.eq.s32.totalorder %s19, 0
    %p86 = por %p84, %p85
    %p87 = scmp.ne.s32.totalorder %s79, %s81
    %p88 = scmp.eq.s32.totalorder %s24, 1
    %p89 = por %p87, %p88
    %p90 = scmp.ne.s32.totalorder %s81, %s82
    %p91 = scmp.eq.s32.totalorder %s24, 0
    %p92 = por %p90, %p91
    %p93 = scmp.ne.s32.totalorder %s81, %s82
    %p94 = scmp.eq.s32.totalorder %s25, 1
    %p95 = por %p93, %p94
    %p97 = scmp.ne.s32.totalorder %s82, %s96
    %p98 = scmp.eq.s32.totalorder %s25, 0
    %p99 = por %p97, %p98
    %s101 = sadd.s32 %s100, 1
    %p104 = scmp.eq.s32.totalorder %s19, 1
    %p105 = scmp.ne.s32.totalorder %s100, %s102
    %p106 = scmp.eq.s32.totalorder %s19, 0
    %p107 = por %p105, %p106
    %p108 = scmp.ne.s32.totalorder %s100, %s102
    %p109 = scmp.eq.s32.totalorder %s24, 1
    %p110 = por %p108, %p109
    %p111 = scmp.ne.s32.totalorder %s102, %s103
    %p112 = scmp.eq.s32.totalorder %s24, 0
    %p113 = por %p111, %p112
    %p114 = scmp.ne.s32.totalorder %s102, %s103
    %p115 = scmp.eq.s32.totalorder %s25, 1
    %p116 = por %p114, %p115
    %p118 = scmp.ne.s32.totalorder %s103, %s117
    %p119 = scmp.eq.s32.totalorder %s25, 0
    %p120 = por %p118, %p119
    %s122 = sadd.s32 %s121, 1
    %p125 = scmp.eq.s32.totalorder %s19, 1
    %p126 = scmp.ne.s32.totalorder %s121, %s123
    %p127 = scmp.eq.s32.totalorder %s19, 0
    %p128 = por %p126, %p127
    %p129 = scmp.ne.s32.totalorder %s121, %s123
    %p130 = scmp.eq.s32.totalorder %s24, 1
    %p131 = por %p129, %p130
    %p132 = scmp.ne.s32.totalorder %s123, %s124
    %p133 = scmp.eq.s32.totalorder %s24, 0
    %p134 = por %p132, %p133
    %p135 = scmp.ne.s32.totalorder %s123, %s124
    %p136 = scmp.eq.s32.totalorder %s25, 1
    %p137 = por %p135, %p136
    %p139 = scmp.ne.s32.totalorder %s124, %s138
    %p140 = scmp.eq.s32.totalorder %s25, 0
    %p141 = por %p139, %p140
    %s143 = sadd.s32 %s142, 1
    %p146 = scmp.eq.s32.totalorder %s19, 1
    %p147 = scmp.ne.s32.totalorder %s142, %s144
    %p148 = scmp.eq.s32.totalorder %s19, 0
    %p149 = por %p147, %p148
    %p150 = scmp.ne.s32.totalorder %s142, %s144
    %p151 = scmp.eq.s32.totalorder %s24, 1
    %p152 = por %p150, %p151
    %p153 = scmp.ne.s32.totalorder %s144, %s145
    %p154 = scmp.eq.s32.totalorder %s24, 0
    %p155 = por %p153, %p154
    %p156 = scmp.ne.s32.totalorder %s144, %s145
    %p157 = scmp.eq.s32.totalorder %s25, 1
    %p158 = por %p156, %p157
    %p160 = scmp.ne.s32.totalorder %s145, %s159
    %p161 = scmp.eq.s32.totalorder %s25, 0
    %p162 = por %p160, %p161
    %s164 = sadd.s32 %s163, 1
    %p167 = scmp.eq.s32.totalorder %s19, 1
    %p168 = scmp.ne.s32.totalorder %s163, %s165
    %p169 = scmp.eq.s32.totalorder %s19, 0
    %p170 = por %p168, %p169
    %p171 = scmp.ne.s32.totalorder %s163, %s165
    %p172 = scmp.eq.s32.totalorder %s24, 1
    %p173 = por %p171, %p172
    %p174 = scmp.ne.s32.totalorder %s165, %s166
    %p175 = scmp.eq.s32.totalorder %s24, 0
    %p176 = por %p174, %p175
    %p177 = scmp.ne.s32.totalorder %s165, %s166
    %p178 = scmp.eq.s32.totalorder %s25, 1
    %p179 = por %p177, %p178
    %p181 = scmp.ne.s32.totalorder %s166, %s180
    %p182 = scmp.eq.s32.totalorder %s25, 0
    %p183 = por %p181, %p182
    %s185 = sadd.s32 %s184, 1
    %p188 = scmp.eq.s32.totalorder %s19, 1
    %p189 = scmp.ne.s32.totalorder %s184, %s186
    %p190 = scmp.eq.s32.totalorder %s19, 0
    %p191 = por %p189, %p190
    %p192 = scmp.ne.s32.totalorder %s184, %s186
    %p193 = scmp.eq.s32.totalorder %s24, 1
    %p194 = por %p192, %p193
    %p195 = scmp.ne.s32.totalorder %s186, %s187
    %p196 = scmp.eq.s32.totalorder %s24, 0
    %p197 = por %p195, %p196
    %p198 = scmp.ne.s32.totalorder %s186, %s187
    %p199 = scmp.eq.s32.totalorder %s25, 1
    %p200 = por %p198, %p199
    %p202 = scmp.ne.s32.totalorder %s187, %s201
    %p203 = scmp.eq.s32.totalorder %s25, 0
    %p204 = por %p202, %p203
    %s206 = sadd.s32 %s205, 1
    %p209 = scmp.eq.s32.totalorder %s19, 1
    %p210 = scmp.ne.s32.totalorder %s205, %s207
    %p211 = scmp.eq.s32.totalorder %s19, 0
    %p212 = por %p210, %p211
    %p213 = scmp.ne.s32.totalorder %s205, %s207
    %p214 = scmp.eq.s32.totalorder %s24, 1
    %p215 = por %p213, %p214
    %p216 = scmp.ne.s32.totalorder %s207, %s208
    %p217 = scmp.eq.s32.totalorder %s24, 0
    %p218 = por %p216, %p217
    %p219 = scmp.ne.s32.totalorder %s207, %s208
    %p220 = scmp.eq.s32.totalorder %s25, 1
    %p221 = por %p219, %p220
    %p223 = scmp.ne.s32.totalorder %s208, %s222
    %p224 = scmp.eq.s32.totalorder %s25, 0
    %p225 = por %p223, %p224
    %s227 = sadd.s32 %s226, 1
    %p230 = scmp.eq.s32.totalorder %s19, 1
    %p231 = scmp.ne.s32.totalorder %s226, %s228
    %p232 = scmp.eq.s32.totalorder %s19, 0
    %p233 = por %p231, %p232
    %p234 = scmp.ne.s32.totalorder %s226, %s228
    %p235 = scmp.eq.s32.totalorder %s24, 1
    %p236 = por %p234, %p235
    %p237 = scmp.ne.s32.totalorder %s228, %s229
    %p238 = scmp.eq.s32.totalorder %s24, 0
    %p239 = por %p237, %p238
    %p240 = scmp.ne.s32.totalorder %s228, %s229
    %p241 = scmp.eq.s32.totalorder %s25, 1
    %p242 = por %p240, %p241
    %p244 = scmp.ne.s32.totalorder %s229, %s243
    %p245 = scmp.eq.s32.totalorder %s25, 0
    %p246 = por %p244, %p245
    %s248 = sadd.s32 %s247, 1
    %p251 = scmp.eq.s32.totalorder %s19, 1
    %p252 = scmp.ne.s32.totalorder %s247, %s249
    %p253 = scmp.eq.s32.totalorder %s19, 0
    %p254 = por %p252, %p253
    %p255 = scmp.ne.s32.totalorder %s247, %s249
    %p256 = scmp.eq.s32.totalorder %s24, 1
    %p257 = por %p255, %p256
    %p258 = scmp.ne.s32.totalorder %s249, %s250
    %p259 = scmp.eq.s32.totalorder %s24, 0
    %p260 = por %p258, %p259
    %p261 = scmp.ne.s32.totalorder %s249, %s250
    %p262 = scmp.eq.s32.totalorder %s25, 1
    %p263 = por %p261, %p262
    %p265 = scmp.ne.s32.totalorder %s250, %s264
    %p266 = scmp.eq.s32.totalorder %s25, 0
    %p267 = por %p265, %p266
    %s269 = sadd.s32 %s268, 1
    %p272 = scmp.eq.s32.totalorder %s19, 1
    %p273 = scmp.ne.s32.totalorder %s268, %s270
    %p274 = scmp.eq.s32.totalorder %s19, 0
    %p275 = por %p273, %p274
    %p276 = scmp.ne.s32.totalorder %s268, %s270
    %p277 = scmp.eq.s32.totalorder %s24, 1
    %p278 = por %p276, %p277
    %p279 = scmp.ne.s32.totalorder %s270, %s271
    %p280 = scmp.eq.s32.totalorder %s24, 0
    %p281 = por %p279, %p280
    %p282 = scmp.ne.s32.totalorder %s270, %s271
    %p283 = scmp.eq.s32.totalorder %s25, 1
    %p284 = por %p282, %p283
    %p286 = scmp.ne.s32.totalorder %s271, %s285
    %p287 = scmp.eq.s32.totalorder %s25, 0
    %p288 = por %p286, %p287
    %s290 = sadd.s32 %s289, 1
    %p293 = scmp.eq.s32.totalorder %s19, 1
    %p294 = scmp.ne.s32.totalorder %s289, %s291
    %p295 = scmp.eq.s32.totalorder %s19, 0
    %p296 = por %p294, %p295
    %p297 = scmp.ne.s32.totalorder %s289, %s291
    %p298 = scmp.eq.s32.totalorder %s24, 1
    %p299 = por %p297, %p298
    %p300 = scmp.ne.s32.totalorder %s291, %s292
    %p301 = scmp.eq.s32.totalorder %s24, 0
    %p302 = por %p300, %p301
    %p303 = scmp.ne.s32.totalorder %s291, %s292
    %p304 = scmp.eq.s32.totalorder %s25, 1
    %p305 = por %p303, %p304
    %p307 = scmp.ne.s32.totalorder %s292, %s306
    %p308 = scmp.eq.s32.totalorder %s25, 0
    %p309 = por %p307, %p308
    %s310 = ssub.s32 %s19, %s26
    %p311 = scmp.eq.s32.totalorder %s310, 0
    %s313 = sadd.s32 %s312, 1
    %s314 = scalar_select %p311, %s312, %s313
    %p317 = pneg %p311
    %p318 = scmp.eq.s32.totalorder %s19, 1
    %p319 = por %p317, %p318
    %p320 = scmp.ne.s32.totalorder %s312, %s315
    %p321 = scmp.eq.s32.totalorder %s19, 0
    %p322 = por %p320, %p321
    %p323 = scmp.ne.s32.totalorder %s312, %s315
    %p324 = scmp.eq.s32.totalorder %s24, 1
    %p325 = por %p323, %p324
    %p326 = scmp.ne.s32.totalorder %s315, %s316
    %p327 = scmp.eq.s32.totalorder %s24, 0
    %p328 = por %p326, %p327
    %p329 = scmp.ne.s32.totalorder %s315, %s316
    %p330 = scmp.eq.s32.totalorder %s25, 1
    %p331 = por %p329, %p330
    %p333 = scmp.ne.s32.totalorder %s316, %s332
    %p334 = scmp.eq.s32.totalorder %s25, 0
    %p335 = por %p333, %p334
    %p336 = scmp.le.s32.totalorder 1, %s19
    %p337 = scmp.lt.s32.totalorder %s19, 3
    %p338 = pnand %p336, %p337
    %p339 = pneg %p338
    // Predicated region
    $region9: #{aspp_forward.1} parent=5 // pred_check
      _
    $region10: #{aspp_forward.1} parent=5 // pred_check_branch
      %341 = sbr.rel (%p338) target = $region12
    $region11: #{aspp_forward.1} parent=5 // pred_region
      %s342 = ssub.s32 %s19, 1
      // Predicated region
      $region13: #{aspp_forward.1} parent=11 // pred_check
        %p343 = pneg %p92
      $region14: #{aspp_forward.1} parent=11 // pred_check_branch
        %345 = sbr.rel (%p343) target = $region16
      $region15: #{aspp_forward.1} parent=11 // pred_region
        _
      $region16: #{aspp_forward.1} parent=11 // pred_fallthru
        _
      // Predicated region
      $region17: #{aspp_forward.1} parent=11 // pred_check
        %p346 = pneg %p113
      $region18: #{aspp_forward.1} parent=11 // pred_check_branch
        %348 = sbr.rel (%p346) target = $region20
      $region19: #{aspp_forward.1} parent=11 // pred_region
        _
      $region20: #{aspp_forward.1} parent=11 // pred_fallthru
        _
      // Predicated region
      $region21: #{aspp_forward.1} parent=11 // pred_check
        %p349 = pneg %p134
      $region22: #{aspp_forward.1} parent=11 // pred_check_branch
        %351 = sbr.rel (%p349) target = $region24
      $region23: #{aspp_forward.1} parent=11 // pred_region
        _
      $region24: #{aspp_forward.1} parent=11 // pred_fallthru
        _
      // Predicated region
      $region25: #{aspp_forward.1} parent=11 // pred_check
        %p352 = pneg %p155
      $region26: #{aspp_forward.1} parent=11 // pred_check_branch
        %354 = sbr.rel (%p352) target = $region28
      $region27: #{aspp_forward.1} parent=11 // pred_region
        _
      $region28: #{aspp_forward.1} parent=11 // pred_fallthru
        _
      // Predicated region
      $region29: #{aspp_forward.1} parent=11 // pred_check
        %p355 = pneg %p176
      $region30: #{aspp_forward.1} parent=11 // pred_check_branch
        %357 = sbr.rel (%p355) target = $region32
      $region31: #{aspp_forward.1} parent=11 // pred_region
        _
      $region32: #{aspp_forward.1} parent=11 // pred_fallthru
        _
      // Predicated region
      $region33: #{aspp_forward.1} parent=11 // pred_check
        %p358 = pneg %p197
      $region34: #{aspp_forward.1} parent=11 // pred_check_branch
        %360 = sbr.rel (%p358) target = $region36
      $region35: #{aspp_forward.1} parent=11 // pred_region
        _
      $region36: #{aspp_forward.1} parent=11 // pred_fallthru
        _
      // Predicated region
      $region37: #{aspp_forward.1} parent=11 // pred_check
        %p361 = pneg %p218
      $region38: #{aspp_forward.1} parent=11 // pred_check_branch
        %363 = sbr.rel (%p361) target = $region40
      $region39: #{aspp_forward.1} parent=11 // pred_region
        _
      $region40: #{aspp_forward.1} parent=11 // pred_fallthru
        _
      // Predicated region
      $region41: #{aspp_forward.1} parent=11 // pred_check
        %p364 = pneg %p239
      $region42: #{aspp_forward.1} parent=11 // pred_check_branch
        %366 = sbr.rel (%p364) target = $region44
      $region43: #{aspp_forward.1} parent=11 // pred_region
        _
      $region44: #{aspp_forward.1} parent=11 // pred_fallthru
        _
      // Predicated region
      $region45: #{aspp_forward.1} parent=11 // pred_check
        %p367 = pneg %p260
      $region46: #{aspp_forward.1} parent=11 // pred_check_branch
        %369 = sbr.rel (%p367) target = $region48
      $region47: #{aspp_forward.1} parent=11 // pred_region
        _
      $region48: #{aspp_forward.1} parent=11 // pred_fallthru
        _
      // Predicated region
      $region49: #{aspp_forward.1} parent=11 // pred_check
        %p370 = pneg %p281
      $region50: #{aspp_forward.1} parent=11 // pred_check_branch
        %372 = sbr.rel (%p370) target = $region52
      $region51: #{aspp_forward.1} parent=11 // pred_region
        _
      $region52: #{aspp_forward.1} parent=11 // pred_fallthru
        _
      // Predicated region
      $region53: #{aspp_forward.1} parent=11 // pred_check
        %p373 = pneg %p302
      $region54: #{aspp_forward.1} parent=11 // pred_check_branch
        %375 = sbr.rel (%p373) target = $region56
      $region55: #{aspp_forward.1} parent=11 // pred_region
        _
      $region56: #{aspp_forward.1} parent=11 // pred_fallthru
        _
    $region12: #{aspp_forward.1} parent=5 // pred_fallthru
      _
    %p376 = scmp.lt.s32.totalorder %s19, 2
    // Predicated region
    $region57: #{aspp_forward.1} parent=5 // pred_check
      %p377 = pneg %p376
    $region58: #{aspp_forward.1} parent=5 // pred_check_branch
      %379 = sbr.rel (%p377) target = $region60
    $region59: #{aspp_forward.1} parent=5 // pred_region
      // Predicated region
      $region61: #{aspp_forward.1} parent=59 // pred_check
        %p380 = pneg %p39
      $region62: #{aspp_forward.1} parent=59 // pred_check_branch
        %382 = sbr.rel (%p380) target = $region64
      $region63: #{aspp_forward.1} parent=59 // pred_region
        %p383 = scmp.lt.s32.totalorder %s19, 1
        %s384 = scalar_select %p383, %s19, 1
        %s385 = smul.addr %s384, 128
        %s386 = smul.addr %s385, 4
        %s387 = scalar_lea.vmem %s0, %s386
      $region64: #{aspp_forward.1} parent=59 // pred_fallthru
        _
      // Predicated region
      $region65: #{aspp_forward.1} parent=59 // pred_check
        %p388 = pneg %p65
      $region66: #{aspp_forward.1} parent=59 // pred_check_branch
        %390 = sbr.rel (%p388) target = $region68
      $region67: #{aspp_forward.1} parent=59 // pred_region
        %p391 = scmp.lt.s32.totalorder %s19, 1
        %s392 = scalar_select %p391, %s19, 1
        %s393 = smul.addr %s392, 2
        %s394 = smul.addr %s393, 2
        %s395 = scalar_lea.vmem %s1, %s394
      $region68: #{aspp_forward.1} parent=59 // pred_fallthru
        _
    $region60: #{aspp_forward.1} parent=5 // pred_fallthru
      _
    %p396 = scmp.le.s32.totalorder 1, %s19
    %p397 = scmp.lt.s32.totalorder %s19, 3
    %p398 = pnand %p396, %p397
    %p399 = pneg %p398
    // Predicated region
    $region69: #{aspp_forward.1} parent=5 // pred_check
      _
    $region70: #{aspp_forward.1} parent=5 // pred_check_branch
      %401 = sbr.rel (%p398) target = $region72
    $region71: #{aspp_forward.1} parent=5 // pred_region
      %s402 = ssub.s32 %s19, 1
      %p403 = scmp.lt.s32.totalorder %s24, 1
      %s404 = scalar_select %p403, %s24, 1
      %s405 = smul.addr %s404, 128
      %s406 = smul.addr %s405, 4
      %s407 = scalar_lea.vmem %s0, %s406
      %p408 = pneg %p45
      %p409 = pneg %p42
      %p410 = scmp.lt.s32.totalorder %s24, 1
      %s411 = scalar_select %p410, %s24, 1
      %s412 = smul.addr %s411, 2
      %s413 = smul.addr %s412, 2
      %s414 = scalar_lea.vmem %s1, %s413
      %p415 = pneg %p71
      %p416 = pneg %p68
      %p417 = pneg %p92
      %p418 = pneg %p89
      %p419 = pneg %p113
      %p420 = pneg %p110
      %p421 = pneg %p134
      %p422 = pneg %p131
      %p423 = pneg %p155
      %p424 = pneg %p152
      %p425 = pneg %p176
      %p426 = pneg %p173
      %p427 = pneg %p197
      %p428 = pneg %p194
      %p429 = pneg %p218
      %p430 = pneg %p215
      %p431 = pneg %p239
      %p432 = pneg %p236
      %p433 = pneg %p260
      %p434 = pneg %p257
      %p435 = pneg %p281
      %p436 = pneg %p278
      %p437 = pneg %p302
      %p438 = pneg %p299
      %p439 = pneg %p328
      %p440 = pneg %p325
      %p441 = scmp.lt.s32.totalorder %s24, 1
      %s442 = scalar_select %p441, %s24, 1
      %s443 = smul.addr %s442, 640
      %s444 = smul.addr %s443, 8
      %s445 = scalar_lea.vmem %s13, %s444
      %p446 = scmp.lt.s32.totalorder %s24, 1
      %s447 = scalar_select %p446, %s24, 1
      %s448 = smul.addr %s447, 128
      %s449 = smul.addr %s448, 4
      %s450 = scalar_lea.vmem %s0, %s449
      %p451 = scmp.lt.s32.totalorder %s24, 1
      %s452 = scalar_select %p451, %s24, 1
      %s453 = smul.addr %s452, 2
      %s454 = smul.addr %s453, 2
      %s455 = scalar_lea.vmem %s1, %s454
      %p456 = scmp.lt.s32.totalorder %s24, 1
      %s457 = scalar_select %p456, %s24, 1
      %s458 = smul.addr %s457, 640
      %s459 = smul.addr %s458, 8
      %s460 = scalar_lea.vmem %s13, %s459
      %v462 = vld [vmem:[%s450] sm:$0xff]
      %v463 = vld [vmem:[%s450 + $0x8] sm:$0xff]
      %v464 = vld [vmem:[%s450 + $0x10] sm:$0xff]
      %v465 = vld [vmem:[%s450 + $0x18] sm:$0xff]
      %v466 = vld [vmem:[%s450 + $0x20] sm:$0xff]
      %v467 = vld [vmem:[%s450 + $0x28] sm:$0xff]
      %v468 = vld [vmem:[%s450 + $0x30] sm:$0xff]
      %v469 = vld [vmem:[%s450 + $0x38] sm:$0xff]
      %v470 = vld [vmem:[%s450 + $0x40] sm:$0xff]
      %v471 = vld [vmem:[%s450 + $0x48] sm:$0xff]
      %v472 = vld [vmem:[%s450 + $0x50] sm:$0xff]
      %v473 = vld [vmem:[%s450 + $0x58] sm:$0xff]
      %v474 = vld [vmem:[%s450 + $0x60] sm:$0xff]
      %v475 = vld [vmem:[%s450 + $0x68] sm:$0xff]
      %v476 = vld [vmem:[%s450 + $0x70] sm:$0xff]
      %v477 = vld [vmem:[%s450 + $0x78] sm:$0xff]
      %v478 = vld [vmem:[%s450 + $0x80] sm:$0xff]
      %v479 = vld [vmem:[%s450 + $0x88] sm:$0xff]
      %v480 = vld [vmem:[%s450 + $0x90] sm:$0xff]
      %v481 = vld [vmem:[%s450 + $0x98] sm:$0xff]
      %v482 = vld [vmem:[%s450 + $0xa0] sm:$0xff]
      %v483 = vld [vmem:[%s450 + $0xa8] sm:$0xff]
      %v484 = vld [vmem:[%s450 + $0xb0] sm:$0xff]
      %v485 = vld [vmem:[%s450 + $0xb8] sm:$0xff]
      %v486 = vld [vmem:[%s450 + $0xc0] sm:$0xff]
      %v487 = vld [vmem:[%s450 + $0xc8] sm:$0xff]
      %v488 = vld [vmem:[%s450 + $0xd0] sm:$0xff]
      %v489 = vld [vmem:[%s450 + $0xd8] sm:$0xff]
      %v490 = vld [vmem:[%s450 + $0xe0] sm:$0xff]
      %v491 = vld [vmem:[%s450 + $0xe8] sm:$0xff]
      %v492 = vld [vmem:[%s450 + $0xf0] sm:$0xff]
      %v493 = vld [vmem:[%s450 + $0xf8] sm:$0xff]
      %v494 = vld [vmem:[%s450 + $0x100] sm:$0xff]
      %v495 = vld [vmem:[%s450 + $0x108] sm:$0xff]
      %v496 = vld [vmem:[%s450 + $0x110] sm:$0xff]
      %v497 = vld [vmem:[%s450 + $0x118] sm:$0xff]
      %v498 = vld [vmem:[%s450 + $0x120] sm:$0xff]
      %v499 = vld [vmem:[%s450 + $0x128] sm:$0xff]
      %v500 = vld [vmem:[%s450 + $0x130] sm:$0xff]
      %v501 = vld [vmem:[%s450 + $0x138] sm:$0xff]
      %v502 = vld [vmem:[%s450 + $0x140] sm:$0xff]
      %v503 = vld [vmem:[%s450 + $0x148] sm:$0xff]
      %v504 = vld [vmem:[%s450 + $0x150] sm:$0xff]
      %v505 = vld [vmem:[%s450 + $0x158] sm:$0xff]
      %v506 = vld [vmem:[%s450 + $0x160] sm:$0xff]
      %v507 = vld [vmem:[%s450 + $0x168] sm:$0xff]
      %v508 = vld [vmem:[%s450 + $0x170] sm:$0xff]
      %v509 = vld [vmem:[%s450 + $0x178] sm:$0xff]
      %v510 = vld [vmem:[%s450 + $0x180] sm:$0xff]
      %v511 = vld [vmem:[%s450 + $0x188] sm:$0xff]
      %v512 = vld [vmem:[%s450 + $0x190] sm:$0xff]
      %v513 = vld [vmem:[%s450 + $0x198] sm:$0xff]
      %v514 = vld [vmem:[%s450 + $0x1a0] sm:$0xff]
      %v515 = vld [vmem:[%s450 + $0x1a8] sm:$0xff]
      %v516 = vld [vmem:[%s450 + $0x1b0] sm:$0xff]
      %v517 = vld [vmem:[%s450 + $0x1b8] sm:$0xff]
      %v518 = vld [vmem:[%s450 + $0x1c0] sm:$0xff]
      %v519 = vld [vmem:[%s450 + $0x1c8] sm:$0xff]
      %v520 = vld [vmem:[%s450 + $0x1d0] sm:$0xff]
      %v521 = vld [vmem:[%s450 + $0x1d8] sm:$0xff]
      %v522 = vld [vmem:[%s450 + $0x1e0] sm:$0xff]
      %v523 = vld [vmem:[%s450 + $0x1e8] sm:$0xff]
      %v524 = vld [vmem:[%s450 + $0x1f0] sm:$0xff]
      %v525 = vld [vmem:[%s450 + $0x1f8] sm:$0xff]
      %v526 = vld [vmem:[%s2] sm:$0xf]
      %v527 = vld [vmem:[%s2 + $0x4] sm:$0xf]
      %v528 = vld [vmem:[%s3] sm:$0xff]
      %v529 = vld [vmem:[%s3 + $0x8] sm:$0xff]
      %531 = vset.pattern.permute.xlu0 0
      %532 = vperm.xlu0 %531, %v528
      %v533 = vpop.permute.xlu0 %532
      %536 = vset.pattern.permute.xlu0 0
      %537 = vperm.xlu0 %536, %v529
      %v538 = vpop.permute.xlu0 %537
      %v542 = vunpack.c.l.b16 %v526
      %v543 = vunpack.c.l.b16 %v527
      %v544 = vpack.c.b16 %v543, %v542
      %v610 = vunpack.c.l.b16 %v462
      %v611 = vunpack.c.h.b16 %v462
      %v612 = vunpack.c.l.b16 %v463
      %v613 = vunpack.c.h.b16 %v463
      %v614 = vunpack.c.l.b16 %v464
      %v615 = vunpack.c.h.b16 %v464
      %v616 = vunpack.c.l.b16 %v465
      %v617 = vunpack.c.h.b16 %v465
      %v618 = vunpack.c.l.b16 %v466
      %v619 = vunpack.c.h.b16 %v466
      %v620 = vunpack.c.l.b16 %v467
      %v621 = vunpack.c.h.b16 %v467
      %v622 = vunpack.c.l.b16 %v468
      %v623 = vunpack.c.h.b16 %v468
      %v624 = vunpack.c.l.b16 %v469
      %v625 = vunpack.c.h.b16 %v469
      %v626 = vunpack.c.l.b16 %v470
      %v627 = vunpack.c.h.b16 %v470
      %v628 = vunpack.c.l.b16 %v471
      %v629 = vunpack.c.h.b16 %v471
      %v630 = vunpack.c.l.b16 %v472
      %v631 = vunpack.c.h.b16 %v472
      %v632 = vunpack.c.l.b16 %v473
      %v633 = vunpack.c.h.b16 %v473
      %v634 = vunpack.c.l.b16 %v474
      %v635 = vunpack.c.h.b16 %v474
      %v636 = vunpack.c.l.b16 %v475
      %v637 = vunpack.c.h.b16 %v475
      %v638 = vunpack.c.l.b16 %v476
      %v639 = vunpack.c.h.b16 %v476
      %v640 = vunpack.c.l.b16 %v477
      %v641 = vunpack.c.h.b16 %v477
      %v642 = vunpack.c.l.b16 %v478
      %v643 = vunpack.c.h.b16 %v478
      %v644 = vunpack.c.l.b16 %v479
      %v645 = vunpack.c.h.b16 %v479
      %v646 = vunpack.c.l.b16 %v480
      %v647 = vunpack.c.h.b16 %v480
      %v648 = vunpack.c.l.b16 %v481
      %v649 = vunpack.c.h.b16 %v481
      %v650 = vunpack.c.l.b16 %v482
      %v651 = vunpack.c.h.b16 %v482
      %v652 = vunpack.c.l.b16 %v483
      %v653 = vunpack.c.h.b16 %v483
      %v654 = vunpack.c.l.b16 %v484
      %v655 = vunpack.c.h.b16 %v484
      %v656 = vunpack.c.l.b16 %v485
      %v657 = vunpack.c.h.b16 %v485
      %v658 = vunpack.c.l.b16 %v486
      %v659 = vunpack.c.h.b16 %v486
      %v660 = vunpack.c.l.b16 %v487
      %v661 = vunpack.c.h.b16 %v487
      %v662 = vunpack.c.l.b16 %v488
      %v663 = vunpack.c.h.b16 %v488
      %v664 = vunpack.c.l.b16 %v489
      %v665 = vunpack.c.h.b16 %v489
      %v666 = vunpack.c.l.b16 %v490
      %v667 = vunpack.c.h.b16 %v490
      %v668 = vunpack.c.l.b16 %v491
      %v669 = vunpack.c.h.b16 %v491
      %v670 = vunpack.c.l.b16 %v492
      %v671 = vunpack.c.h.b16 %v492
      %v672 = vunpack.c.l.b16 %v493
      %v673 = vunpack.c.h.b16 %v493
      %v674 = vunpack.c.l.b16 %v494
      %v675 = vunpack.c.h.b16 %v494
      %v676 = vunpack.c.l.b16 %v495
      %v677 = vunpack.c.h.b16 %v495
      %v678 = vunpack.c.l.b16 %v496
      %v679 = vunpack.c.h.b16 %v496
      %v680 = vunpack.c.l.b16 %v497
      %v681 = vunpack.c.h.b16 %v497
      %v682 = vunpack.c.l.b16 %v498
      %v683 = vunpack.c.h.b16 %v498
      %v684 = vunpack.c.l.b16 %v499
      %v685 = vunpack.c.h.b16 %v499
      %v686 = vunpack.c.l.b16 %v500
      %v687 = vunpack.c.h.b16 %v500
      %v688 = vunpack.c.l.b16 %v501
      %v689 = vunpack.c.h.b16 %v501
      %v690 = vunpack.c.l.b16 %v502
      %v691 = vunpack.c.h.b16 %v502
      %v692 = vunpack.c.l.b16 %v503
      %v693 = vunpack.c.h.b16 %v503
      %v694 = vunpack.c.l.b16 %v504
      %v695 = vunpack.c.h.b16 %v504
      %v696 = vunpack.c.l.b16 %v505
      %v697 = vunpack.c.h.b16 %v505
      %v698 = vunpack.c.l.b16 %v506
      %v699 = vunpack.c.h.b16 %v506
      %v700 = vunpack.c.l.b16 %v507
      %v701 = vunpack.c.h.b16 %v507
      %v702 = vunpack.c.l.b16 %v508
      %v703 = vunpack.c.h.b16 %v508
      %v704 = vunpack.c.l.b16 %v509
      %v705 = vunpack.c.h.b16 %v509
      %v706 = vunpack.c.l.b16 %v510
      %v707 = vunpack.c.h.b16 %v510
      %v708 = vunpack.c.l.b16 %v511
      %v709 = vunpack.c.h.b16 %v511
      %v710 = vunpack.c.l.b16 %v512
      %v711 = vunpack.c.h.b16 %v512
      %v712 = vunpack.c.l.b16 %v513
      %v713 = vunpack.c.h.b16 %v513
      %v714 = vunpack.c.l.b16 %v514
      %v715 = vunpack.c.h.b16 %v514
      %v716 = vunpack.c.l.b16 %v515
      %v717 = vunpack.c.h.b16 %v515
      %v718 = vunpack.c.l.b16 %v516
      %v719 = vunpack.c.h.b16 %v516
      %v720 = vunpack.c.l.b16 %v517
      %v721 = vunpack.c.h.b16 %v517
      %v722 = vunpack.c.l.b16 %v518
      %v723 = vunpack.c.h.b16 %v518
      %v724 = vunpack.c.l.b16 %v519
      %v725 = vunpack.c.h.b16 %v519
      %v726 = vunpack.c.l.b16 %v520
      %v727 = vunpack.c.h.b16 %v520
      %v728 = vunpack.c.l.b16 %v521
      %v729 = vunpack.c.h.b16 %v521
      %v730 = vunpack.c.l.b16 %v522
      %v731 = vunpack.c.h.b16 %v522
      %v732 = vunpack.c.l.b16 %v523
      %v733 = vunpack.c.h.b16 %v523
      %v734 = vunpack.c.l.b16 %v524
      %v735 = vunpack.c.h.b16 %v524
      %v736 = vunpack.c.l.b16 %v525
      %v737 = vunpack.c.h.b16 %v525
      %v738 = vpack.c.b16 %v618, %v610
      %v739 = vpack.c.b16 %v619, %v611
      %v740 = vpack.c.b16 %v620, %v612
      %v741 = vpack.c.b16 %v621, %v613
      %v742 = vpack.c.b16 %v622, %v614
      %v743 = vpack.c.b16 %v623, %v615
      %v744 = vpack.c.b16 %v624, %v616
      %v745 = vpack.c.b16 %v625, %v617
      %v746 = vpack.c.b16 %v634, %v626
      %v747 = vpack.c.b16 %v635, %v627
      %v748 = vpack.c.b16 %v636, %v628
      %v749 = vpack.c.b16 %v637, %v629
      %v750 = vpack.c.b16 %v638, %v630
      %v751 = vpack.c.b16 %v639, %v631
      %v752 = vpack.c.b16 %v640, %v632
      %v753 = vpack.c.b16 %v641, %v633
      %v754 = vpack.c.b16 %v650, %v642
      %v755 = vpack.c.b16 %v651, %v643
      %v756 = vpack.c.b16 %v652, %v644
      %v757 = vpack.c.b16 %v653, %v645
      %v758 = vpack.c.b16 %v654, %v646
      %v759 = vpack.c.b16 %v655, %v647
      %v760 = vpack.c.b16 %v656, %v648
      %v761 = vpack.c.b16 %v657, %v649
      %v762 = vpack.c.b16 %v666, %v658
      %v763 = vpack.c.b16 %v667, %v659
      %v764 = vpack.c.b16 %v668, %v660
      %v765 = vpack.c.b16 %v669, %v661
      %v766 = vpack.c.b16 %v670, %v662
      %v767 = vpack.c.b16 %v671, %v663
      %v768 = vpack.c.b16 %v672, %v664
      %v769 = vpack.c.b16 %v673, %v665
      %v770 = vpack.c.b16 %v682, %v674
      %v771 = vpack.c.b16 %v683, %v675
      %v772 = vpack.c.b16 %v684, %v676
      %v773 = vpack.c.b16 %v685, %v677
      %v774 = vpack.c.b16 %v686, %v678
      %v775 = vpack.c.b16 %v687, %v679
      %v776 = vpack.c.b16 %v688, %v680
      %v777 = vpack.c.b16 %v689, %v681
      %v778 = vpack.c.b16 %v698, %v690
      %v779 = vpack.c.b16 %v699, %v691
      %v780 = vpack.c.b16 %v700, %v692
      %v781 = vpack.c.b16 %v701, %v693
      %v782 = vpack.c.b16 %v702, %v694
      %v783 = vpack.c.b16 %v703, %v695
      %v784 = vpack.c.b16 %v704, %v696
      %v785 = vpack.c.b16 %v705, %v697
      %v786 = vpack.c.b16 %v714, %v706
      %v787 = vpack.c.b16 %v715, %v707
      %v788 = vpack.c.b16 %v716, %v708
      %v789 = vpack.c.b16 %v717, %v709
      %v790 = vpack.c.b16 %v718, %v710
      %v791 = vpack.c.b16 %v719, %v711
      %v792 = vpack.c.b16 %v720, %v712
      %v793 = vpack.c.b16 %v721, %v713
      %v794 = vpack.c.b16 %v730, %v722
      %v795 = vpack.c.b16 %v731, %v723
      %v796 = vpack.c.b16 %v732, %v724
      %v797 = vpack.c.b16 %v733, %v725
      %v798 = vpack.c.b16 %v734, %v726
      %v799 = vpack.c.b16 %v735, %v727
      %v800 = vpack.c.b16 %v736, %v728
      %v801 = vpack.c.b16 %v737, %v729
      %866 = vmatprep.subr.bf16.mxu0 %v795
      %867 = vmatpush1.bf16.msra.mxu0 %v794
      %868 = vmatprep.subr.bf16.mxu0 %v787
      %869 = vmatpush1.bf16.msra.mxu0 %v786
      %870 = vmatprep.subr.bf16.mxu0 %v779
      %871 = vmatpush1.bf16.msra.mxu0 %v778
      %872 = vmatprep.subr.bf16.mxu0 %v771
      %873 = vmatpush1.bf16.msra.mxu0 %v770
      %874 = vmatprep.subr.bf16.mxu0 %v763
      %875 = vmatpush1.bf16.msra.mxu0 %v762
      %876 = vmatprep.subr.bf16.mxu0 %v755
      %877 = vmatpush1.bf16.msra.mxu0 %v754
      %878 = vmatprep.subr.bf16.mxu0 %v747
      %879 = vmatpush1.bf16.msra.mxu0 %v746
      %880 = vmatprep.subr.bf16.mxu0 %v739
      %881 = vmatpush1.bf16.msra.mxu0 %v738
      %882 = vmatprep.subr.bf16.mxu0 0
      %883 = vmatpush2.bf16.msra.mxu0 0
      %884 = vmatprep.subr.bf16.mxu0 0
      %885 = vmatpush2.bf16.msra.mxu0 0
      %886 = vmatprep.subr.bf16.mxu0 0
      %887 = vmatpush2.bf16.msra.mxu0 0
      %888 = vmatprep.subr.bf16.mxu0 0
      %889 = vmatpush2.bf16.msra.mxu0 0
      %890 = vmatprep.subr.bf16.mxu0 0
      %891 = vmatpush2.bf16.msra.mxu0 0
      %892 = vmatprep.subr.bf16.mxu0 0
      %893 = vmatpush2.bf16.msra.mxu0 0
      %894 = vmatprep.subr.bf16.mxu0 0
      %895 = vmatpush2.bf16.msra.mxu0 0
      %896 = vmatprep.subr.bf16.mxu0 0
      %897 = vmatpush2.bf16.msra.mxu0 0
      %898 = vmatprep.mubr.bf16.mxu0 0
      %899 = vmatmul.mubr.bf16.gmra.mxu0 %v544
      %v900 = vpop.f32.mrf.mxu0
      %v901 = vadd.f32 %v533, %v900
      %v902 = vpop.f32.mrf.mxu0
      %v903 = vadd.f32 %v533, %v902
      %v904 = vpop.f32.mrf.mxu0
      %v905 = vadd.f32 %v538, %v904
      %v906 = vpop.f32.mrf.mxu0
      %v907 = vadd.f32 %v538, %v906
      %908 = vdwg.mxu0
      %909 = vmatprep.subr.bf16.mxu0 %v797
      %910 = vmatpush1.bf16.msra.mxu0 %v796
      %911 = vmatprep.subr.bf16.mxu0 %v789
      %912 = vmatpush1.bf16.msra.mxu0 %v788
      %913 = vmatprep.subr.bf16.mxu0 %v781
      %914 = vmatpush1.bf16.msra.mxu0 %v780
      %915 = vmatprep.subr.bf16.mxu0 %v773
      %916 = vmatpush1.bf16.msra.mxu0 %v772
      %917 = vmatprep.subr.bf16.mxu0 %v765
      %918 = vmatpush1.bf16.msra.mxu0 %v764
      %919 = vmatprep.subr.bf16.mxu0 %v757
      %920 = vmatpush1.bf16.msra.mxu0 %v756
      %921 = vmatprep.subr.bf16.mxu0 %v749
      %922 = vmatpush1.bf16.msra.mxu0 %v748
      %923 = vmatprep.subr.bf16.mxu0 %v741
      %924 = vmatpush1.bf16.msra.mxu0 %v740
      %925 = vmatprep.subr.bf16.mxu0 0
      %926 = vmatpush2.bf16.msra.mxu0 0
      %927 = vmatprep.subr.bf16.mxu0 0
      %928 = vmatpush2.bf16.msra.mxu0 0
      %929 = vmatprep.subr.bf16.mxu0 0
      %930 = vmatpush2.bf16.msra.mxu0 0
      %931 = vmatprep.subr.bf16.mxu0 0
      %932 = vmatpush2.bf16.msra.mxu0 0
      %933 = vmatprep.subr.bf16.mxu0 0
      %934 = vmatpush2.bf16.msra.mxu0 0
      %935 = vmatprep.subr.bf16.mxu0 0
      %936 = vmatpush2.bf16.msra.mxu0 0
      %937 = vmatprep.subr.bf16.mxu0 0
      %938 = vmatpush2.bf16.msra.mxu0 0
      %939 = vmatprep.subr.bf16.mxu0 0
      %940 = vmatpush2.bf16.msra.mxu0 0
      %941 = vmatprep.mubr.bf16.mxu0 0
      %942 = vmatmul.mubr.bf16.gmra.mxu0 %v544
      %v943 = vpop.f32.mrf.mxu0
      %v944 = vadd.f32 %v533, %v943
      %v945 = vpop.f32.mrf.mxu0
      %v946 = vadd.f32 %v533, %v945
      %v947 = vpop.f32.mrf.mxu0
      %v948 = vadd.f32 %v538, %v947
      %v949 = vpop.f32.mrf.mxu0
      %v950 = vadd.f32 %v538, %v949
      %951 = vdwg.mxu0
      %952 = vmatprep.subr.bf16.mxu0 %v799
      %953 = vmatpush1.bf16.msra.mxu0 %v798
      %954 = vmatprep.subr.bf16.mxu0 %v791
      %955 = vmatpush1.bf16.msra.mxu0 %v790
      %956 = vmatprep.subr.bf16.mxu0 %v783
      %957 = vmatpush1.bf16.msra.mxu0 %v782
      %958 = vmatprep.subr.bf16.mxu0 %v775
      %959 = vmatpush1.bf16.msra.mxu0 %v774
      %960 = vmatprep.subr.bf16.mxu0 %v767
      %961 = vmatpush1.bf16.msra.mxu0 %v766
      %962 = vmatprep.subr.bf16.mxu0 %v759
      %963 = vmatpush1.bf16.msra.mxu0 %v758
      %964 = vmatprep.subr.bf16.mxu0 %v751
      %965 = vmatpush1.bf16.msra.mxu0 %v750
      %966 = vmatprep.subr.bf16.mxu0 %v743
      %967 = vmatpush1.bf16.msra.mxu0 %v742
      %968 = vmatprep.subr.bf16.mxu0 0
      %969 = vmatpush2.bf16.msra.mxu0 0
      %970 = vmatprep.subr.bf16.mxu0 0
      %971 = vmatpush2.bf16.msra.mxu0 0
      %972 = vmatprep.subr.bf16.mxu0 0
      %973 = vmatpush2.bf16.msra.mxu0 0
      %974 = vmatprep.subr.bf16.mxu0 0
      %975 = vmatpush2.bf16.msra.mxu0 0
      %976 = vmatprep.subr.bf16.mxu0 0
      %977 = vmatpush2.bf16.msra.mxu0 0
      %978 = vmatprep.subr.bf16.mxu0 0
      %979 = vmatpush2.bf16.msra.mxu0 0
      %980 = vmatprep.subr.bf16.mxu0 0
      %981 = vmatpush2.bf16.msra.mxu0 0
      %982 = vmatprep.subr.bf16.mxu0 0
      %983 = vmatpush2.bf16.msra.mxu0 0
      %984 = vmatprep.mubr.bf16.mxu0 0
      %985 = vmatmul.mubr.bf16.gmra.mxu0 %v544
      %v986 = vpop.f32.mrf.mxu0
      %v987 = vadd.f32 %v533, %v986
      %v988 = vpop.f32.mrf.mxu0
      %v989 = vadd.f32 %v533, %v988
      %v990 = vpop.f32.mrf.mxu0
      %v991 = vadd.f32 %v538, %v990
      %v992 = vpop.f32.mrf.mxu0
      %v993 = vadd.f32 %v538, %v992
      %994 = vdwg.mxu0
      %995 = vmatprep.subr.bf16.mxu0 %v801
      %996 = vmatpush1.bf16.msra.mxu0 %v800
      %997 = vmatprep.subr.bf16.mxu0 %v793
      %998 = vmatpush1.bf16.msra.mxu0 %v792
      %999 = vmatprep.subr.bf16.mxu0 %v785
      %1000 = vmatpush1.bf16.msra.mxu0 %v784
      %1001 = vmatprep.subr.bf16.mxu0 %v777
      %1002 = vmatpush1.bf16.msra.mxu0 %v776
      %1003 = vmatprep.subr.bf16.mxu0 %v769
      %1004 = vmatpush1.bf16.msra.mxu0 %v768
      %1005 = vmatprep.subr.bf16.mxu0 %v761
      %1006 = vmatpush1.bf16.msra.mxu0 %v760
      %1007 = vmatprep.subr.bf16.mxu0 %v753
      %1008 = vmatpush1.bf16.msra.mxu0 %v752
      %1009 = vmatprep.subr.bf16.mxu0 %v745
      %1010 = vmatpush1.bf16.msra.mxu0 %v744
      %1011 = vmatprep.subr.bf16.mxu0 0
      %1012 = vmatpush2.bf16.msra.mxu0 0
      %1013 = vmatprep.subr.bf16.mxu0 0
      %1014 = vmatpush2.bf16.msra.mxu0 0
      %1015 = vmatprep.subr.bf16.mxu0 0
      %1016 = vmatpush2.bf16.msra.mxu0 0
      %1017 = vmatprep.subr.bf16.mxu0 0
      %1018 = vmatpush2.bf16.msra.mxu0 0
      %1019 = vmatprep.subr.bf16.mxu0 0
      %1020 = vmatpush2.bf16.msra.mxu0 0
      %1021 = vmatprep.subr.bf16.mxu0 0
      %1022 = vmatpush2.bf16.msra.mxu0 0
      %1023 = vmatprep.subr.bf16.mxu0 0
      %1024 = vmatpush2.bf16.msra.mxu0 0
      %1025 = vmatprep.subr.bf16.mxu0 0
      %1026 = vmatpush2.bf16.msra.mxu0 0
      %1027 = vmatprep.mubr.bf16.mxu0 0
      %1028 = vmatmul.mubr.bf16.gmra.mxu0 %v544
      %v1029 = vpop.f32.mrf.mxu0
      %v1030 = vadd.f32 %v533, %v1029
      %v1031 = vpop.f32.mrf.mxu0
      %v1032 = vadd.f32 %v533, %v1031
      %v1033 = vpop.f32.mrf.mxu0
      %v1034 = vadd.f32 %v538, %v1033
      %v1035 = vpop.f32.mrf.mxu0
      %v1036 = vadd.f32 %v538, %v1035
      %1037 = vdwg.mxu0
      %v1038 = vmax.f32 %v901, 0.0
      %v1039 = vmax.f32 %v903, 0.0
      %v1040 = vmax.f32 %v944, 0.0
      %v1041 = vmax.f32 %v946, 0.0
      %v1042 = vmax.f32 %v987, 0.0
      %v1043 = vmax.f32 %v989, 0.0
      %v1044 = vmax.f32 %v1030, 0.0
      %v1045 = vmax.f32 %v1032, 0.0
      %v1046 = vmax.f32 %v905, 0.0
      %v1047 = vmax.f32 %v907, 0.0
      %v1048 = vmax.f32 %v948, 0.0
      %v1049 = vmax.f32 %v950, 0.0
      %v1050 = vmax.f32 %v991, 0.0
      %v1051 = vmax.f32 %v993, 0.0
      %v1052 = vmax.f32 %v1034, 0.0
      %v1053 = vmax.f32 %v1036, 0.0
      %v1054 = vld [vmem:[%s4] sm:$0xf]
      %v1055 = vld [vmem:[%s4 + $0x4] sm:$0xf]
      %v1056 = vpack.c.bf16 %v1046, %v1038
      %v1057 = vpack.c.bf16 %v1047, %v1039
      %v1058 = vpack.c.bf16 %v1048, %v1040
      %v1059 = vpack.c.bf16 %v1049, %v1041
      %v1060 = vpack.c.bf16 %v1050, %v1042
      %v1061 = vpack.c.bf16 %v1051, %v1043
      %v1062 = vpack.c.bf16 %v1052, %v1044
      %v1063 = vpack.c.bf16 %v1053, %v1045
      %v1064 = vld [vmem:[%s5] sm:$0xff]
      %v1065 = vld [vmem:[%s5 + $0x8] sm:$0xff]
      %1067 = vset.pattern.permute.xlu0 0
      %1068 = vperm.xlu0 %1067, %v1064
      %v1069 = vpop.permute.xlu0 %1068
      %1072 = vset.pattern.permute.xlu0 0
      %1073 = vperm.xlu0 %1072, %v1065
      %v1074 = vpop.permute.xlu0 %1073
      %v1078 = vunpack.c.l.b16 %v1054
      %v1079 = vunpack.c.l.b16 %v1055
      %v1080 = vpack.c.b16 %v1079, %v1078
      %vm1081 = vcmask 130048
      %v1083 = vsel %vm1081, %v1080, 0
      %1085 = vmatprep.subr.bf16.mxu0 0
      %1086 = vmatpush1.bf16.msra.mxu0 0
      %1087 = vmatprep.subr.bf16.mxu0 0
      %1088 = vmatpush1.bf16.msra.mxu0 0
      %1089 = vmatprep.subr.bf16.mxu0 0
      %1090 = vmatpush1.bf16.msra.mxu0 0
      %1091 = vmatprep.subr.bf16.mxu0 0
      %1092 = vmatpush1.bf16.msra.mxu0 0
      %1093 = vmatprep.subr.bf16.mxu0 0
      %1094 = vmatpush1.bf16.msra.mxu0 0
      %1095 = vmatprep.subr.bf16.mxu0 0
      %1096 = vmatpush1.bf16.msra.mxu0 0
      %1097 = vmatprep.subr.bf16.mxu0 0
      %1098 = vmatpush1.bf16.msra.mxu0 0
      %1099 = vmatprep.subr.bf16.mxu0 %v1057
      %1100 = vmatpush1.bf16.msra.mxu0 %v1056
      %1101 = vmatprep.subr.bf16.mxu0 0
      %1102 = vmatpush2.bf16.msra.mxu0 0
      %1103 = vmatprep.subr.bf16.mxu0 0
      %1104 = vmatpush2.bf16.msra.mxu0 0
      %1105 = vmatprep.subr.bf16.mxu0 0
      %1106 = vmatpush2.bf16.msra.mxu0 0
      %1107 = vmatprep.subr.bf16.mxu0 0
      %1108 = vmatpush2.bf16.msra.mxu0 0
      %1109 = vmatprep.subr.bf16.mxu0 0
      %1110 = vmatpush2.bf16.msra.mxu0 0
      %1111 = vmatprep.subr.bf16.mxu0 0
      %1112 = vmatpush2.bf16.msra.mxu0 0
      %1113 = vmatprep.subr.bf16.mxu0 0
      %1114 = vmatpush2.bf16.msra.mxu0 0
      %1115 = vmatprep.subr.bf16.mxu0 0
      %1116 = vmatpush2.bf16.msra.mxu0 0
      %1117 = vmatprep.mubr.bf16.mxu0 0
      %1118 = vmatmul.mubr.bf16.gmra.mxu0 %v1083
      %v1119 = vpop.f32.mrf.mxu0
      %v1120 = vadd.f32 %v1069, %v1119
      %v1121 = vpop.f32.mrf.mxu0
      %v1122 = vadd.f32 %v1069, %v1121
      %v1123 = vpop.f32.mrf.mxu0
      %v1124 = vadd.f32 %v1074, %v1123
      %v1125 = vpop.f32.mrf.mxu0
      %v1126 = vadd.f32 %v1074, %v1125
      %1127 = vdwg.mxu0
      %1128 = vmatprep.subr.bf16.mxu0 0
      %1129 = vmatpush1.bf16.msra.mxu0 0
      %1130 = vmatprep.subr.bf16.mxu0 0
      %1131 = vmatpush1.bf16.msra.mxu0 0
      %1132 = vmatprep.subr.bf16.mxu0 0
      %1133 = vmatpush1.bf16.msra.mxu0 0
      %1134 = vmatprep.subr.bf16.mxu0 0
      %1135 = vmatpush1.bf16.msra.mxu0 0
      %1136 = vmatprep.subr.bf16.mxu0 0
      %1137 = vmatpush1.bf16.msra.mxu0 0
      %1138 = vmatprep.subr.bf16.mxu0 0
      %1139 = vmatpush1.bf16.msra.mxu0 0
      %1140 = vmatprep.subr.bf16.mxu0 0
      %1141 = vmatpush1.bf16.msra.mxu0 0
      %1142 = vmatprep.subr.bf16.mxu0 %v1059
      %1143 = vmatpush1.bf16.msra.mxu0 %v1058
      %1144 = vmatprep.subr.bf16.mxu0 0
      %1145 = vmatpush2.bf16.msra.mxu0 0
      %1146 = vmatprep.subr.bf16.mxu0 0
      %1147 = vmatpush2.bf16.msra.mxu0 0
      %1148 = vmatprep.subr.bf16.mxu0 0
      %1149 = vmatpush2.bf16.msra.mxu0 0
      %1150 = vmatprep.subr.bf16.mxu0 0
      %1151 = vmatpush2.bf16.msra.mxu0 0
      %1152 = vmatprep.subr.bf16.mxu0 0
      %1153 = vmatpush2.bf16.msra.mxu0 0
      %1154 = vmatprep.subr.bf16.mxu0 0
      %1155 = vmatpush2.bf16.msra.mxu0 0
      %1156 = vmatprep.subr.bf16.mxu0 0
      %1157 = vmatpush2.bf16.msra.mxu0 0
      %1158 = vmatprep.subr.bf16.mxu0 0
      %1159 = vmatpush2.bf16.msra.mxu0 0
      %1160 = vmatprep.mubr.bf16.mxu0 0
      %1161 = vmatmul.mubr.bf16.gmra.mxu0 %v1083
      %v1162 = vpop.f32.mrf.mxu0
      %v1163 = vadd.f32 %v1069, %v1162
      %v1164 = vpop.f32.mrf.mxu0
      %v1165 = vadd.f32 %v1069, %v1164
      %v1166 = vpop.f32.mrf.mxu0
      %v1167 = vadd.f32 %v1074, %v1166
      %v1168 = vpop.f32.mrf.mxu0
      %v1169 = vadd.f32 %v1074, %v1168
      %1170 = vdwg.mxu0
      %1171 = vmatprep.subr.bf16.mxu0 0
      %1172 = vmatpush1.bf16.msra.mxu0 0
      %1173 = vmatprep.subr.bf16.mxu0 0
      %1174 = vmatpush1.bf16.msra.mxu0 0
      %1175 = vmatprep.subr.bf16.mxu0 0
      %1176 = vmatpush1.bf16.msra.mxu0 0
      %1177 = vmatprep.subr.bf16.mxu0 0
      %1178 = vmatpush1.bf16.msra.mxu0 0
      %1179 = vmatprep.subr.bf16.mxu0 0
      %1180 = vmatpush1.bf16.msra.mxu0 0
      %1181 = vmatprep.subr.bf16.mxu0 0
      %1182 = vmatpush1.bf16.msra.mxu0 0
      %1183 = vmatprep.subr.bf16.mxu0 0
      %1184 = vmatpush1.bf16.msra.mxu0 0
      %1185 = vmatprep.subr.bf16.mxu0 %v1061
      %1186 = vmatpush1.bf16.msra.mxu0 %v1060
      %1187 = vmatprep.subr.bf16.mxu0 0
      %1188 = vmatpush2.bf16.msra.mxu0 0
      %1189 = vmatprep.subr.bf16.mxu0 0
      %1190 = vmatpush2.bf16.msra.mxu0 0
      %1191 = vmatprep.subr.bf16.mxu0 0
      %1192 = vmatpush2.bf16.msra.mxu0 0
      %1193 = vmatprep.subr.bf16.mxu0 0
      %1194 = vmatpush2.bf16.msra.mxu0 0
      %1195 = vmatprep.subr.bf16.mxu0 0
      %1196 = vmatpush2.bf16.msra.mxu0 0
      %1197 = vmatprep.subr.bf16.mxu0 0
      %1198 = vmatpush2.bf16.msra.mxu0 0
      %1199 = vmatprep.subr.bf16.mxu0 0
      %1200 = vmatpush2.bf16.msra.mxu0 0
      %1201 = vmatprep.subr.bf16.mxu0 0
      %1202 = vmatpush2.bf16.msra.mxu0 0
      %1203 = vmatprep.mubr.bf16.mxu0 0
      %1204 = vmatmul.mubr.bf16.gmra.mxu0 %v1083
      %v1205 = vpop.f32.mrf.mxu0
      %v1206 = vadd.f32 %v1069, %v1205
      %v1207 = vpop.f32.mrf.mxu0
      %v1208 = vadd.f32 %v1069, %v1207
      %v1209 = vpop.f32.mrf.mxu0
      %v1210 = vadd.f32 %v1074, %v1209
      %v1211 = vpop.f32.mrf.mxu0
      %v1212 = vadd.f32 %v1074, %v1211
      %1213 = vdwg.mxu0
      %1214 = vmatprep.subr.bf16.mxu0 0
      %1215 = vmatpush1.bf16.msra.mxu0 0
      %1216 = vmatprep.subr.bf16.mxu0 0
      %1217 = vmatpush1.bf16.msra.mxu0 0
      %1218 = vmatprep.subr.bf16.mxu0 0
      %1219 = vmatpush1.bf16.msra.mxu0 0
      %1220 = vmatprep.subr.bf16.mxu0 0
      %1221 = vmatpush1.bf16.msra.mxu0 0
      %1222 = vmatprep.subr.bf16.mxu0 0
      %1223 = vmatpush1.bf16.msra.mxu0 0
      %1224 = vmatprep.subr.bf16.mxu0 0
      %1225 = vmatpush1.bf16.msra.mxu0 0
      %1226 = vmatprep.subr.bf16.mxu0 0
      %1227 = vmatpush1.bf16.msra.mxu0 0
      %1228 = vmatprep.subr.bf16.mxu0 %v1063
      %1229 = vmatpush1.bf16.msra.mxu0 %v1062
      %1230 = vmatprep.subr.bf16.mxu0 0
      %1231 = vmatpush2.bf16.msra.mxu0 0
      %1232 = vmatprep.subr.bf16.mxu0 0
      %1233 = vmatpush2.bf16.msra.mxu0 0
      %1234 = vmatprep.subr.bf16.mxu0 0
      %1235 = vmatpush2.bf16.msra.mxu0 0
      %1236 = vmatprep.subr.bf16.mxu0 0
      %1237 = vmatpush2.bf16.msra.mxu0 0
      %1238 = vmatprep.subr.bf16.mxu0 0
      %1239 = vmatpush2.bf16.msra.mxu0 0
      %1240 = vmatprep.subr.bf16.mxu0 0
      %1241 = vmatpush2.bf16.msra.mxu0 0
      %1242 = vmatprep.subr.bf16.mxu0 0
      %1243 = vmatpush2.bf16.msra.mxu0 0
      %1244 = vmatprep.subr.bf16.mxu0 0
      %1245 = vmatpush2.bf16.msra.mxu0 0
      %1246 = vmatprep.mubr.bf16.mxu0 0
      %1247 = vmatmul.mubr.bf16.gmra.mxu0 %v1083
      %v1248 = vpop.f32.mrf.mxu0
      %v1249 = vadd.f32 %v1069, %v1248
      %v1250 = vpop.f32.mrf.mxu0
      %v1251 = vadd.f32 %v1069, %v1250
      %v1252 = vpop.f32.mrf.mxu0
      %v1253 = vadd.f32 %v1074, %v1252
      %v1254 = vpop.f32.mrf.mxu0
      %v1255 = vadd.f32 %v1074, %v1254
      %1256 = vdwg.mxu0
      %v1257 = vmax.f32 %v1120, 0.0
      %v1258 = vmax.f32 %v1122, 0.0
      %v1259 = vmax.f32 %v1163, 0.0
      %v1260 = vmax.f32 %v1165, 0.0
      %v1261 = vmax.f32 %v1206, 0.0
      %v1262 = vmax.f32 %v1208, 0.0
      %v1263 = vmax.f32 %v1249, 0.0
      %v1264 = vmax.f32 %v1251, 0.0
      %v1265 = vmax.f32 %v1124, 0.0
      %v1266 = vmax.f32 %v1126, 0.0
      %v1267 = vmax.f32 %v1167, 0.0
      %v1268 = vmax.f32 %v1169, 0.0
      %v1269 = vmax.f32 %v1210, 0.0
      %v1270 = vmax.f32 %v1212, 0.0
      %v1271 = vmax.f32 %v1253, 0.0
      %v1272 = vmax.f32 %v1255, 0.0
      %v1273 = vld [vmem:[%s6] sm:$0xf]
      %v1274 = vld [vmem:[%s6 + $0x4] sm:$0xf]
      %v1275 = vld [vmem:[%s6 + $0x8] sm:$0xf]
      %v1276 = vld [vmem:[%s6 + $0xc] sm:$0xf]
      %v1277 = vld [vmem:[%s6 + $0x10] sm:$0xf]
      %v1278 = vld [vmem:[%s6 + $0x14] sm:$0xf]
      %v1279 = vld [vmem:[%s6 + $0x18] sm:$0xf]
      %v1280 = vld [vmem:[%s6 + $0x1c] sm:$0xf]
      %v1281 = vld [vmem:[%s6 + $0x20] sm:$0xf]
      %v1282 = vld [vmem:[%s6 + $0x24] sm:$0xf]
      %v1283 = vld [vmem:[%s6 + $0x28] sm:$0xf]
      %v1284 = vld [vmem:[%s6 + $0x2c] sm:$0xf]
      %v1285 = vld [vmem:[%s6 + $0x30] sm:$0xf]
      %v1286 = vld [vmem:[%s6 + $0x34] sm:$0xf]
      %v1287 = vld [vmem:[%s6 + $0x38] sm:$0xf]
      %v1288 = vld [vmem:[%s6 + $0x3c] sm:$0xf]
      %v1289 = vld [vmem:[%s6 + $0x40] sm:$0xf]
      %v1290 = vld [vmem:[%s6 + $0x44] sm:$0xf]
      %v1291 = vld [vmem:[%s6 + $0x48] sm:$0xf]
      %v1292 = vld [vmem:[%s6 + $0x4c] sm:$0xf]
      %v1293 = vld [vmem:[%s6 + $0x50] sm:$0xf]
      %v1294 = vld [vmem:[%s6 + $0x54] sm:$0xf]
      %v1295 = vld [vmem:[%s6 + $0x58] sm:$0xf]
      %v1296 = vld [vmem:[%s6 + $0x5c] sm:$0xf]
      %v1297 = vld [vmem:[%s6 + $0x60] sm:$0xf]
      %v1298 = vld [vmem:[%s6 + $0x64] sm:$0xf]
      %v1299 = vld [vmem:[%s6 + $0x68] sm:$0xf]
      %v1300 = vld [vmem:[%s6 + $0x6c] sm:$0xf]
      %v1301 = vld [vmem:[%s6 + $0x70] sm:$0xf]
      %v1302 = vld [vmem:[%s6 + $0x74] sm:$0xf]
      %v1303 = vld [vmem:[%s6 + $0x78] sm:$0xf]
      %v1304 = vld [vmem:[%s6 + $0x7c] sm:$0xf]
      %v1305 = vld [vmem:[%s6 + $0x80] sm:$0xf]
      %v1306 = vld [vmem:[%s6 + $0x84] sm:$0xf]
      %v1307 = vld [vmem:[%s6 + $0x88] sm:$0xf]
      %v1308 = vld [vmem:[%s6 + $0x8c] sm:$0xf]
      %v1309 = vld [vmem:[%s6 + $0x90] sm:$0xf]
      %v1310 = vld [vmem:[%s6 + $0x94] sm:$0xf]
      %v1311 = vld [vmem:[%s6 + $0x98] sm:$0xf]
      %v1312 = vld [vmem:[%s6 + $0x9c] sm:$0xf]
      %v1313 = vld [vmem:[%s6 + $0xa0] sm:$0xf]
      %v1314 = vld [vmem:[%s6 + $0xa4] sm:$0xf]
      %v1315 = vld [vmem:[%s6 + $0xa8] sm:$0xf]
      %v1316 = vld [vmem:[%s6 + $0xac] sm:$0xf]
      %v1317 = vld [vmem:[%s6 + $0xb0] sm:$0xf]
      %v1318 = vld [vmem:[%s6 + $0xb4] sm:$0xf]
      %v1319 = vld [vmem:[%s6 + $0xb8] sm:$0xf]
      %v1320 = vld [vmem:[%s6 + $0xbc] sm:$0xf]
      %v1321 = vld [vmem:[%s6 + $0xc0] sm:$0xf]
      %v1322 = vld [vmem:[%s6 + $0xc4] sm:$0xf]
      %v1323 = vld [vmem:[%s6 + $0xc8] sm:$0xf]
      %v1324 = vld [vmem:[%s6 + $0xcc] sm:$0xf]
      %v1325 = vld [vmem:[%s6 + $0xd0] sm:$0xf]
      %v1326 = vld [vmem:[%s6 + $0xd4] sm:$0xf]
      %v1327 = vld [vmem:[%s6 + $0xd8] sm:$0xf]
      %v1328 = vld [vmem:[%s6 + $0xdc] sm:$0xf]
      %v1329 = vld [vmem:[%s6 + $0xe0] sm:$0xf]
      %v1330 = vld [vmem:[%s6 + $0xe4] sm:$0xf]
      %v1331 = vld [vmem:[%s6 + $0xe8] sm:$0xf]
      %v1332 = vld [vmem:[%s6 + $0xec] sm:$0xf]
      %v1333 = vld [vmem:[%s6 + $0xf0] sm:$0xf]
      %v1334 = vld [vmem:[%s6 + $0xf4] sm:$0xf]
      %v1335 = vld [vmem:[%s6 + $0xf8] sm:$0xf]
      %v1336 = vld [vmem:[%s6 + $0xfc] sm:$0xf]
      %v1337 = vpack.c.bf16 %v1265, %v1257
      %v1338 = vpack.c.bf16 %v1266, %v1258
      %v1339 = vpack.c.bf16 %v1267, %v1259
      %v1340 = vpack.c.bf16 %v1268, %v1260
      %v1341 = vpack.c.bf16 %v1269, %v1261
      %v1342 = vpack.c.bf16 %v1270, %v1262
      %v1343 = vpack.c.bf16 %v1271, %v1263
      %v1344 = vpack.c.bf16 %v1272, %v1264
      %v1345 = vld [vmem:[%s7] sm:$0xff]
      %v1346 = vld [vmem:[%s7 + $0x8] sm:$0xff]
      %v1347 = vld [vmem:[%s7 + $0x10] sm:$0xff]
      %v1348 = vld [vmem:[%s7 + $0x18] sm:$0xff]
      %v1349 = vld [vmem:[%s7 + $0x20] sm:$0xff]
      %v1350 = vld [vmem:[%s7 + $0x28] sm:$0xff]
      %v1351 = vld [vmem:[%s7 + $0x30] sm:$0xff]
      %v1352 = vld [vmem:[%s7 + $0x38] sm:$0xff]
      %v1353 = vld [vmem:[%s7 + $0x40] sm:$0xff]
      %v1354 = vld [vmem:[%s7 + $0x48] sm:$0xff]
      %v1355 = vld [vmem:[%s7 + $0x50] sm:$0xff]
      %v1356 = vld [vmem:[%s7 + $0x58] sm:$0xff]
      %v1357 = vld [vmem:[%s7 + $0x60] sm:$0xff]
      %v1358 = vld [vmem:[%s7 + $0x68] sm:$0xff]
      %v1359 = vld [vmem:[%s7 + $0x70] sm:$0xff]
      %v1360 = vld [vmem:[%s7 + $0x78] sm:$0xff]
      %v1361 = vld [vmem:[%s7 + $0x80] sm:$0xff]
      %v1362 = vld [vmem:[%s7 + $0x88] sm:$0xff]
      %v1363 = vld [vmem:[%s7 + $0x90] sm:$0xff]
      %v1364 = vld [vmem:[%s7 + $0x98] sm:$0xff]
      %v1365 = vld [vmem:[%s7 + $0xa0] sm:$0xff]
      %v1366 = vld [vmem:[%s7 + $0xa8] sm:$0xff]
      %v1367 = vld [vmem:[%s7 + $0xb0] sm:$0xff]
      %v1368 = vld [vmem:[%s7 + $0xb8] sm:$0xff]
      %v1369 = vld [vmem:[%s7 + $0xc0] sm:$0xff]
      %v1370 = vld [vmem:[%s7 + $0xc8] sm:$0xff]
      %v1371 = vld [vmem:[%s7 + $0xd0] sm:$0xff]
      %v1372 = vld [vmem:[%s7 + $0xd8] sm:$0xff]
      %v1373 = vld [vmem:[%s7 + $0xe0] sm:$0xff]
      %v1374 = vld [vmem:[%s7 + $0xe8] sm:$0xff]
      %v1375 = vld [vmem:[%s7 + $0xf0] sm:$0xff]
      %v1376 = vld [vmem:[%s7 + $0xf8] sm:$0xff]
      %v1377 = vld [vmem:[%s7 + $0x100] sm:$0xff]
      %v1378 = vld [vmem:[%s7 + $0x108] sm:$0xff]
      %v1379 = vld [vmem:[%s7 + $0x110] sm:$0xff]
      %v1380 = vld [vmem:[%s7 + $0x118] sm:$0xff]
      %v1381 = vld [vmem:[%s7 + $0x120] sm:$0xff]
      %v1382 = vld [vmem:[%s7 + $0x128] sm:$0xff]
      %v1383 = vld [vmem:[%s7 + $0x130] sm:$0xff]
      %v1384 = vld [vmem:[%s7 + $0x138] sm:$0xff]
      %v1385 = vld [vmem:[%s7 + $0x140] sm:$0xff]
      %v1386 = vld [vmem:[%s7 + $0x148] sm:$0xff]
      %v1387 = vld [vmem:[%s7 + $0x150] sm:$0xff]
      %v1388 = vld [vmem:[%s7 + $0x158] sm:$0xff]
      %v1389 = vld [vmem:[%s7 + $0x160] sm:$0xff]
      %v1390 = vld [vmem:[%s7 + $0x168] sm:$0xff]
      %v1391 = vld [vmem:[%s7 + $0x170] sm:$0xff]
      %v1392 = vld [vmem:[%s7 + $0x178] sm:$0xff]
      %v1393 = vld [vmem:[%s7 + $0x180] sm:$0xff]
      %v1394 = vld [vmem:[%s7 + $0x188] sm:$0xff]
      %v1395 = vld [vmem:[%s7 + $0x190] sm:$0xff]
      %v1396 = vld [vmem:[%s7 + $0x198] sm:$0xff]
      %v1397 = vld [vmem:[%s7 + $0x1a0] sm:$0xff]
      %v1398 = vld [vmem:[%s7 + $0x1a8] sm:$0xff]
      %v1399 = vld [vmem:[%s7 + $0x1b0] sm:$0xff]
      %v1400 = vld [vmem:[%s7 + $0x1b8] sm:$0xff]
      %v1401 = vld [vmem:[%s7 + $0x1c0] sm:$0xff]
      %v1402 = vld [vmem:[%s7 + $0x1c8] sm:$0xff]
      %v1403 = vld [vmem:[%s7 + $0x1d0] sm:$0xff]
      %v1404 = vld [vmem:[%s7 + $0x1d8] sm:$0xff]
      %v1405 = vld [vmem:[%s7 + $0x1e0] sm:$0xff]
      %v1406 = vld [vmem:[%s7 + $0x1e8] sm:$0xff]
      %v1407 = vld [vmem:[%s7 + $0x1f0] sm:$0xff]
      %v1408 = vld [vmem:[%s7 + $0x1f8] sm:$0xff]
      %1410 = vset.pattern.permute.xlu0 0
      %1411 = vperm.xlu0 %1410, %v1345
      %v1412 = vpop.permute.xlu0 %1411
      %1415 = vset.pattern.permute.xlu0 0
      %1416 = vperm.xlu0 %1415, %v1346
      %v1417 = vpop.permute.xlu0 %1416
      %1420 = vset.pattern.permute.xlu0 0
      %1421 = vperm.xlu0 %1420, %v1347
      %v1422 = vpop.permute.xlu0 %1421
      %1425 = vset.pattern.permute.xlu0 0
      %1426 = vperm.xlu0 %1425, %v1348
      %v1427 = vpop.permute.xlu0 %1426
      %1430 = vset.pattern.permute.xlu0 0
      %1431 = vperm.xlu0 %1430, %v1349
      %v1432 = vpop.permute.xlu0 %1431
      %1435 = vset.pattern.permute.xlu0 0
      %1436 = vperm.xlu0 %1435, %v1350
      %v1437 = vpop.permute.xlu0 %1436
      %1440 = vset.pattern.permute.xlu0 0
      %1441 = vperm.xlu0 %1440, %v1351
      %v1442 = vpop.permute.xlu0 %1441
      %1445 = vset.pattern.permute.xlu0 0
      %1446 = vperm.xlu0 %1445, %v1352
      %v1447 = vpop.permute.xlu0 %1446
      %1450 = vset.pattern.permute.xlu0 0
      %1451 = vperm.xlu0 %1450, %v1353
      %v1452 = vpop.permute.xlu0 %1451
      %1455 = vset.pattern.permute.xlu0 0
      %1456 = vperm.xlu0 %1455, %v1354
      %v1457 = vpop.permute.xlu0 %1456
      %1460 = vset.pattern.permute.xlu0 0
      %1461 = vperm.xlu0 %1460, %v1355
      %v1462 = vpop.permute.xlu0 %1461
      %1465 = vset.pattern.permute.xlu0 0
      %1466 = vperm.xlu0 %1465, %v1356
      %v1467 = vpop.permute.xlu0 %1466
      %1470 = vset.pattern.permute.xlu0 0
      %1471 = vperm.xlu0 %1470, %v1357
      %v1472 = vpop.permute.xlu0 %1471
      %1475 = vset.pattern.permute.xlu0 0
      %1476 = vperm.xlu0 %1475, %v1358
      %v1477 = vpop.permute.xlu0 %1476
      %1480 = vset.pattern.permute.xlu0 0
      %1481 = vperm.xlu0 %1480, %v1359
      %v1482 = vpop.permute.xlu0 %1481
      %1485 = vset.pattern.permute.xlu0 0
      %1486 = vperm.xlu0 %1485, %v1360
      %v1487 = vpop.permute.xlu0 %1486
      %1490 = vset.pattern.permute.xlu0 0
      %1491 = vperm.xlu0 %1490, %v1361
      %v1492 = vpop.permute.xlu0 %1491
      %1495 = vset.pattern.permute.xlu0 0
      %1496 = vperm.xlu0 %1495, %v1362
      %v1497 = vpop.permute.xlu0 %1496
      %1500 = vset.pattern.permute.xlu0 0
      %1501 = vperm.xlu0 %1500, %v1363
      %v1502 = vpop.permute.xlu0 %1501
      %1505 = vset.pattern.permute.xlu0 0
      %1506 = vperm.xlu0 %1505, %v1364
      %v1507 = vpop.permute.xlu0 %1506
      %1510 = vset.pattern.permute.xlu0 0
      %1511 = vperm.xlu0 %1510, %v1365
      %v1512 = vpop.permute.xlu0 %1511
      %1515 = vset.pattern.permute.xlu0 0
      %1516 = vperm.xlu0 %1515, %v1366
      %v1517 = vpop.permute.xlu0 %1516
      %1520 = vset.pattern.permute.xlu0 0
      %1521 = vperm.xlu0 %1520, %v1367
      %v1522 = vpop.permute.xlu0 %1521
      %1525 = vset.pattern.permute.xlu0 0
      %1526 = vperm.xlu0 %1525, %v1368
      %v1527 = vpop.permute.xlu0 %1526
      %1530 = vset.pattern.permute.xlu0 0
      %1531 = vperm.xlu0 %1530, %v1369
      %v1532 = vpop.permute.xlu0 %1531
      %1535 = vset.pattern.permute.xlu0 0
      %1536 = vperm.xlu0 %1535, %v1370
      %v1537 = vpop.permute.xlu0 %1536
      %1540 = vset.pattern.permute.xlu0 0
      %1541 = vperm.xlu0 %1540, %v1371
      %v1542 = vpop.permute.xlu0 %1541
      %1545 = vset.pattern.permute.xlu0 0
      %1546 = vperm.xlu0 %1545, %v1372
      %v1547 = vpop.permute.xlu0 %1546
      %1550 = vset.pattern.permute.xlu0 0
      %1551 = vperm.xlu0 %1550, %v1373
      %v1552 = vpop.permute.xlu0 %1551
      %1555 = vset.pattern.permute.xlu0 0
      %1556 = vperm.xlu0 %1555, %v1374
      %v1557 = vpop.permute.xlu0 %1556
      %1560 = vset.pattern.permute.xlu0 0
      %1561 = vperm.xlu0 %1560, %v1375
      %v1562 = vpop.permute.xlu0 %1561
      %1565 = vset.pattern.permute.xlu0 0
      %1566 = vperm.xlu0 %1565, %v1376
      %v1567 = vpop.permute.xlu0 %1566
      %1570 = vset.pattern.permute.xlu0 0
      %1571 = vperm.xlu0 %1570, %v1377
      %v1572 = vpop.permute.xlu0 %1571
      %1575 = vset.pattern.permute.xlu0 0
      %1576 = vperm.xlu0 %1575, %v1378
      %v1577 = vpop.permute.xlu0 %1576
      %1580 = vset.pattern.permute.xlu0 0
      %1581 = vperm.xlu0 %1580, %v1379
      %v1582 = vpop.permute.xlu0 %1581
      %1585 = vset.pattern.permute.xlu0 0
      %1586 = vperm.xlu0 %1585, %v1380
      %v1587 = vpop.permute.xlu0 %1586
      %1590 = vset.pattern.permute.xlu0 0
      %1591 = vperm.xlu0 %1590, %v1381
      %v1592 = vpop.permute.xlu0 %1591
      %1595 = vset.pattern.permute.xlu0 0
      %1596 = vperm.xlu0 %1595, %v1382
      %v1597 = vpop.permute.xlu0 %1596
      %1600 = vset.pattern.permute.xlu0 0
      %1601 = vperm.xlu0 %1600, %v1383
      %v1602 = vpop.permute.xlu0 %1601
      %1605 = vset.pattern.permute.xlu0 0
      %1606 = vperm.xlu0 %1605, %v1384
      %v1607 = vpop.permute.xlu0 %1606
      %1610 = vset.pattern.permute.xlu0 0
      %1611 = vperm.xlu0 %1610, %v1385
      %v1612 = vpop.permute.xlu0 %1611
      %1615 = vset.pattern.permute.xlu0 0
      %1616 = vperm.xlu0 %1615, %v1386
      %v1617 = vpop.permute.xlu0 %1616
      %1620 = vset.pattern.permute.xlu0 0
      %1621 = vperm.xlu0 %1620, %v1387
      %v1622 = vpop.permute.xlu0 %1621
      %1625 = vset.pattern.permute.xlu0 0
      %1626 = vperm.xlu0 %1625, %v1388
      %v1627 = vpop.permute.xlu0 %1626
      %1630 = vset.pattern.permute.xlu0 0
      %1631 = vperm.xlu0 %1630, %v1389
      %v1632 = vpop.permute.xlu0 %1631
      %1635 = vset.pattern.permute.xlu0 0
      %1636 = vperm.xlu0 %1635, %v1390
      %v1637 = vpop.permute.xlu0 %1636
      %1640 = vset.pattern.permute.xlu0 0
      %1641 = vperm.xlu0 %1640, %v1391
      %v1642 = vpop.permute.xlu0 %1641
      %1645 = vset.pattern.permute.xlu0 0
      %1646 = vperm.xlu0 %1645, %v1392
      %v1647 = vpop.permute.xlu0 %1646
      %1650 = vset.pattern.permute.xlu0 0
      %1651 = vperm.xlu0 %1650, %v1393
      %v1652 = vpop.permute.xlu0 %1651
      %1655 = vset.pattern.permute.xlu0 0
      %1656 = vperm.xlu0 %1655, %v1394
      %v1657 = vpop.permute.xlu0 %1656
      %1660 = vset.pattern.permute.xlu0 0
      %1661 = vperm.xlu0 %1660, %v1395
      %v1662 = vpop.permute.xlu0 %1661
      %1665 = vset.pattern.permute.xlu0 0
      %1666 = vperm.xlu0 %1665, %v1396
      %v1667 = vpop.permute.xlu0 %1666
      %1670 = vset.pattern.permute.xlu0 0
      %1671 = vperm.xlu0 %1670, %v1397
      %v1672 = vpop.permute.xlu0 %1671
      %1675 = vset.pattern.permute.xlu0 0
      %1676 = vperm.xlu0 %1675, %v1398
      %v1677 = vpop.permute.xlu0 %1676
      %1680 = vset.pattern.permute.xlu0 0
      %1681 = vperm.xlu0 %1680, %v1399
      %v1682 = vpop.permute.xlu0 %1681
      %1685 = vset.pattern.permute.xlu0 0
      %1686 = vperm.xlu0 %1685, %v1400
      %v1687 = vpop.permute.xlu0 %1686
      %1690 = vset.pattern.permute.xlu0 0
      %1691 = vperm.xlu0 %1690, %v1401
      %v1692 = vpop.permute.xlu0 %1691
      %1695 = vset.pattern.permute.xlu0 0
      %1696 = vperm.xlu0 %1695, %v1402
      %v1697 = vpop.permute.xlu0 %1696
      %1700 = vset.pattern.permute.xlu0 0
      %1701 = vperm.xlu0 %1700, %v1403
      %v1702 = vpop.permute.xlu0 %1701
      %1705 = vset.pattern.permute.xlu0 0
      %1706 = vperm.xlu0 %1705, %v1404
      %v1707 = vpop.permute.xlu0 %1706
      %1710 = vset.pattern.permute.xlu0 0
      %1711 = vperm.xlu0 %1710, %v1405
      %v1712 = vpop.permute.xlu0 %1711
      %1715 = vset.pattern.permute.xlu0 0
      %1716 = vperm.xlu0 %1715, %v1406
      %v1717 = vpop.permute.xlu0 %1716
      %1720 = vset.pattern.permute.xlu0 0
      %1721 = vperm.xlu0 %1720, %v1407
      %v1722 = vpop.permute.xlu0 %1721
      %1725 = vset.pattern.permute.xlu0 0
      %1726 = vperm.xlu0 %1725, %v1408
      %v1727 = vpop.permute.xlu0 %1726
      %v1793 = vunpack.c.l.b16 %v1273
      %v1794 = vunpack.c.l.b16 %v1274
      %v1795 = vunpack.c.l.b16 %v1275
      %v1796 = vunpack.c.l.b16 %v1276
      %v1797 = vunpack.c.l.b16 %v1277
      %v1798 = vunpack.c.l.b16 %v1278
      %v1799 = vunpack.c.l.b16 %v1279
      %v1800 = vunpack.c.l.b16 %v1280
      %v1801 = vunpack.c.l.b16 %v1281
      %v1802 = vunpack.c.l.b16 %v1282
      %v1803 = vunpack.c.l.b16 %v1283
      %v1804 = vunpack.c.l.b16 %v1284
      %v1805 = vunpack.c.l.b16 %v1285
      %v1806 = vunpack.c.l.b16 %v1286
      %v1807 = vunpack.c.l.b16 %v1287
      %v1808 = vunpack.c.l.b16 %v1288
      %v1809 = vunpack.c.l.b16 %v1289
      %v1810 = vunpack.c.l.b16 %v1290
      %v1811 = vunpack.c.l.b16 %v1291
      %v1812 = vunpack.c.l.b16 %v1292
      %v1813 = vunpack.c.l.b16 %v1293
      %v1814 = vunpack.c.l.b16 %v1294
      %v1815 = vunpack.c.l.b16 %v1295
      %v1816 = vunpack.c.l.b16 %v1296
      %v1817 = vunpack.c.l.b16 %v1297
      %v1818 = vunpack.c.l.b16 %v1298
      %v1819 = vunpack.c.l.b16 %v1299
      %v1820 = vunpack.c.l.b16 %v1300
      %v1821 = vunpack.c.l.b16 %v1301
      %v1822 = vunpack.c.l.b16 %v1302
      %v1823 = vunpack.c.l.b16 %v1303
      %v1824 = vunpack.c.l.b16 %v1304
      %v1825 = vunpack.c.l.b16 %v1305
      %v1826 = vunpack.c.l.b16 %v1306
      %v1827 = vunpack.c.l.b16 %v1307
      %v1828 = vunpack.c.l.b16 %v1308
      %v1829 = vunpack.c.l.b16 %v1309
      %v1830 = vunpack.c.l.b16 %v1310
      %v1831 = vunpack.c.l.b16 %v1311
      %v1832 = vunpack.c.l.b16 %v1312
      %v1833 = vunpack.c.l.b16 %v1313
      %v1834 = vunpack.c.l.b16 %v1314
      %v1835 = vunpack.c.l.b16 %v1315
      %v1836 = vunpack.c.l.b16 %v1316
      %v1837 = vunpack.c.l.b16 %v1317
      %v1838 = vunpack.c.l.b16 %v1318
      %v1839 = vunpack.c.l.b16 %v1319
      %v1840 = vunpack.c.l.b16 %v1320
      %v1841 = vunpack.c.l.b16 %v1321
      %v1842 = vunpack.c.l.b16 %v1322
      %v1843 = vunpack.c.l.b16 %v1323
      %v1844 = vunpack.c.l.b16 %v1324
      %v1845 = vunpack.c.l.b16 %v1325
      %v1846 = vunpack.c.l.b16 %v1326
      %v1847 = vunpack.c.l.b16 %v1327
      %v1848 = vunpack.c.l.b16 %v1328
      %v1849 = vunpack.c.l.b16 %v1329
      %v1850 = vunpack.c.l.b16 %v1330
      %v1851 = vunpack.c.l.b16 %v1331
      %v1852 = vunpack.c.l.b16 %v1332
      %v1853 = vunpack.c.l.b16 %v1333
      %v1854 = vunpack.c.l.b16 %v1334
      %v1855 = vunpack.c.l.b16 %v1335
      %v1856 = vunpack.c.l.b16 %v1336
      %v1857 = vpack.c.b16 %v1794, %v1793
      %v1858 = vpack.c.b16 %v1796, %v1795
      %v1859 = vpack.c.b16 %v1798, %v1797
      %v1860 = vpack.c.b16 %v1800, %v1799
      %v1861 = vpack.c.b16 %v1802, %v1801
      %v1862 = vpack.c.b16 %v1804, %v1803
      %v1863 = vpack.c.b16 %v1806, %v1805
      %v1864 = vpack.c.b16 %v1808, %v1807
      %v1865 = vpack.c.b16 %v1810, %v1809
      %v1866 = vpack.c.b16 %v1812, %v1811
      %v1867 = vpack.c.b16 %v1814, %v1813
      %v1868 = vpack.c.b16 %v1816, %v1815
      %v1869 = vpack.c.b16 %v1818, %v1817
      %v1870 = vpack.c.b16 %v1820, %v1819
      %v1871 = vpack.c.b16 %v1822, %v1821
      %v1872 = vpack.c.b16 %v1824, %v1823
      %v1873 = vpack.c.b16 %v1826, %v1825
      %v1874 = vpack.c.b16 %v1828, %v1827
      %v1875 = vpack.c.b16 %v1830, %v1829
      %v1876 = vpack.c.b16 %v1832, %v1831
      %v1877 = vpack.c.b16 %v1834, %v1833
      %v1878 = vpack.c.b16 %v1836, %v1835
      %v1879 = vpack.c.b16 %v1838, %v1837
      %v1880 = vpack.c.b16 %v1840, %v1839
      %v1881 = vpack.c.b16 %v1842, %v1841
      %v1882 = vpack.c.b16 %v1844, %v1843
      %v1883 = vpack.c.b16 %v1846, %v1845
      %v1884 = vpack.c.b16 %v1848, %v1847
      %v1885 = vpack.c.b16 %v1850, %v1849
      %v1886 = vpack.c.b16 %v1852, %v1851
      %v1887 = vpack.c.b16 %v1854, %v1853
      %v1888 = vpack.c.b16 %v1856, %v1855
      %v1890 = vsel %vm1081, %v1857, 0
      %v1893 = vsel %vm1081, %v1858, 0
      %v1896 = vsel %vm1081, %v1859, 0
      %v1899 = vsel %vm1081, %v1860, 0
      %v1902 = vsel %vm1081, %v1861, 0
      %v1905 = vsel %vm1081, %v1862, 0
      %v1908 = vsel %vm1081, %v1863, 0
      %v1911 = vsel %vm1081, %v1864, 0
      %v1914 = vsel %vm1081, %v1865, 0
      %v1917 = vsel %vm1081, %v1866, 0
      %v1920 = vsel %vm1081, %v1867, 0
      %v1923 = vsel %vm1081, %v1868, 0
      %v1926 = vsel %vm1081, %v1869, 0
      %v1929 = vsel %vm1081, %v1870, 0
      %v1932 = vsel %vm1081, %v1871, 0
      %v1935 = vsel %vm1081, %v1872, 0
      %v1938 = vsel %vm1081, %v1873, 0
      %v1941 = vsel %vm1081, %v1874, 0
      %v1944 = vsel %vm1081, %v1875, 0
      %v1947 = vsel %vm1081, %v1876, 0
      %v1950 = vsel %vm1081, %v1877, 0
      %v1953 = vsel %vm1081, %v1878, 0
      %v1956 = vsel %vm1081, %v1879, 0
      %v1959 = vsel %vm1081, %v1880, 0
      %v1962 = vsel %vm1081, %v1881, 0
      %v1965 = vsel %vm1081, %v1882, 0
      %v1968 = vsel %vm1081, %v1883, 0
      %v1971 = vsel %vm1081, %v1884, 0
      %v1974 = vsel %vm1081, %v1885, 0
      %v1977 = vsel %vm1081, %v1886, 0
      %v1980 = vsel %vm1081, %v1887, 0
      %v1983 = vsel %vm1081, %v1888, 0
      %1985 = vmatprep.subr.bf16.mxu0 0
      %1986 = vmatpush1.bf16.msra.mxu0 0
      %1987 = vmatprep.subr.bf16.mxu0 0
      %1988 = vmatpush1.bf16.msra.mxu0 0
      %1989 = vmatprep.subr.bf16.mxu0 0
      %1990 = vmatpush1.bf16.msra.mxu0 0
      %1991 = vmatprep.subr.bf16.mxu0 0
      %1992 = vmatpush1.bf16.msra.mxu0 0
      %1993 = vmatprep.subr.bf16.mxu0 0
      %1994 = vmatpush1.bf16.msra.mxu0 0
      %1995 = vmatprep.subr.bf16.mxu0 0
      %1996 = vmatpush1.bf16.msra.mxu0 0
      %1997 = vmatprep.subr.bf16.mxu0 0
      %1998 = vmatpush1.bf16.msra.mxu0 0
      %1999 = vmatprep.subr.bf16.mxu0 %v1338
      %2000 = vmatpush1.bf16.msra.mxu0 %v1337
      %2001 = vmatprep.subr.bf16.mxu0 0
      %2002 = vmatpush2.bf16.msra.mxu0 0
      %2003 = vmatprep.subr.bf16.mxu0 0
      %2004 = vmatpush2.bf16.msra.mxu0 0
      %2005 = vmatprep.subr.bf16.mxu0 0
      %2006 = vmatpush2.bf16.msra.mxu0 0
      %2007 = vmatprep.subr.bf16.mxu0 0
      %2008 = vmatpush2.bf16.msra.mxu0 0
      %2009 = vmatprep.subr.bf16.mxu0 0
      %2010 = vmatpush2.bf16.msra.mxu0 0
      %2011 = vmatprep.subr.bf16.mxu0 0
      %2012 = vmatpush2.bf16.msra.mxu0 0
      %2013 = vmatprep.subr.bf16.mxu0 0
      %2014 = vmatpush2.bf16.msra.mxu0 0
      %2015 = vmatprep.subr.bf16.mxu0 0
      %2016 = vmatpush2.bf16.msra.mxu0 0
      %2017 = vmatprep.mubr.bf16.mxu0 0
      %2018 = vmatmul.mubr.bf16.gmra.mxu0 %v1890
      %v2019 = vpop.f32.mrf.mxu0
      %v2020 = vadd.f32 %v1412, %v2019
      %v2021 = vpop.f32.mrf.mxu0
      %v2022 = vadd.f32 %v1412, %v2021
      %v2023 = vpop.f32.mrf.mxu0
      %v2024 = vadd.f32 %v1417, %v2023
      %v2025 = vpop.f32.mrf.mxu0
      %v2026 = vadd.f32 %v1417, %v2025
      %2027 = vmatprep.mubr.bf16.mxu0 0
      %2028 = vmatmul.mubr.bf16.gmra.mxu0 %v1893
      %v2029 = vpop.f32.mrf.mxu0
      %v2030 = vadd.f32 %v1422, %v2029
      %v2031 = vpop.f32.mrf.mxu0
      %v2032 = vadd.f32 %v1422, %v2031
      %v2033 = vpop.f32.mrf.mxu0
      %v2034 = vadd.f32 %v1427, %v2033
      %v2035 = vpop.f32.mrf.mxu0
      %v2036 = vadd.f32 %v1427, %v2035
      %2037 = vmatprep.mubr.bf16.mxu0 0
      %2038 = vmatmul.mubr.bf16.gmra.mxu0 %v1896
      %v2039 = vpop.f32.mrf.mxu0
      %v2040 = vadd.f32 %v1432, %v2039
      %v2041 = vpop.f32.mrf.mxu0
      %v2042 = vadd.f32 %v1432, %v2041
      %v2043 = vpop.f32.mrf.mxu0
      %v2044 = vadd.f32 %v1437, %v2043
      %v2045 = vpop.f32.mrf.mxu0
      %v2046 = vadd.f32 %v1437, %v2045
      %2047 = vmatprep.mubr.bf16.mxu0 0
      %2048 = vmatmul.mubr.bf16.gmra.mxu0 %v1899
      %v2049 = vpop.f32.mrf.mxu0
      %v2050 = vadd.f32 %v1442, %v2049
      %v2051 = vpop.f32.mrf.mxu0
      %v2052 = vadd.f32 %v1442, %v2051
      %v2053 = vpop.f32.mrf.mxu0
      %v2054 = vadd.f32 %v1447, %v2053
      %v2055 = vpop.f32.mrf.mxu0
      %v2056 = vadd.f32 %v1447, %v2055
      %2057 = vmatprep.mubr.bf16.mxu0 0
      %2058 = vmatmul.mubr.bf16.gmra.mxu0 %v1902
      %v2059 = vpop.f32.mrf.mxu0
      %v2060 = vadd.f32 %v1452, %v2059
      %v2061 = vpop.f32.mrf.mxu0
      %v2062 = vadd.f32 %v1452, %v2061
      %v2063 = vpop.f32.mrf.mxu0
      %v2064 = vadd.f32 %v1457, %v2063
      %v2065 = vpop.f32.mrf.mxu0
      %v2066 = vadd.f32 %v1457, %v2065
      %2067 = vmatprep.mubr.bf16.mxu0 0
      %2068 = vmatmul.mubr.bf16.gmra.mxu0 %v1905
      %v2069 = vpop.f32.mrf.mxu0
      %v2070 = vadd.f32 %v1462, %v2069
      %v2071 = vpop.f32.mrf.mxu0
      %v2072 = vadd.f32 %v1462, %v2071
      %v2073 = vpop.f32.mrf.mxu0
      %v2074 = vadd.f32 %v1467, %v2073
      %v2075 = vpop.f32.mrf.mxu0
      %v2076 = vadd.f32 %v1467, %v2075
      %2077 = vmatprep.mubr.bf16.mxu0 0
      %2078 = vmatmul.mubr.bf16.gmra.mxu0 %v1908
      %v2079 = vpop.f32.mrf.mxu0
      %v2080 = vadd.f32 %v1472, %v2079
      %v2081 = vpop.f32.mrf.mxu0
      %v2082 = vadd.f32 %v1472, %v2081
      %v2083 = vpop.f32.mrf.mxu0
      %v2084 = vadd.f32 %v1477, %v2083
      %v2085 = vpop.f32.mrf.mxu0
      %v2086 = vadd.f32 %v1477, %v2085
      %2087 = vmatprep.mubr.bf16.mxu0 0
      %2088 = vmatmul.mubr.bf16.gmra.mxu0 %v1911
      %v2089 = vpop.f32.mrf.mxu0
      %v2090 = vadd.f32 %v1482, %v2089
      %v2091 = vpop.f32.mrf.mxu0
      %v2092 = vadd.f32 %v1482, %v2091
      %v2093 = vpop.f32.mrf.mxu0
      %v2094 = vadd.f32 %v1487, %v2093
      %v2095 = vpop.f32.mrf.mxu0
      %v2096 = vadd.f32 %v1487, %v2095
      %2097 = vmatprep.mubr.bf16.mxu0 0
      %2098 = vmatmul.mubr.bf16.gmra.mxu0 %v1914
      %v2099 = vpop.f32.mrf.mxu0
      %v2100 = vadd.f32 %v1492, %v2099
      %v2101 = vpop.f32.mrf.mxu0
      %v2102 = vadd.f32 %v1492, %v2101
      %v2103 = vpop.f32.mrf.mxu0
      %v2104 = vadd.f32 %v1497, %v2103
      %v2105 = vpop.f32.mrf.mxu0
      %v2106 = vadd.f32 %v1497, %v2105
      %2107 = vmatprep.mubr.bf16.mxu0 0
      %2108 = vmatmul.mubr.bf16.gmra.mxu0 %v1917
      %v2109 = vpop.f32.mrf.mxu0
      %v2110 = vadd.f32 %v1502, %v2109
      %v2111 = vpop.f32.mrf.mxu0
      %v2112 = vadd.f32 %v1502, %v2111
      %v2113 = vpop.f32.mrf.mxu0
      %v2114 = vadd.f32 %v1507, %v2113
      %v2115 = vpop.f32.mrf.mxu0
      %v2116 = vadd.f32 %v1507, %v2115
      %2117 = vmatprep.mubr.bf16.mxu0 0
      %2118 = vmatmul.mubr.bf16.gmra.mxu0 %v1920
      %v2119 = vpop.f32.mrf.mxu0
      %v2120 = vadd.f32 %v1512, %v2119
      %v2121 = vpop.f32.mrf.mxu0
      %v2122 = vadd.f32 %v1512, %v2121
      %v2123 = vpop.f32.mrf.mxu0
      %v2124 = vadd.f32 %v1517, %v2123
      %v2125 = vpop.f32.mrf.mxu0
      %v2126 = vadd.f32 %v1517, %v2125
      %2127 = vmatprep.mubr.bf16.mxu0 0
      %2128 = vmatmul.mubr.bf16.gmra.mxu0 %v1923
      %v2129 = vpop.f32.mrf.mxu0
      %v2130 = vadd.f32 %v1522, %v2129
      %v2131 = vpop.f32.mrf.mxu0
      %v2132 = vadd.f32 %v1522, %v2131
      %v2133 = vpop.f32.mrf.mxu0
      %v2134 = vadd.f32 %v1527, %v2133
      %v2135 = vpop.f32.mrf.mxu0
      %v2136 = vadd.f32 %v1527, %v2135
      %2137 = vmatprep.mubr.bf16.mxu0 0
      %2138 = vmatmul.mubr.bf16.gmra.mxu0 %v1926
      %v2139 = vpop.f32.mrf.mxu0
      %v2140 = vadd.f32 %v1532, %v2139
      %v2141 = vpop.f32.mrf.mxu0
      %v2142 = vadd.f32 %v1532, %v2141
      %v2143 = vpop.f32.mrf.mxu0
      %v2144 = vadd.f32 %v1537, %v2143
      %v2145 = vpop.f32.mrf.mxu0
      %v2146 = vadd.f32 %v1537, %v2145
      %2147 = vmatprep.mubr.bf16.mxu0 0
      %2148 = vmatmul.mubr.bf16.gmra.mxu0 %v1929
      %v2149 = vpop.f32.mrf.mxu0
      %v2150 = vadd.f32 %v1542, %v2149
      %v2151 = vpop.f32.mrf.mxu0
      %v2152 = vadd.f32 %v1542, %v2151
      %v2153 = vpop.f32.mrf.mxu0
      %v2154 = vadd.f32 %v1547, %v2153
      %v2155 = vpop.f32.mrf.mxu0
      %v2156 = vadd.f32 %v1547, %v2155
      %2157 = vmatprep.mubr.bf16.mxu0 0
      %2158 = vmatmul.mubr.bf16.gmra.mxu0 %v1932
      %v2159 = vpop.f32.mrf.mxu0
      %v2160 = vadd.f32 %v1552, %v2159
      %v2161 = vpop.f32.mrf.mxu0
      %v2162 = vadd.f32 %v1552, %v2161
      %v2163 = vpop.f32.mrf.mxu0
      %v2164 = vadd.f32 %v1557, %v2163
      %v2165 = vpop.f32.mrf.mxu0
      %v2166 = vadd.f32 %v1557, %v2165
      %2167 = vmatprep.mubr.bf16.mxu0 0
      %2168 = vmatmul.mubr.bf16.gmra.mxu0 %v1935
      %v2169 = vpop.f32.mrf.mxu0
      %v2170 = vadd.f32 %v1562, %v2169
      %v2171 = vpop.f32.mrf.mxu0
      %v2172 = vadd.f32 %v1562, %v2171
      %v2173 = vpop.f32.mrf.mxu0
      %v2174 = vadd.f32 %v1567, %v2173
      %v2175 = vpop.f32.mrf.mxu0
      %v2176 = vadd.f32 %v1567, %v2175
      %2177 = vmatprep.mubr.bf16.mxu0 0
      %2178 = vmatmul.mubr.bf16.gmra.mxu0 %v1938
      %v2179 = vpop.f32.mrf.mxu0
      %v2180 = vadd.f32 %v1572, %v2179
      %v2181 = vpop.f32.mrf.mxu0
      %v2182 = vadd.f32 %v1572, %v2181
      %v2183 = vpop.f32.mrf.mxu0
      %v2184 = vadd.f32 %v1577, %v2183
      %v2185 = vpop.f32.mrf.mxu0
      %v2186 = vadd.f32 %v1577, %v2185
      %2187 = vmatprep.mubr.bf16.mxu0 0
      %2188 = vmatmul.mubr.bf16.gmra.mxu0 %v1941
      %v2189 = vpop.f32.mrf.mxu0
      %v2190 = vadd.f32 %v1582, %v2189
      %v2191 = vpop.f32.mrf.mxu0
      %v2192 = vadd.f32 %v1582, %v2191
      %v2193 = vpop.f32.mrf.mxu0
      %v2194 = vadd.f32 %v1587, %v2193
      %v2195 = vpop.f32.mrf.mxu0
      %v2196 = vadd.f32 %v1587, %v2195
      %2197 = vmatprep.mubr.bf16.mxu0 0
      %2198 = vmatmul.mubr.bf16.gmra.mxu0 %v1944
      %v2199 = vpop.f32.mrf.mxu0
      %v2200 = vadd.f32 %v1592, %v2199
      %v2201 = vpop.f32.mrf.mxu0
      %v2202 = vadd.f32 %v1592, %v2201
      %v2203 = vpop.f32.mrf.mxu0
      %v2204 = vadd.f32 %v1597, %v2203
      %v2205 = vpop.f32.mrf.mxu0
      %v2206 = vadd.f32 %v1597, %v2205
      %2207 = vmatprep.mubr.bf16.mxu0 0
      %2208 = vmatmul.mubr.bf16.gmra.mxu0 %v1947
      %v2209 = vpop.f32.mrf.mxu0
      %v2210 = vadd.f32 %v1602, %v2209
      %v2211 = vpop.f32.mrf.mxu0
      %v2212 = vadd.f32 %v1602, %v2211
      %v2213 = vpop.f32.mrf.mxu0
      %v2214 = vadd.f32 %v1607, %v2213
      %v2215 = vpop.f32.mrf.mxu0
      %v2216 = vadd.f32 %v1607, %v2215
      %2217 = vmatprep.mubr.bf16.mxu0 0
      %2218 = vmatmul.mubr.bf16.gmra.mxu0 %v1950
      %v2219 = vpop.f32.mrf.mxu0
      %v2220 = vadd.f32 %v1612, %v2219
      %v2221 = vpop.f32.mrf.mxu0
      %v2222 = vadd.f32 %v1612, %v2221
      %v2223 = vpop.f32.mrf.mxu0
      %v2224 = vadd.f32 %v1617, %v2223
      %v2225 = vpop.f32.mrf.mxu0
      %v2226 = vadd.f32 %v1617, %v2225
      %2227 = vmatprep.mubr.bf16.mxu0 0
      %2228 = vmatmul.mubr.bf16.gmra.mxu0 %v1953
      %v2229 = vpop.f32.mrf.mxu0
      %v2230 = vadd.f32 %v1622, %v2229
      %v2231 = vpop.f32.mrf.mxu0
      %v2232 = vadd.f32 %v1622, %v2231
      %v2233 = vpop.f32.mrf.mxu0
      %v2234 = vadd.f32 %v1627, %v2233
      %v2235 = vpop.f32.mrf.mxu0
      %v2236 = vadd.f32 %v1627, %v2235
      %2237 = vmatprep.mubr.bf16.mxu0 0
      %2238 = vmatmul.mubr.bf16.gmra.mxu0 %v1956
      %v2239 = vpop.f32.mrf.mxu0
      %v2240 = vadd.f32 %v1632, %v2239
      %v2241 = vpop.f32.mrf.mxu0
      %v2242 = vadd.f32 %v1632, %v2241
      %v2243 = vpop.f32.mrf.mxu0
      %v2244 = vadd.f32 %v1637, %v2243
      %v2245 = vpop.f32.mrf.mxu0
      %v2246 = vadd.f32 %v1637, %v2245
      %2247 = vmatprep.mubr.bf16.mxu0 0
      %2248 = vmatmul.mubr.bf16.gmra.mxu0 %v1959
      %v2249 = vpop.f32.mrf.mxu0
      %v2250 = vadd.f32 %v1642, %v2249
      %v2251 = vpop.f32.mrf.mxu0
      %v2252 = vadd.f32 %v1642, %v2251
      %v2253 = vpop.f32.mrf.mxu0
      %v2254 = vadd.f32 %v1647, %v2253
      %v2255 = vpop.f32.mrf.mxu0
      %v2256 = vadd.f32 %v1647, %v2255
      %2257 = vmatprep.mubr.bf16.mxu0 0
      %2258 = vmatmul.mubr.bf16.gmra.mxu0 %v1962
      %v2259 = vpop.f32.mrf.mxu0
      %v2260 = vadd.f32 %v1652, %v2259
      %v2261 = vpop.f32.mrf.mxu0
      %v2262 = vadd.f32 %v1652, %v2261
      %v2263 = vpop.f32.mrf.mxu0
      %v2264 = vadd.f32 %v1657, %v2263
      %v2265 = vpop.f32.mrf.mxu0
      %v2266 = vadd.f32 %v1657, %v2265
      %2267 = vmatprep.mubr.bf16.mxu0 0
      %2268 = vmatmul.mubr.bf16.gmra.mxu0 %v1965
      %v2269 = vpop.f32.mrf.mxu0
      %v2270 = vadd.f32 %v1662, %v2269
      %v2271 = vpop.f32.mrf.mxu0
      %v2272 = vadd.f32 %v1662, %v2271
      %v2273 = vpop.f32.mrf.mxu0
      %v2274 = vadd.f32 %v1667, %v2273
      %v2275 = vpop.f32.mrf.mxu0
      %v2276 = vadd.f32 %v1667, %v2275
      %2277 = vmatprep.mubr.bf16.mxu0 0
      %2278 = vmatmul.mubr.bf16.gmra.mxu0 %v1968
      %v2279 = vpop.f32.mrf.mxu0
      %v2280 = vadd.f32 %v1672, %v2279
      %v2281 = vpop.f32.mrf.mxu0
      %v2282 = vadd.f32 %v1672, %v2281
      %v2283 = vpop.f32.mrf.mxu0
      %v2284 = vadd.f32 %v1677, %v2283
      %v2285 = vpop.f32.mrf.mxu0
      %v2286 = vadd.f32 %v1677, %v2285
      %2287 = vmatprep.mubr.bf16.mxu0 0
      %2288 = vmatmul.mubr.bf16.gmra.mxu0 %v1971
      %v2289 = vpop.f32.mrf.mxu0
      %v2290 = vadd.f32 %v1682, %v2289
      %v2291 = vpop.f32.mrf.mxu0
      %v2292 = vadd.f32 %v1682, %v2291
      %v2293 = vpop.f32.mrf.mxu0
      %v2294 = vadd.f32 %v1687, %v2293
      %v2295 = vpop.f32.mrf.mxu0
      %v2296 = vadd.f32 %v1687, %v2295
      %2297 = vmatprep.mubr.bf16.mxu0 0
      %2298 = vmatmul.mubr.bf16.gmra.mxu0 %v1974
      %v2299 = vpop.f32.mrf.mxu0
      %v2300 = vadd.f32 %v1692, %v2299
      %v2301 = vpop.f32.mrf.mxu0
      %v2302 = vadd.f32 %v1692, %v2301
      %v2303 = vpop.f32.mrf.mxu0
      %v2304 = vadd.f32 %v1697, %v2303
      %v2305 = vpop.f32.mrf.mxu0
      %v2306 = vadd.f32 %v1697, %v2305
      %2307 = vmatprep.mubr.bf16.mxu0 0
      %2308 = vmatmul.mubr.bf16.gmra.mxu0 %v1977
      %v2309 = vpop.f32.mrf.mxu0
      %v2310 = vadd.f32 %v1702, %v2309
      %v2311 = vpop.f32.mrf.mxu0
      %v2312 = vadd.f32 %v1702, %v2311
      %v2313 = vpop.f32.mrf.mxu0
      %v2314 = vadd.f32 %v1707, %v2313
      %v2315 = vpop.f32.mrf.mxu0
      %v2316 = vadd.f32 %v1707, %v2315
      %2317 = vmatprep.mubr.bf16.mxu0 0
      %2318 = vmatmul.mubr.bf16.gmra.mxu0 %v1980
      %v2319 = vpop.f32.mrf.mxu0
      %v2320 = vadd.f32 %v1712, %v2319
      %v2321 = vpop.f32.mrf.mxu0
      %v2322 = vadd.f32 %v1712, %v2321
      %v2323 = vpop.f32.mrf.mxu0
      %v2324 = vadd.f32 %v1717, %v2323
      %v2325 = vpop.f32.mrf.mxu0
      %v2326 = vadd.f32 %v1717, %v2325
      %2327 = vmatprep.mubr.bf16.mxu0 0
      %2328 = vmatmul.mubr.bf16.gmra.mxu0 %v1983
      %v2329 = vpop.f32.mrf.mxu0
      %v2330 = vadd.f32 %v1722, %v2329
      %v2331 = vpop.f32.mrf.mxu0
      %v2332 = vadd.f32 %v1722, %v2331
      %v2333 = vpop.f32.mrf.mxu0
      %v2334 = vadd.f32 %v1727, %v2333
      %v2335 = vpop.f32.mrf.mxu0
      %v2336 = vadd.f32 %v1727, %v2335
      %2337 = vdwg.mxu0
      %2338 = vmatprep.subr.bf16.mxu0 0
      %2339 = vmatpush1.bf16.msra.mxu0 0
      %2340 = vmatprep.subr.bf16.mxu0 0
      %2341 = vmatpush1.bf16.msra.mxu0 0
      %2342 = vmatprep.subr.bf16.mxu0 0
      %2343 = vmatpush1.bf16.msra.mxu0 0
      %2344 = vmatprep.subr.bf16.mxu0 0
      %2345 = vmatpush1.bf16.msra.mxu0 0
      %2346 = vmatprep.subr.bf16.mxu0 0
      %2347 = vmatpush1.bf16.msra.mxu0 0
      %2348 = vmatprep.subr.bf16.mxu0 0
      %2349 = vmatpush1.bf16.msra.mxu0 0
      %2350 = vmatprep.subr.bf16.mxu0 0
      %2351 = vmatpush1.bf16.msra.mxu0 0
      %2352 = vmatprep.subr.bf16.mxu0 %v1340
      %2353 = vmatpush1.bf16.msra.mxu0 %v1339
      %2354 = vmatprep.subr.bf16.mxu0 0
      %2355 = vmatpush2.bf16.msra.mxu0 0
      %2356 = vmatprep.subr.bf16.mxu0 0
      %2357 = vmatpush2.bf16.msra.mxu0 0
      %2358 = vmatprep.subr.bf16.mxu0 0
      %2359 = vmatpush2.bf16.msra.mxu0 0
      %2360 = vmatprep.subr.bf16.mxu0 0
      %2361 = vmatpush2.bf16.msra.mxu0 0
      %2362 = vmatprep.subr.bf16.mxu0 0
      %2363 = vmatpush2.bf16.msra.mxu0 0
      %2364 = vmatprep.subr.bf16.mxu0 0
      %2365 = vmatpush2.bf16.msra.mxu0 0
      %2366 = vmatprep.subr.bf16.mxu0 0
      %2367 = vmatpush2.bf16.msra.mxu0 0
      %2368 = vmatprep.subr.bf16.mxu0 0
      %2369 = vmatpush2.bf16.msra.mxu0 0
      %2370 = vmatprep.mubr.bf16.mxu0 0
      %2371 = vmatmul.mubr.bf16.gmra.mxu0 %v1890
      %v2372 = vpop.f32.mrf.mxu0
      %v2373 = vadd.f32 %v1412, %v2372
      %v2374 = vpop.f32.mrf.mxu0
      %v2375 = vadd.f32 %v1412, %v2374
      %v2376 = vpop.f32.mrf.mxu0
      %v2377 = vadd.f32 %v1417, %v2376
      %v2378 = vpop.f32.mrf.mxu0
      %v2379 = vadd.f32 %v1417, %v2378
      %2380 = vmatprep.mubr.bf16.mxu0 0
      %2381 = vmatmul.mubr.bf16.gmra.mxu0 %v1893
      %v2382 = vpop.f32.mrf.mxu0
      %v2383 = vadd.f32 %v1422, %v2382
      %v2384 = vpop.f32.mrf.mxu0
      %v2385 = vadd.f32 %v1422, %v2384
      %v2386 = vpop.f32.mrf.mxu0
      %v2387 = vadd.f32 %v1427, %v2386
      %v2388 = vpop.f32.mrf.mxu0
      %v2389 = vadd.f32 %v1427, %v2388
      %2390 = vmatprep.mubr.bf16.mxu0 0
      %2391 = vmatmul.mubr.bf16.gmra.mxu0 %v1896
      %v2392 = vpop.f32.mrf.mxu0
      %v2393 = vadd.f32 %v1432, %v2392
      %v2394 = vpop.f32.mrf.mxu0
      %v2395 = vadd.f32 %v1432, %v2394
      %v2396 = vpop.f32.mrf.mxu0
      %v2397 = vadd.f32 %v1437, %v2396
      %v2398 = vpop.f32.mrf.mxu0
      %v2399 = vadd.f32 %v1437, %v2398
      %2400 = vmatprep.mubr.bf16.mxu0 0
      %2401 = vmatmul.mubr.bf16.gmra.mxu0 %v1899
      %v2402 = vpop.f32.mrf.mxu0
      %v2403 = vadd.f32 %v1442, %v2402
      %v2404 = vpop.f32.mrf.mxu0
      %v2405 = vadd.f32 %v1442, %v2404
      %v2406 = vpop.f32.mrf.mxu0
      %v2407 = vadd.f32 %v1447, %v2406
      %v2408 = vpop.f32.mrf.mxu0
      %v2409 = vadd.f32 %v1447, %v2408
      %2410 = vmatprep.mubr.bf16.mxu0 0
      %2411 = vmatmul.mubr.bf16.gmra.mxu0 %v1902
      %v2412 = vpop.f32.mrf.mxu0
      %v2413 = vadd.f32 %v1452, %v2412
      %v2414 = vpop.f32.mrf.mxu0
      %v2415 = vadd.f32 %v1452, %v2414
      %v2416 = vpop.f32.mrf.mxu0
      %v2417 = vadd.f32 %v1457, %v2416
      %v2418 = vpop.f32.mrf.mxu0
      %v2419 = vadd.f32 %v1457, %v2418
      %2420 = vmatprep.mubr.bf16.mxu0 0
      %2421 = vmatmul.mubr.bf16.gmra.mxu0 %v1905
      %v2422 = vpop.f32.mrf.mxu0
      %v2423 = vadd.f32 %v1462, %v2422
      %v2424 = vpop.f32.mrf.mxu0
      %v2425 = vadd.f32 %v1462, %v2424
      %v2426 = vpop.f32.mrf.mxu0
      %v2427 = vadd.f32 %v1467, %v2426
      %v2428 = vpop.f32.mrf.mxu0
      %v2429 = vadd.f32 %v1467, %v2428
      %2430 = vmatprep.mubr.bf16.mxu0 0
      %2431 = vmatmul.mubr.bf16.gmra.mxu0 %v1908
      %v2432 = vpop.f32.mrf.mxu0
      %v2433 = vadd.f32 %v1472, %v2432
      %v2434 = vpop.f32.mrf.mxu0
      %v2435 = vadd.f32 %v1472, %v2434
      %v2436 = vpop.f32.mrf.mxu0
      %v2437 = vadd.f32 %v1477, %v2436
      %v2438 = vpop.f32.mrf.mxu0
      %v2439 = vadd.f32 %v1477, %v2438
      %2440 = vmatprep.mubr.bf16.mxu0 0
      %2441 = vmatmul.mubr.bf16.gmra.mxu0 %v1911
      %v2442 = vpop.f32.mrf.mxu0
      %v2443 = vadd.f32 %v1482, %v2442
      %v2444 = vpop.f32.mrf.mxu0
      %v2445 = vadd.f32 %v1482, %v2444
      %v2446 = vpop.f32.mrf.mxu0
      %v2447 = vadd.f32 %v1487, %v2446
      %v2448 = vpop.f32.mrf.mxu0
      %v2449 = vadd.f32 %v1487, %v2448
      %2450 = vmatprep.mubr.bf16.mxu0 0
      %2451 = vmatmul.mubr.bf16.gmra.mxu0 %v1914
      %v2452 = vpop.f32.mrf.mxu0
      %v2453 = vadd.f32 %v1492, %v2452
      %v2454 = vpop.f32.mrf.mxu0
      %v2455 = vadd.f32 %v1492, %v2454
      %v2456 = vpop.f32.mrf.mxu0
      %v2457 = vadd.f32 %v1497, %v2456
      %v2458 = vpop.f32.mrf.mxu0
      %v2459 = vadd.f32 %v1497, %v2458
      %2460 = vmatprep.mubr.bf16.mxu0 0
      %2461 = vmatmul.mubr.bf16.gmra.mxu0 %v1917
      %v2462 = vpop.f32.mrf.mxu0
      %v2463 = vadd.f32 %v1502, %v2462
      %v2464 = vpop.f32.mrf.mxu0
      %v2465 = vadd.f32 %v1502, %v2464
      %v2466 = vpop.f32.mrf.mxu0
      %v2467 = vadd.f32 %v1507, %v2466
      %v2468 = vpop.f32.mrf.mxu0
      %v2469 = vadd.f32 %v1507, %v2468
      %2470 = vmatprep.mubr.bf16.mxu0 0
      %2471 = vmatmul.mubr.bf16.gmra.mxu0 %v1920
      %v2472 = vpop.f32.mrf.mxu0
      %v2473 = vadd.f32 %v1512, %v2472
      %v2474 = vpop.f32.mrf.mxu0
      %v2475 = vadd.f32 %v1512, %v2474
      %v2476 = vpop.f32.mrf.mxu0
      %v2477 = vadd.f32 %v1517, %v2476
      %v2478 = vpop.f32.mrf.mxu0
      %v2479 = vadd.f32 %v1517, %v2478
      %2480 = vmatprep.mubr.bf16.mxu0 0
      %2481 = vmatmul.mubr.bf16.gmra.mxu0 %v1923
      %v2482 = vpop.f32.mrf.mxu0
      %v2483 = vadd.f32 %v1522, %v2482
      %v2484 = vpop.f32.mrf.mxu0
      %v2485 = vadd.f32 %v1522, %v2484
      %v2486 = vpop.f32.mrf.mxu0
      %v2487 = vadd.f32 %v1527, %v2486
      %v2488 = vpop.f32.mrf.mxu0
      %v2489 = vadd.f32 %v1527, %v2488
      %2490 = vmatprep.mubr.bf16.mxu0 0
      %2491 = vmatmul.mubr.bf16.gmra.mxu0 %v1926
      %v2492 = vpop.f32.mrf.mxu0
      %v2493 = vadd.f32 %v1532, %v2492
      %v2494 = vpop.f32.mrf.mxu0
      %v2495 = vadd.f32 %v1532, %v2494
      %v2496 = vpop.f32.mrf.mxu0
      %v2497 = vadd.f32 %v1537, %v2496
      %v2498 = vpop.f32.mrf.mxu0
      %v2499 = vadd.f32 %v1537, %v2498
      %2500 = vmatprep.mubr.bf16.mxu0 0
      %2501 = vmatmul.mubr.bf16.gmra.mxu0 %v1929
      %v2502 = vpop.f32.mrf.mxu0
      %v2503 = vadd.f32 %v1542, %v2502
      %v2504 = vpop.f32.mrf.mxu0
      %v2505 = vadd.f32 %v1542, %v2504
      %v2506 = vpop.f32.mrf.mxu0
      %v2507 = vadd.f32 %v1547, %v2506
      %v2508 = vpop.f32.mrf.mxu0
      %v2509 = vadd.f32 %v1547, %v2508
      %2510 = vmatprep.mubr.bf16.mxu0 0
      %2511 = vmatmul.mubr.bf16.gmra.mxu0 %v1932
      %v2512 = vpop.f32.mrf.mxu0
      %v2513 = vadd.f32 %v1552, %v2512
      %v2514 = vpop.f32.mrf.mxu0
      %v2515 = vadd.f32 %v1552, %v2514
      %v2516 = vpop.f32.mrf.mxu0
      %v2517 = vadd.f32 %v1557, %v2516
      %v2518 = vpop.f32.mrf.mxu0
      %v2519 = vadd.f32 %v1557, %v2518
      %2520 = vmatprep.mubr.bf16.mxu0 0
      %2521 = vmatmul.mubr.bf16.gmra.mxu0 %v1935
      %v2522 = vpop.f32.mrf.mxu0
      %v2523 = vadd.f32 %v1562, %v2522
      %v2524 = vpop.f32.mrf.mxu0
      %v2525 = vadd.f32 %v1562, %v2524
      %v2526 = vpop.f32.mrf.mxu0
      %v2527 = vadd.f32 %v1567, %v2526
      %v2528 = vpop.f32.mrf.mxu0
      %v2529 = vadd.f32 %v1567, %v2528
      %2530 = vmatprep.mubr.bf16.mxu0 0
      %2531 = vmatmul.mubr.bf16.gmra.mxu0 %v1938
      %v2532 = vpop.f32.mrf.mxu0
      %v2533 = vadd.f32 %v1572, %v2532
      %v2534 = vpop.f32.mrf.mxu0
      %v2535 = vadd.f32 %v1572, %v2534
      %v2536 = vpop.f32.mrf.mxu0
      %v2537 = vadd.f32 %v1577, %v2536
      %v2538 = vpop.f32.mrf.mxu0
      %v2539 = vadd.f32 %v1577, %v2538
      %2540 = vmatprep.mubr.bf16.mxu0 0
      %2541 = vmatmul.mubr.bf16.gmra.mxu0 %v1941
      %v2542 = vpop.f32.mrf.mxu0
      %v2543 = vadd.f32 %v1582, %v2542
      %v2544 = vpop.f32.mrf.mxu0
      %v2545 = vadd.f32 %v1582, %v2544
      %v2546 = vpop.f32.mrf.mxu0
      %v2547 = vadd.f32 %v1587, %v2546
      %v2548 = vpop.f32.mrf.mxu0
      %v2549 = vadd.f32 %v1587, %v2548
      %2550 = vmatprep.mubr.bf16.mxu0 0
      %2551 = vmatmul.mubr.bf16.gmra.mxu0 %v1944
      %v2552 = vpop.f32.mrf.mxu0
      %v2553 = vadd.f32 %v1592, %v2552
      %v2554 = vpop.f32.mrf.mxu0
      %v2555 = vadd.f32 %v1592, %v2554
      %v2556 = vpop.f32.mrf.mxu0
      %v2557 = vadd.f32 %v1597, %v2556
      %v2558 = vpop.f32.mrf.mxu0
      %v2559 = vadd.f32 %v1597, %v2558
      %2560 = vmatprep.mubr.bf16.mxu0 0
      %2561 = vmatmul.mubr.bf16.gmra.mxu0 %v1947
      %v2562 = vpop.f32.mrf.mxu0
      %v2563 = vadd.f32 %v1602, %v2562
      %v2564 = vpop.f32.mrf.mxu0
      %v2565 = vadd.f32 %v1602, %v2564
      %v2566 = vpop.f32.mrf.mxu0
      %v2567 = vadd.f32 %v1607, %v2566
      %v2568 = vpop.f32.mrf.mxu0
      %v2569 = vadd.f32 %v1607, %v2568
      %2570 = vmatprep.mubr.bf16.mxu0 0
      %2571 = vmatmul.mubr.bf16.gmra.mxu0 %v1950
      %v2572 = vpop.f32.mrf.mxu0
      %v2573 = vadd.f32 %v1612, %v2572
      %v2574 = vpop.f32.mrf.mxu0
      %v2575 = vadd.f32 %v1612, %v2574
      %v2576 = vpop.f32.mrf.mxu0
      %v2577 = vadd.f32 %v1617, %v2576
      %v2578 = vpop.f32.mrf.mxu0
      %v2579 = vadd.f32 %v1617, %v2578
      %2580 = vmatprep.mubr.bf16.mxu0 0
      %2581 = vmatmul.mubr.bf16.gmra.mxu0 %v1953
      %v2582 = vpop.f32.mrf.mxu0
      %v2583 = vadd.f32 %v1622, %v2582
      %v2584 = vpop.f32.mrf.mxu0
      %v2585 = vadd.f32 %v1622, %v2584
      %v2586 = vpop.f32.mrf.mxu0
      %v2587 = vadd.f32 %v1627, %v2586
      %v2588 = vpop.f32.mrf.mxu0
      %v2589 = vadd.f32 %v1627, %v2588
      %2590 = vmatprep.mubr.bf16.mxu0 0
      %2591 = vmatmul.mubr.bf16.gmra.mxu0 %v1956
      %v2592 = vpop.f32.mrf.mxu0
      %v2593 = vadd.f32 %v1632, %v2592
      %v2594 = vpop.f32.mrf.mxu0
      %v2595 = vadd.f32 %v1632, %v2594
      %v2596 = vpop.f32.mrf.mxu0
      %v2597 = vadd.f32 %v1637, %v2596
      %v2598 = vpop.f32.mrf.mxu0
      %v2599 = vadd.f32 %v1637, %v2598
      %2600 = vmatprep.mubr.bf16.mxu0 0
      %2601 = vmatmul.mubr.bf16.gmra.mxu0 %v1959
      %v2602 = vpop.f32.mrf.mxu0
      %v2603 = vadd.f32 %v1642, %v2602
      %v2604 = vpop.f32.mrf.mxu0
      %v2605 = vadd.f32 %v1642, %v2604
      %v2606 = vpop.f32.mrf.mxu0
      %v2607 = vadd.f32 %v1647, %v2606
      %v2608 = vpop.f32.mrf.mxu0
      %v2609 = vadd.f32 %v1647, %v2608
      %2610 = vmatprep.mubr.bf16.mxu0 0
      %2611 = vmatmul.mubr.bf16.gmra.mxu0 %v1962
      %v2612 = vpop.f32.mrf.mxu0
      %v2613 = vadd.f32 %v1652, %v2612
      %v2614 = vpop.f32.mrf.mxu0
      %v2615 = vadd.f32 %v1652, %v2614
      %v2616 = vpop.f32.mrf.mxu0
      %v2617 = vadd.f32 %v1657, %v2616
      %v2618 = vpop.f32.mrf.mxu0
      %v2619 = vadd.f32 %v1657, %v2618
      %2620 = vmatprep.mubr.bf16.mxu0 0
      %2621 = vmatmul.mubr.bf16.gmra.mxu0 %v1965
      %v2622 = vpop.f32.mrf.mxu0
      %v2623 = vadd.f32 %v1662, %v2622
      %v2624 = vpop.f32.mrf.mxu0
      %v2625 = vadd.f32 %v1662, %v2624
      %v2626 = vpop.f32.mrf.mxu0
      %v2627 = vadd.f32 %v1667, %v2626
      %v2628 = vpop.f32.mrf.mxu0
      %v2629 = vadd.f32 %v1667, %v2628
      %2630 = vmatprep.mubr.bf16.mxu0 0
      %2631 = vmatmul.mubr.bf16.gmra.mxu0 %v1968
      %v2632 = vpop.f32.mrf.mxu0
      %v2633 = vadd.f32 %v1672, %v2632
      %v2634 = vpop.f32.mrf.mxu0
      %v2635 = vadd.f32 %v1672, %v2634
      %v2636 = vpop.f32.mrf.mxu0
      %v2637 = vadd.f32 %v1677, %v2636
      %v2638 = vpop.f32.mrf.mxu0
      %v2639 = vadd.f32 %v1677, %v2638
      %2640 = vmatprep.mubr.bf16.mxu0 0
      %2641 = vmatmul.mubr.bf16.gmra.mxu0 %v1971
      %v2642 = vpop.f32.mrf.mxu0
      %v2643 = vadd.f32 %v1682, %v2642
      %v2644 = vpop.f32.mrf.mxu0
      %v2645 = vadd.f32 %v1682, %v2644
      %v2646 = vpop.f32.mrf.mxu0
      %v2647 = vadd.f32 %v1687, %v2646
      %v2648 = vpop.f32.mrf.mxu0
      %v2649 = vadd.f32 %v1687, %v2648
      %2650 = vmatprep.mubr.bf16.mxu0 0
      %2651 = vmatmul.mubr.bf16.gmra.mxu0 %v1974
      %v2652 = vpop.f32.mrf.mxu0
      %v2653 = vadd.f32 %v1692, %v2652
      %v2654 = vpop.f32.mrf.mxu0
      %v2655 = vadd.f32 %v1692, %v2654
      %v2656 = vpop.f32.mrf.mxu0
      %v2657 = vadd.f32 %v1697, %v2656
      %v2658 = vpop.f32.mrf.mxu0
      %v2659 = vadd.f32 %v1697, %v2658
      %2660 = vmatprep.mubr.bf16.mxu0 0
      %2661 = vmatmul.mubr.bf16.gmra.mxu0 %v1977
      %v2662 = vpop.f32.mrf.mxu0
      %v2663 = vadd.f32 %v1702, %v2662
      %v2664 = vpop.f32.mrf.mxu0
      %v2665 = vadd.f32 %v1702, %v2664
      %v2666 = vpop.f32.mrf.mxu0
      %v2667 = vadd.f32 %v1707, %v2666
      %v2668 = vpop.f32.mrf.mxu0
      %v2669 = vadd.f32 %v1707, %v2668
      %2670 = vmatprep.mubr.bf16.mxu0 0
      %2671 = vmatmul.mubr.bf16.gmra.mxu0 %v1980
      %v2672 = vpop.f32.mrf.mxu0
      %v2673 = vadd.f32 %v1712, %v2672
      %v2674 = vpop.f32.mrf.mxu0
      %v2675 = vadd.f32 %v1712, %v2674
      %v2676 = vpop.f32.mrf.mxu0
      %v2677 = vadd.f32 %v1717, %v2676
      %v2678 = vpop.f32.mrf.mxu0
      %v2679 = vadd.f32 %v1717, %v2678
      %2680 = vmatprep.mubr.bf16.mxu0 0
      %2681 = vmatmul.mubr.bf16.gmra.mxu0 %v1983
      %v2682 = vpop.f32.mrf.mxu0
      %v2683 = vadd.f32 %v1722, %v2682
      %v2684 = vpop.f32.mrf.mxu0
      %v2685 = vadd.f32 %v1722, %v2684
      %v2686 = vpop.f32.mrf.mxu0
      %v2687 = vadd.f32 %v1727, %v2686
      %v2688 = vpop.f32.mrf.mxu0
      %v2689 = vadd.f32 %v1727, %v2688
      %2690 = vdwg.mxu0
      %2691 = vmatprep.subr.bf16.mxu0 0
      %2692 = vmatpush1.bf16.msra.mxu0 0
      %2693 = vmatprep.subr.bf16.mxu0 0
      %2694 = vmatpush1.bf16.msra.mxu0 0
      %2695 = vmatprep.subr.bf16.mxu0 0
      %2696 = vmatpush1.bf16.msra.mxu0 0
      %2697 = vmatprep.subr.bf16.mxu0 0
      %2698 = vmatpush1.bf16.msra.mxu0 0
      %2699 = vmatprep.subr.bf16.mxu0 0
      %2700 = vmatpush1.bf16.msra.mxu0 0
      %2701 = vmatprep.subr.bf16.mxu0 0
      %2702 = vmatpush1.bf16.msra.mxu0 0
      %2703 = vmatprep.subr.bf16.mxu0 0
      %2704 = vmatpush1.bf16.msra.mxu0 0
      %2705 = vmatprep.subr.bf16.mxu0 %v1342
      %2706 = vmatpush1.bf16.msra.mxu0 %v1341
      %2707 = vmatprep.subr.bf16.mxu0 0
      %2708 = vmatpush2.bf16.msra.mxu0 0
      %2709 = vmatprep.subr.bf16.mxu0 0
      %2710 = vmatpush2.bf16.msra.mxu0 0
      %2711 = vmatprep.subr.bf16.mxu0 0
      %2712 = vmatpush2.bf16.msra.mxu0 0
      %2713 = vmatprep.subr.bf16.mxu0 0
      %2714 = vmatpush2.bf16.msra.mxu0 0
      %2715 = vmatprep.subr.bf16.mxu0 0
      %2716 = vmatpush2.bf16.msra.mxu0 0
      %2717 = vmatprep.subr.bf16.mxu0 0
      %2718 = vmatpush2.bf16.msra.mxu0 0
      %2719 = vmatprep.subr.bf16.mxu0 0
      %2720 = vmatpush2.bf16.msra.mxu0 0
      %2721 = vmatprep.subr.bf16.mxu0 0
      %2722 = vmatpush2.bf16.msra.mxu0 0
      %2723 = vmatprep.mubr.bf16.mxu0 0
      %2724 = vmatmul.mubr.bf16.gmra.mxu0 %v1890
      %v2725 = vpop.f32.mrf.mxu0
      %v2726 = vadd.f32 %v1412, %v2725
      %v2727 = vpop.f32.mrf.mxu0
      %v2728 = vadd.f32 %v1412, %v2727
      %v2729 = vpop.f32.mrf.mxu0
      %v2730 = vadd.f32 %v1417, %v2729
      %v2731 = vpop.f32.mrf.mxu0
      %v2732 = vadd.f32 %v1417, %v2731
      %2733 = vmatprep.mubr.bf16.mxu0 0
      %2734 = vmatmul.mubr.bf16.gmra.mxu0 %v1893
      %v2735 = vpop.f32.mrf.mxu0
      %v2736 = vadd.f32 %v1422, %v2735
      %v2737 = vpop.f32.mrf.mxu0
      %v2738 = vadd.f32 %v1422, %v2737
      %v2739 = vpop.f32.mrf.mxu0
      %v2740 = vadd.f32 %v1427, %v2739
      %v2741 = vpop.f32.mrf.mxu0
      %v2742 = vadd.f32 %v1427, %v2741
      %2743 = vmatprep.mubr.bf16.mxu0 0
      %2744 = vmatmul.mubr.bf16.gmra.mxu0 %v1896
      %v2745 = vpop.f32.mrf.mxu0
      %v2746 = vadd.f32 %v1432, %v2745
      %v2747 = vpop.f32.mrf.mxu0
      %v2748 = vadd.f32 %v1432, %v2747
      %v2749 = vpop.f32.mrf.mxu0
      %v2750 = vadd.f32 %v1437, %v2749
      %v2751 = vpop.f32.mrf.mxu0
      %v2752 = vadd.f32 %v1437, %v2751
      %2753 = vmatprep.mubr.bf16.mxu0 0
      %2754 = vmatmul.mubr.bf16.gmra.mxu0 %v1899
      %v2755 = vpop.f32.mrf.mxu0
      %v2756 = vadd.f32 %v1442, %v2755
      %v2757 = vpop.f32.mrf.mxu0
      %v2758 = vadd.f32 %v1442, %v2757
      %v2759 = vpop.f32.mrf.mxu0
      %v2760 = vadd.f32 %v1447, %v2759
      %v2761 = vpop.f32.mrf.mxu0
      %v2762 = vadd.f32 %v1447, %v2761
      %2763 = vmatprep.mubr.bf16.mxu0 0
      %2764 = vmatmul.mubr.bf16.gmra.mxu0 %v1902
      %v2765 = vpop.f32.mrf.mxu0
      %v2766 = vadd.f32 %v1452, %v2765
      %v2767 = vpop.f32.mrf.mxu0
      %v2768 = vadd.f32 %v1452, %v2767
      %v2769 = vpop.f32.mrf.mxu0
      %v2770 = vadd.f32 %v1457, %v2769
      %v2771 = vpop.f32.mrf.mxu0
      %v2772 = vadd.f32 %v1457, %v2771
      %2773 = vmatprep.mubr.bf16.mxu0 0
      %2774 = vmatmul.mubr.bf16.gmra.mxu0 %v1905
      %v2775 = vpop.f32.mrf.mxu0
      %v2776 = vadd.f32 %v1462, %v2775
      %v2777 = vpop.f32.mrf.mxu0
      %v2778 = vadd.f32 %v1462, %v2777
      %v2779 = vpop.f32.mrf.mxu0
      %v2780 = vadd.f32 %v1467, %v2779
      %v2781 = vpop.f32.mrf.mxu0
      %v2782 = vadd.f32 %v1467, %v2781
      %2783 = vmatprep.mubr.bf16.mxu0 0
      %2784 = vmatmul.mubr.bf16.gmra.mxu0 %v1908
      %v2785 = vpop.f32.mrf.mxu0
      %v2786 = vadd.f32 %v1472, %v2785
      %v2787 = vpop.f32.mrf.mxu0
      %v2788 = vadd.f32 %v1472, %v2787
      %v2789 = vpop.f32.mrf.mxu0
      %v2790 = vadd.f32 %v1477, %v2789
      %v2791 = vpop.f32.mrf.mxu0
      %v2792 = vadd.f32 %v1477, %v2791
      %2793 = vmatprep.mubr.bf16.mxu0 0
      %2794 = vmatmul.mubr.bf16.gmra.mxu0 %v1911
      %v2795 = vpop.f32.mrf.mxu0
      %v2796 = vadd.f32 %v1482, %v2795
      %v2797 = vpop.f32.mrf.mxu0
      %v2798 = vadd.f32 %v1482, %v2797
      %v2799 = vpop.f32.mrf.mxu0
      %v2800 = vadd.f32 %v1487, %v2799
      %v2801 = vpop.f32.mrf.mxu0
      %v2802 = vadd.f32 %v1487, %v2801
      %2803 = vmatprep.mubr.bf16.mxu0 0
      %2804 = vmatmul.mubr.bf16.gmra.mxu0 %v1914
      %v2805 = vpop.f32.mrf.mxu0
      %v2806 = vadd.f32 %v1492, %v2805
      %v2807 = vpop.f32.mrf.mxu0
      %v2808 = vadd.f32 %v1492, %v2807
      %v2809 = vpop.f32.mrf.mxu0
      %v2810 = vadd.f32 %v1497, %v2809
      %v2811 = vpop.f32.mrf.mxu0
      %v2812 = vadd.f32 %v1497, %v2811
      %2813 = vmatprep.mubr.bf16.mxu0 0
      %2814 = vmatmul.mubr.bf16.gmra.mxu0 %v1917
      %v2815 = vpop.f32.mrf.mxu0
      %v2816 = vadd.f32 %v1502, %v2815
      %v2817 = vpop.f32.mrf.mxu0
      %v2818 = vadd.f32 %v1502, %v2817
      %v2819 = vpop.f32.mrf.mxu0
      %v2820 = vadd.f32 %v1507, %v2819
      %v2821 = vpop.f32.mrf.mxu0
      %v2822 = vadd.f32 %v1507, %v2821
      %2823 = vmatprep.mubr.bf16.mxu0 0
      %2824 = vmatmul.mubr.bf16.gmra.mxu0 %v1920
      %v2825 = vpop.f32.mrf.mxu0
      %v2826 = vadd.f32 %v1512, %v2825
      %v2827 = vpop.f32.mrf.mxu0
      %v2828 = vadd.f32 %v1512, %v2827
      %v2829 = vpop.f32.mrf.mxu0
      %v2830 = vadd.f32 %v1517, %v2829
      %v2831 = vpop.f32.mrf.mxu0
      %v2832 = vadd.f32 %v1517, %v2831
      %2833 = vmatprep.mubr.bf16.mxu0 0
      %2834 = vmatmul.mubr.bf16.gmra.mxu0 %v1923
      %v2835 = vpop.f32.mrf.mxu0
      %v2836 = vadd.f32 %v1522, %v2835
      %v2837 = vpop.f32.mrf.mxu0
      %v2838 = vadd.f32 %v1522, %v2837
      %v2839 = vpop.f32.mrf.mxu0
      %v2840 = vadd.f32 %v1527, %v2839
      %v2841 = vpop.f32.mrf.mxu0
      %v2842 = vadd.f32 %v1527, %v2841
      %2843 = vmatprep.mubr.bf16.mxu0 0
      %2844 = vmatmul.mubr.bf16.gmra.mxu0 %v1926
      %v2845 = vpop.f32.mrf.mxu0
      %v2846 = vadd.f32 %v1532, %v2845
      %v2847 = vpop.f32.mrf.mxu0
      %v2848 = vadd.f32 %v1532, %v2847
      %v2849 = vpop.f32.mrf.mxu0
      %v2850 = vadd.f32 %v1537, %v2849
      %v2851 = vpop.f32.mrf.mxu0
      %v2852 = vadd.f32 %v1537, %v2851
      %2853 = vmatprep.mubr.bf16.mxu0 0
      %2854 = vmatmul.mubr.bf16.gmra.mxu0 %v1929
      %v2855 = vpop.f32.mrf.mxu0
      %v2856 = vadd.f32 %v1542, %v2855
      %v2857 = vpop.f32.mrf.mxu0
      %v2858 = vadd.f32 %v1542, %v2857
      %v2859 = vpop.f32.mrf.mxu0
      %v2860 = vadd.f32 %v1547, %v2859
      %v2861 = vpop.f32.mrf.mxu0
      %v2862 = vadd.f32 %v1547, %v2861
      %2863 = vmatprep.mubr.bf16.mxu0 0
      %2864 = vmatmul.mubr.bf16.gmra.mxu0 %v1932
      %v2865 = vpop.f32.mrf.mxu0
      %v2866 = vadd.f32 %v1552, %v2865
      %v2867 = vpop.f32.mrf.mxu0
      %v2868 = vadd.f32 %v1552, %v2867
      %v2869 = vpop.f32.mrf.mxu0
      %v2870 = vadd.f32 %v1557, %v2869
      %v2871 = vpop.f32.mrf.mxu0
      %v2872 = vadd.f32 %v1557, %v2871
      %2873 = vmatprep.mubr.bf16.mxu0 0
      %2874 = vmatmul.mubr.bf16.gmra.mxu0 %v1935
      %v2875 = vpop.f32.mrf.mxu0
      %v2876 = vadd.f32 %v1562, %v2875
      %v2877 = vpop.f32.mrf.mxu0
      %v2878 = vadd.f32 %v1562, %v2877
      %v2879 = vpop.f32.mrf.mxu0
      %v2880 = vadd.f32 %v1567, %v2879
      %v2881 = vpop.f32.mrf.mxu0
      %v2882 = vadd.f32 %v1567, %v2881
      %2883 = vmatprep.mubr.bf16.mxu0 0
      %2884 = vmatmul.mubr.bf16.gmra.mxu0 %v1938
      %v2885 = vpop.f32.mrf.mxu0
      %v2886 = vadd.f32 %v1572, %v2885
      %v2887 = vpop.f32.mrf.mxu0
      %v2888 = vadd.f32 %v1572, %v2887
      %v2889 = vpop.f32.mrf.mxu0
      %v2890 = vadd.f32 %v1577, %v2889
      %v2891 = vpop.f32.mrf.mxu0
      %v2892 = vadd.f32 %v1577, %v2891
      %2893 = vmatprep.mubr.bf16.mxu0 0
      %2894 = vmatmul.mubr.bf16.gmra.mxu0 %v1941
      %v2895 = vpop.f32.mrf.mxu0
      %v2896 = vadd.f32 %v1582, %v2895
      %v2897 = vpop.f32.mrf.mxu0
      %v2898 = vadd.f32 %v1582, %v2897
      %v2899 = vpop.f32.mrf.mxu0
      %v2900 = vadd.f32 %v1587, %v2899
      %v2901 = vpop.f32.mrf.mxu0
      %v2902 = vadd.f32 %v1587, %v2901
      %2903 = vmatprep.mubr.bf16.mxu0 0
      %2904 = vmatmul.mubr.bf16.gmra.mxu0 %v1944
      %v2905 = vpop.f32.mrf.mxu0
      %v2906 = vadd.f32 %v1592, %v2905
      %v2907 = vpop.f32.mrf.mxu0
      %v2908 = vadd.f32 %v1592, %v2907
      %v2909 = vpop.f32.mrf.mxu0
      %v2910 = vadd.f32 %v1597, %v2909
      %v2911 = vpop.f32.mrf.mxu0
      %v2912 = vadd.f32 %v1597, %v2911
      %2913 = vmatprep.mubr.bf16.mxu0 0
      %2914 = vmatmul.mubr.bf16.gmra.mxu0 %v1947
      %v2915 = vpop.f32.mrf.mxu0
      %v2916 = vadd.f32 %v1602, %v2915
      %v2917 = vpop.f32.mrf.mxu0
      %v2918 = vadd.f32 %v1602, %v2917
      %v2919 = vpop.f32.mrf.mxu0
      %v2920 = vadd.f32 %v1607, %v2919
      %v2921 = vpop.f32.mrf.mxu0
      %v2922 = vadd.f32 %v1607, %v2921
      %2923 = vmatprep.mubr.bf16.mxu0 0
      %2924 = vmatmul.mubr.bf16.gmra.mxu0 %v1950
      %v2925 = vpop.f32.mrf.mxu0
      %v2926 = vadd.f32 %v1612, %v2925
      %v2927 = vpop.f32.mrf.mxu0
      %v2928 = vadd.f32 %v1612, %v2927
      %v2929 = vpop.f32.mrf.mxu0
      %v2930 = vadd.f32 %v1617, %v2929
      %v2931 = vpop.f32.mrf.mxu0
      %v2932 = vadd.f32 %v1617, %v2931
      %2933 = vmatprep.mubr.bf16.mxu0 0
      %2934 = vmatmul.mubr.bf16.gmra.mxu0 %v1953
      %v2935 = vpop.f32.mrf.mxu0
      %v2936 = vadd.f32 %v1622, %v2935
      %v2937 = vpop.f32.mrf.mxu0
      %v2938 = vadd.f32 %v1622, %v2937
      %v2939 = vpop.f32.mrf.mxu0
      %v2940 = vadd.f32 %v1627, %v2939
      %v2941 = vpop.f32.mrf.mxu0
      %v2942 = vadd.f32 %v1627, %v2941
      %2943 = vmatprep.mubr.bf16.mxu0 0
      %2944 = vmatmul.mubr.bf16.gmra.mxu0 %v1956
      %v2945 = vpop.f32.mrf.mxu0
      %v2946 = vadd.f32 %v1632, %v2945
      %v2947 = vpop.f32.mrf.mxu0
      %v2948 = vadd.f32 %v1632, %v2947
      %v2949 = vpop.f32.mrf.mxu0
      %v2950 = vadd.f32 %v1637, %v2949
      %v2951 = vpop.f32.mrf.mxu0
      %v2952 = vadd.f32 %v1637, %v2951
      %2953 = vmatprep.mubr.bf16.mxu0 0
      %2954 = vmatmul.mubr.bf16.gmra.mxu0 %v1959
      %v2955 = vpop.f32.mrf.mxu0
      %v2956 = vadd.f32 %v1642, %v2955
      %v2957 = vpop.f32.mrf.mxu0
      %v2958 = vadd.f32 %v1642, %v2957
      %v2959 = vpop.f32.mrf.mxu0
      %v2960 = vadd.f32 %v1647, %v2959
      %v2961 = vpop.f32.mrf.mxu0
      %v2962 = vadd.f32 %v1647, %v2961
      %2963 = vmatprep.mubr.bf16.mxu0 0
      %2964 = vmatmul.mubr.bf16.gmra.mxu0 %v1962
      %v2965 = vpop.f32.mrf.mxu0
      %v2966 = vadd.f32 %v1652, %v2965
      %v2967 = vpop.f32.mrf.mxu0
      %v2968 = vadd.f32 %v1652, %v2967
      %v2969 = vpop.f32.mrf.mxu0
      %v2970 = vadd.f32 %v1657, %v2969
      %v2971 = vpop.f32.mrf.mxu0
      %v2972 = vadd.f32 %v1657, %v2971
      %2973 = vmatprep.mubr.bf16.mxu0 0
      %2974 = vmatmul.mubr.bf16.gmra.mxu0 %v1965
      %v2975 = vpop.f32.mrf.mxu0
      %v2976 = vadd.f32 %v1662, %v2975
      %v2977 = vpop.f32.mrf.mxu0
      %v2978 = vadd.f32 %v1662, %v2977
      %v2979 = vpop.f32.mrf.mxu0
      %v2980 = vadd.f32 %v1667, %v2979
      %v2981 = vpop.f32.mrf.mxu0
      %v2982 = vadd.f32 %v1667, %v2981
      %2983 = vmatprep.mubr.bf16.mxu0 0
      %2984 = vmatmul.mubr.bf16.gmra.mxu0 %v1968
      %v2985 = vpop.f32.mrf.mxu0
      %v2986 = vadd.f32 %v1672, %v2985
      %v2987 = vpop.f32.mrf.mxu0
      %v2988 = vadd.f32 %v1672, %v2987
      %v2989 = vpop.f32.mrf.mxu0
      %v2990 = vadd.f32 %v1677, %v2989
      %v2991 = vpop.f32.mrf.mxu0
      %v2992 = vadd.f32 %v1677, %v2991
      %2993 = vmatprep.mubr.bf16.mxu0 0
      %2994 = vmatmul.mubr.bf16.gmra.mxu0 %v1971
      %v2995 = vpop.f32.mrf.mxu0
      %v2996 = vadd.f32 %v1682, %v2995
      %v2997 = vpop.f32.mrf.mxu0
      %v2998 = vadd.f32 %v1682, %v2997
      %v2999 = vpop.f32.mrf.mxu0
      %v3000 = vadd.f32 %v1687, %v2999
      %v3001 = vpop.f32.mrf.mxu0
      %v3002 = vadd.f32 %v1687, %v3001
      %3003 = vmatprep.mubr.bf16.mxu0 0
      %3004 = vmatmul.mubr.bf16.gmra.mxu0 %v1974
      %v3005 = vpop.f32.mrf.mxu0
      %v3006 = vadd.f32 %v1692, %v3005
      %v3007 = vpop.f32.mrf.mxu0
      %v3008 = vadd.f32 %v1692, %v3007
      %v3009 = vpop.f32.mrf.mxu0
      %v3010 = vadd.f32 %v1697, %v3009
      %v3011 = vpop.f32.mrf.mxu0
      %v3012 = vadd.f32 %v1697, %v3011
      %3013 = vmatprep.mubr.bf16.mxu0 0
      %3014 = vmatmul.mubr.bf16.gmra.mxu0 %v1977
      %v3015 = vpop.f32.mrf.mxu0
      %v3016 = vadd.f32 %v1702, %v3015
      %v3017 = vpop.f32.mrf.mxu0
      %v3018 = vadd.f32 %v1702, %v3017
      %v3019 = vpop.f32.mrf.mxu0
      %v3020 = vadd.f32 %v1707, %v3019
      %v3021 = vpop.f32.mrf.mxu0
      %v3022 = vadd.f32 %v1707, %v3021
      %3023 = vmatprep.mubr.bf16.mxu0 0
      %3024 = vmatmul.mubr.bf16.gmra.mxu0 %v1980
      %v3025 = vpop.f32.mrf.mxu0
      %v3026 = vadd.f32 %v1712, %v3025
      %v3027 = vpop.f32.mrf.mxu0
      %v3028 = vadd.f32 %v1712, %v3027
      %v3029 = vpop.f32.mrf.mxu0
      %v3030 = vadd.f32 %v1717, %v3029
      %v3031 = vpop.f32.mrf.mxu0
      %v3032 = vadd.f32 %v1717, %v3031
      %3033 = vmatprep.mubr.bf16.mxu0 0
      %3034 = vmatmul.mubr.bf16.gmra.mxu0 %v1983
      %v3035 = vpop.f32.mrf.mxu0
      %v3036 = vadd.f32 %v1722, %v3035
      %v3037 = vpop.f32.mrf.mxu0
      %v3038 = vadd.f32 %v1722, %v3037
      %v3039 = vpop.f32.mrf.mxu0
      %v3040 = vadd.f32 %v1727, %v3039
      %v3041 = vpop.f32.mrf.mxu0
      %v3042 = vadd.f32 %v1727, %v3041
      %3043 = vdwg.mxu0
      %3044 = vmatprep.subr.bf16.mxu0 0
      %3045 = vmatpush1.bf16.msra.mxu0 0
      %3046 = vmatprep.subr.bf16.mxu0 0
      %3047 = vmatpush1.bf16.msra.mxu0 0
      %3048 = vmatprep.subr.bf16.mxu0 0
      %3049 = vmatpush1.bf16.msra.mxu0 0
      %3050 = vmatprep.subr.bf16.mxu0 0
      %3051 = vmatpush1.bf16.msra.mxu0 0
      %3052 = vmatprep.subr.bf16.mxu0 0
      %3053 = vmatpush1.bf16.msra.mxu0 0
      %3054 = vmatprep.subr.bf16.mxu0 0
      %3055 = vmatpush1.bf16.msra.mxu0 0
      %3056 = vmatprep.subr.bf16.mxu0 0
      %3057 = vmatpush1.bf16.msra.mxu0 0
      %3058 = vmatprep.subr.bf16.mxu0 %v1344
      %3059 = vmatpush1.bf16.msra.mxu0 %v1343
      %3060 = vmatprep.subr.bf16.mxu0 0
      %3061 = vmatpush2.bf16.msra.mxu0 0
      %3062 = vmatprep.subr.bf16.mxu0 0
      %3063 = vmatpush2.bf16.msra.mxu0 0
      %3064 = vmatprep.subr.bf16.mxu0 0
      %3065 = vmatpush2.bf16.msra.mxu0 0
      %3066 = vmatprep.subr.bf16.mxu0 0
      %3067 = vmatpush2.bf16.msra.mxu0 0
      %3068 = vmatprep.subr.bf16.mxu0 0
      %3069 = vmatpush2.bf16.msra.mxu0 0
      %3070 = vmatprep.subr.bf16.mxu0 0
      %3071 = vmatpush2.bf16.msra.mxu0 0
      %3072 = vmatprep.subr.bf16.mxu0 0
      %3073 = vmatpush2.bf16.msra.mxu0 0
      %3074 = vmatprep.subr.bf16.mxu0 0
      %3075 = vmatpush2.bf16.msra.mxu0 0
      %3076 = vmatprep.mubr.bf16.mxu0 0
      %3077 = vmatmul.mubr.bf16.gmra.mxu0 %v1890
      %v3078 = vpop.f32.mrf.mxu0
      %v3079 = vadd.f32 %v1412, %v3078
      %v3080 = vpop.f32.mrf.mxu0
      %v3081 = vadd.f32 %v1412, %v3080
      %v3082 = vpop.f32.mrf.mxu0
      %v3083 = vadd.f32 %v1417, %v3082
      %v3084 = vpop.f32.mrf.mxu0
      %v3085 = vadd.f32 %v1417, %v3084
      %3086 = vmatprep.mubr.bf16.mxu0 0
      %3087 = vmatmul.mubr.bf16.gmra.mxu0 %v1893
      %v3088 = vpop.f32.mrf.mxu0
      %v3089 = vadd.f32 %v1422, %v3088
      %v3090 = vpop.f32.mrf.mxu0
      %v3091 = vadd.f32 %v1422, %v3090
      %v3092 = vpop.f32.mrf.mxu0
      %v3093 = vadd.f32 %v1427, %v3092
      %v3094 = vpop.f32.mrf.mxu0
      %v3095 = vadd.f32 %v1427, %v3094
      %3096 = vmatprep.mubr.bf16.mxu0 0
      %3097 = vmatmul.mubr.bf16.gmra.mxu0 %v1896
      %v3098 = vpop.f32.mrf.mxu0
      %v3099 = vadd.f32 %v1432, %v3098
      %v3100 = vpop.f32.mrf.mxu0
      %v3101 = vadd.f32 %v1432, %v3100
      %v3102 = vpop.f32.mrf.mxu0
      %v3103 = vadd.f32 %v1437, %v3102
      %v3104 = vpop.f32.mrf.mxu0
      %v3105 = vadd.f32 %v1437, %v3104
      %3106 = vmatprep.mubr.bf16.mxu0 0
      %3107 = vmatmul.mubr.bf16.gmra.mxu0 %v1899
      %v3108 = vpop.f32.mrf.mxu0
      %v3109 = vadd.f32 %v1442, %v3108
      %v3110 = vpop.f32.mrf.mxu0
      %v3111 = vadd.f32 %v1442, %v3110
      %v3112 = vpop.f32.mrf.mxu0
      %v3113 = vadd.f32 %v1447, %v3112
      %v3114 = vpop.f32.mrf.mxu0
      %v3115 = vadd.f32 %v1447, %v3114
      %3116 = vmatprep.mubr.bf16.mxu0 0
      %3117 = vmatmul.mubr.bf16.gmra.mxu0 %v1902
      %v3118 = vpop.f32.mrf.mxu0
      %v3119 = vadd.f32 %v1452, %v3118
      %v3120 = vpop.f32.mrf.mxu0
      %v3121 = vadd.f32 %v1452, %v3120
      %v3122 = vpop.f32.mrf.mxu0
      %v3123 = vadd.f32 %v1457, %v3122
      %v3124 = vpop.f32.mrf.mxu0
      %v3125 = vadd.f32 %v1457, %v3124
      %3126 = vmatprep.mubr.bf16.mxu0 0
      %3127 = vmatmul.mubr.bf16.gmra.mxu0 %v1905
      %v3128 = vpop.f32.mrf.mxu0
      %v3129 = vadd.f32 %v1462, %v3128
      %v3130 = vpop.f32.mrf.mxu0
      %v3131 = vadd.f32 %v1462, %v3130
      %v3132 = vpop.f32.mrf.mxu0
      %v3133 = vadd.f32 %v1467, %v3132
      %v3134 = vpop.f32.mrf.mxu0
      %v3135 = vadd.f32 %v1467, %v3134
      %3136 = vmatprep.mubr.bf16.mxu0 0
      %3137 = vmatmul.mubr.bf16.gmra.mxu0 %v1908
      %v3138 = vpop.f32.mrf.mxu0
      %v3139 = vadd.f32 %v1472, %v3138
      %v3140 = vpop.f32.mrf.mxu0
      %v3141 = vadd.f32 %v1472, %v3140
      %v3142 = vpop.f32.mrf.mxu0
      %v3143 = vadd.f32 %v1477, %v3142
      %v3144 = vpop.f32.mrf.mxu0
      %v3145 = vadd.f32 %v1477, %v3144
      %3146 = vmatprep.mubr.bf16.mxu0 0
      %3147 = vmatmul.mubr.bf16.gmra.mxu0 %v1911
      %v3148 = vpop.f32.mrf.mxu0
      %v3149 = vadd.f32 %v1482, %v3148
      %v3150 = vpop.f32.mrf.mxu0
      %v3151 = vadd.f32 %v1482, %v3150
      %v3152 = vpop.f32.mrf.mxu0
      %v3153 = vadd.f32 %v1487, %v3152
      %v3154 = vpop.f32.mrf.mxu0
      %v3155 = vadd.f32 %v1487, %v3154
      %3156 = vmatprep.mubr.bf16.mxu0 0
      %3157 = vmatmul.mubr.bf16.gmra.mxu0 %v1914
      %v3158 = vpop.f32.mrf.mxu0
      %v3159 = vadd.f32 %v1492, %v3158
      %v3160 = vpop.f32.mrf.mxu0
      %v3161 = vadd.f32 %v1492, %v3160
      %v3162 = vpop.f32.mrf.mxu0
      %v3163 = vadd.f32 %v1497, %v3162
      %v3164 = vpop.f32.mrf.mxu0
      %v3165 = vadd.f32 %v1497, %v3164
      %3166 = vmatprep.mubr.bf16.mxu0 0
      %3167 = vmatmul.mubr.bf16.gmra.mxu0 %v1917
      %v3168 = vpop.f32.mrf.mxu0
      %v3169 = vadd.f32 %v1502, %v3168
      %v3170 = vpop.f32.mrf.mxu0
      %v3171 = vadd.f32 %v1502, %v3170
      %v3172 = vpop.f32.mrf.mxu0
      %v3173 = vadd.f32 %v1507, %v3172
      %v3174 = vpop.f32.mrf.mxu0
      %v3175 = vadd.f32 %v1507, %v3174
      %3176 = vmatprep.mubr.bf16.mxu0 0
      %3177 = vmatmul.mubr.bf16.gmra.mxu0 %v1920
      %v3178 = vpop.f32.mrf.mxu0
      %v3179 = vadd.f32 %v1512, %v3178
      %v3180 = vpop.f32.mrf.mxu0
      %v3181 = vadd.f32 %v1512, %v3180
      %v3182 = vpop.f32.mrf.mxu0
      %v3183 = vadd.f32 %v1517, %v3182
      %v3184 = vpop.f32.mrf.mxu0
      %v3185 = vadd.f32 %v1517, %v3184
      %3186 = vmatprep.mubr.bf16.mxu0 0
      %3187 = vmatmul.mubr.bf16.gmra.mxu0 %v1923
      %v3188 = vpop.f32.mrf.mxu0
      %v3189 = vadd.f32 %v1522, %v3188
      %v3190 = vpop.f32.mrf.mxu0
      %v3191 = vadd.f32 %v1522, %v3190
      %v3192 = vpop.f32.mrf.mxu0
      %v3193 = vadd.f32 %v1527, %v3192
      %v3194 = vpop.f32.mrf.mxu0
      %v3195 = vadd.f32 %v1527, %v3194
      %3196 = vmatprep.mubr.bf16.mxu0 0
      %3197 = vmatmul.mubr.bf16.gmra.mxu0 %v1926
      %v3198 = vpop.f32.mrf.mxu0
      %v3199 = vadd.f32 %v1532, %v3198
      %v3200 = vpop.f32.mrf.mxu0
      %v3201 = vadd.f32 %v1532, %v3200
      %v3202 = vpop.f32.mrf.mxu0
      %v3203 = vadd.f32 %v1537, %v3202
      %v3204 = vpop.f32.mrf.mxu0
      %v3205 = vadd.f32 %v1537, %v3204
      %3206 = vmatprep.mubr.bf16.mxu0 0
      %3207 = vmatmul.mubr.bf16.gmra.mxu0 %v1929
      %v3208 = vpop.f32.mrf.mxu0
      %v3209 = vadd.f32 %v1542, %v3208
      %v3210 = vpop.f32.mrf.mxu0
      %v3211 = vadd.f32 %v1542, %v3210
      %v3212 = vpop.f32.mrf.mxu0
      %v3213 = vadd.f32 %v1547, %v3212
      %v3214 = vpop.f32.mrf.mxu0
      %v3215 = vadd.f32 %v1547, %v3214
      %3216 = vmatprep.mubr.bf16.mxu0 0
      %3217 = vmatmul.mubr.bf16.gmra.mxu0 %v1932
      %v3218 = vpop.f32.mrf.mxu0
      %v3219 = vadd.f32 %v1552, %v3218
      %v3220 = vpop.f32.mrf.mxu0
      %v3221 = vadd.f32 %v1552, %v3220
      %v3222 = vpop.f32.mrf.mxu0
      %v3223 = vadd.f32 %v1557, %v3222
      %v3224 = vpop.f32.mrf.mxu0
      %v3225 = vadd.f32 %v1557, %v3224
      %3226 = vmatprep.mubr.bf16.mxu0 0
      %3227 = vmatmul.mubr.bf16.gmra.mxu0 %v1935
      %v3228 = vpop.f32.mrf.mxu0
      %v3229 = vadd.f32 %v1562, %v3228
      %v3230 = vpop.f32.mrf.mxu0
      %v3231 = vadd.f32 %v1562, %v3230
      %v3232 = vpop.f32.mrf.mxu0
      %v3233 = vadd.f32 %v1567, %v3232
      %v3234 = vpop.f32.mrf.mxu0
      %v3235 = vadd.f32 %v1567, %v3234
      %3236 = vmatprep.mubr.bf16.mxu0 0
      %3237 = vmatmul.mubr.bf16.gmra.mxu0 %v1938
      %v3238 = vpop.f32.mrf.mxu0
      %v3239 = vadd.f32 %v1572, %v3238
      %v3240 = vpop.f32.mrf.mxu0
      %v3241 = vadd.f32 %v1572, %v3240
      %v3242 = vpop.f32.mrf.mxu0
      %v3243 = vadd.f32 %v1577, %v3242
      %v3244 = vpop.f32.mrf.mxu0
      %v3245 = vadd.f32 %v1577, %v3244
      %3246 = vmatprep.mubr.bf16.mxu0 0
      %3247 = vmatmul.mubr.bf16.gmra.mxu0 %v1941
      %v3248 = vpop.f32.mrf.mxu0
      %v3249 = vadd.f32 %v1582, %v3248
      %v3250 = vpop.f32.mrf.mxu0
      %v3251 = vadd.f32 %v1582, %v3250
      %v3252 = vpop.f32.mrf.mxu0
      %v3253 = vadd.f32 %v1587, %v3252
      %v3254 = vpop.f32.mrf.mxu0
      %v3255 = vadd.f32 %v1587, %v3254
      %3256 = vmatprep.mubr.bf16.mxu0 0
      %3257 = vmatmul.mubr.bf16.gmra.mxu0 %v1944
      %v3258 = vpop.f32.mrf.mxu0
      %v3259 = vadd.f32 %v1592, %v3258
      %v3260 = vpop.f32.mrf.mxu0
      %v3261 = vadd.f32 %v1592, %v3260
      %v3262 = vpop.f32.mrf.mxu0
      %v3263 = vadd.f32 %v1597, %v3262
      %v3264 = vpop.f32.mrf.mxu0
      %v3265 = vadd.f32 %v1597, %v3264
      %3266 = vmatprep.mubr.bf16.mxu0 0
      %3267 = vmatmul.mubr.bf16.gmra.mxu0 %v1947
      %v3268 = vpop.f32.mrf.mxu0
      %v3269 = vadd.f32 %v1602, %v3268
      %v3270 = vpop.f32.mrf.mxu0
      %v3271 = vadd.f32 %v1602, %v3270
      %v3272 = vpop.f32.mrf.mxu0
      %v3273 = vadd.f32 %v1607, %v3272
      %v3274 = vpop.f32.mrf.mxu0
      %v3275 = vadd.f32 %v1607, %v3274
      %3276 = vmatprep.mubr.bf16.mxu0 0
      %3277 = vmatmul.mubr.bf16.gmra.mxu0 %v1950
      %v3278 = vpop.f32.mrf.mxu0
      %v3279 = vadd.f32 %v1612, %v3278
      %v3280 = vpop.f32.mrf.mxu0
      %v3281 = vadd.f32 %v1612, %v3280
      %v3282 = vpop.f32.mrf.mxu0
      %v3283 = vadd.f32 %v1617, %v3282
      %v3284 = vpop.f32.mrf.mxu0
      %v3285 = vadd.f32 %v1617, %v3284
      %3286 = vmatprep.mubr.bf16.mxu0 0
      %3287 = vmatmul.mubr.bf16.gmra.mxu0 %v1953
      %v3288 = vpop.f32.mrf.mxu0
      %v3289 = vadd.f32 %v1622, %v3288
      %v3290 = vpop.f32.mrf.mxu0
      %v3291 = vadd.f32 %v1622, %v3290
      %v3292 = vpop.f32.mrf.mxu0
      %v3293 = vadd.f32 %v1627, %v3292
      %v3294 = vpop.f32.mrf.mxu0
      %v3295 = vadd.f32 %v1627, %v3294
      %3296 = vmatprep.mubr.bf16.mxu0 0
      %3297 = vmatmul.mubr.bf16.gmra.mxu0 %v1956
      %v3298 = vpop.f32.mrf.mxu0
      %v3299 = vadd.f32 %v1632, %v3298
      %v3300 = vpop.f32.mrf.mxu0
      %v3301 = vadd.f32 %v1632, %v3300
      %v3302 = vpop.f32.mrf.mxu0
      %v3303 = vadd.f32 %v1637, %v3302
      %v3304 = vpop.f32.mrf.mxu0
      %v3305 = vadd.f32 %v1637, %v3304
      %3306 = vmatprep.mubr.bf16.mxu0 0
      %3307 = vmatmul.mubr.bf16.gmra.mxu0 %v1959
      %v3308 = vpop.f32.mrf.mxu0
      %v3309 = vadd.f32 %v1642, %v3308
      %v3310 = vpop.f32.mrf.mxu0
      %v3311 = vadd.f32 %v1642, %v3310
      %v3312 = vpop.f32.mrf.mxu0
      %v3313 = vadd.f32 %v1647, %v3312
      %v3314 = vpop.f32.mrf.mxu0
      %v3315 = vadd.f32 %v1647, %v3314
      %3316 = vmatprep.mubr.bf16.mxu0 0
      %3317 = vmatmul.mubr.bf16.gmra.mxu0 %v1962
      %v3318 = vpop.f32.mrf.mxu0
      %v3319 = vadd.f32 %v1652, %v3318
      %v3320 = vpop.f32.mrf.mxu0
      %v3321 = vadd.f32 %v1652, %v3320
      %v3322 = vpop.f32.mrf.mxu0
      %v3323 = vadd.f32 %v1657, %v3322
      %v3324 = vpop.f32.mrf.mxu0
      %v3325 = vadd.f32 %v1657, %v3324
      %3326 = vmatprep.mubr.bf16.mxu0 0
      %3327 = vmatmul.mubr.bf16.gmra.mxu0 %v1965
      %v3328 = vpop.f32.mrf.mxu0
      %v3329 = vadd.f32 %v1662, %v3328
      %v3330 = vpop.f32.mrf.mxu0
      %v3331 = vadd.f32 %v1662, %v3330
      %v3332 = vpop.f32.mrf.mxu0
      %v3333 = vadd.f32 %v1667, %v3332
      %v3334 = vpop.f32.mrf.mxu0
      %v3335 = vadd.f32 %v1667, %v3334
      %3336 = vmatprep.mubr.bf16.mxu0 0
      %3337 = vmatmul.mubr.bf16.gmra.mxu0 %v1968
      %v3338 = vpop.f32.mrf.mxu0
      %v3339 = vadd.f32 %v1672, %v3338
      %v3340 = vpop.f32.mrf.mxu0
      %v3341 = vadd.f32 %v1672, %v3340
      %v3342 = vpop.f32.mrf.mxu0
      %v3343 = vadd.f32 %v1677, %v3342
      %v3344 = vpop.f32.mrf.mxu0
      %v3345 = vadd.f32 %v1677, %v3344
      %3346 = vmatprep.mubr.bf16.mxu0 0
      %3347 = vmatmul.mubr.bf16.gmra.mxu0 %v1971
      %v3348 = vpop.f32.mrf.mxu0
      %v3349 = vadd.f32 %v1682, %v3348
      %v3350 = vpop.f32.mrf.mxu0
      %v3351 = vadd.f32 %v1682, %v3350
      %v3352 = vpop.f32.mrf.mxu0
      %v3353 = vadd.f32 %v1687, %v3352
      %v3354 = vpop.f32.mrf.mxu0
      %v3355 = vadd.f32 %v1687, %v3354
      %3356 = vmatprep.mubr.bf16.mxu0 0
      %3357 = vmatmul.mubr.bf16.gmra.mxu0 %v1974
      %v3358 = vpop.f32.mrf.mxu0
      %v3359 = vadd.f32 %v1692, %v3358
      %v3360 = vpop.f32.mrf.mxu0
      %v3361 = vadd.f32 %v1692, %v3360
      %v3362 = vpop.f32.mrf.mxu0
      %v3363 = vadd.f32 %v1697, %v3362
      %v3364 = vpop.f32.mrf.mxu0
      %v3365 = vadd.f32 %v1697, %v3364
      %3366 = vmatprep.mubr.bf16.mxu0 0
      %3367 = vmatmul.mubr.bf16.gmra.mxu0 %v1977
      %v3368 = vpop.f32.mrf.mxu0
      %v3369 = vadd.f32 %v1702, %v3368
      %v3370 = vpop.f32.mrf.mxu0
      %v3371 = vadd.f32 %v1702, %v3370
      %v3372 = vpop.f32.mrf.mxu0
      %v3373 = vadd.f32 %v1707, %v3372
      %v3374 = vpop.f32.mrf.mxu0
      %v3375 = vadd.f32 %v1707, %v3374
      %3376 = vmatprep.mubr.bf16.mxu0 0
      %3377 = vmatmul.mubr.bf16.gmra.mxu0 %v1980
      %v3378 = vpop.f32.mrf.mxu0
      %v3379 = vadd.f32 %v1712, %v3378
      %v3380 = vpop.f32.mrf.mxu0
      %v3381 = vadd.f32 %v1712, %v3380
      %v3382 = vpop.f32.mrf.mxu0
      %v3383 = vadd.f32 %v1717, %v3382
      %v3384 = vpop.f32.mrf.mxu0
      %v3385 = vadd.f32 %v1717, %v3384
      %3386 = vmatprep.mubr.bf16.mxu0 0
      %3387 = vmatmul.mubr.bf16.gmra.mxu0 %v1983
      %v3388 = vpop.f32.mrf.mxu0
      %v3389 = vadd.f32 %v1722, %v3388
      %v3390 = vpop.f32.mrf.mxu0
      %v3391 = vadd.f32 %v1722, %v3390
      %v3392 = vpop.f32.mrf.mxu0
      %v3393 = vadd.f32 %v1727, %v3392
      %v3394 = vpop.f32.mrf.mxu0
      %v3395 = vadd.f32 %v1727, %v3394
      %3396 = vdwg.mxu0
      %v3397 = vmax.f32 %v2020, 0.0
      %v3398 = vmax.f32 %v2022, 0.0
      %v3399 = vmax.f32 %v2373, 0.0
      %v3400 = vmax.f32 %v2375, 0.0
      %v3401 = vmax.f32 %v2726, 0.0
      %v3402 = vmax.f32 %v2728, 0.0
      %v3403 = vmax.f32 %v3079, 0.0
      %v3404 = vmax.f32 %v3081, 0.0
      %v3405 = vmax.f32 %v2024, 0.0
      %v3406 = vmax.f32 %v2026, 0.0
      %v3407 = vmax.f32 %v2377, 0.0
      %v3408 = vmax.f32 %v2379, 0.0
      %v3409 = vmax.f32 %v2730, 0.0
      %v3410 = vmax.f32 %v2732, 0.0
      %v3411 = vmax.f32 %v3083, 0.0
      %v3412 = vmax.f32 %v3085, 0.0
      %v3413 = vmax.f32 %v2030, 0.0
      %v3414 = vmax.f32 %v2032, 0.0
      %v3415 = vmax.f32 %v2383, 0.0
      %v3416 = vmax.f32 %v2385, 0.0
      %v3417 = vmax.f32 %v2736, 0.0
      %v3418 = vmax.f32 %v2738, 0.0
      %v3419 = vmax.f32 %v3089, 0.0
      %v3420 = vmax.f32 %v3091, 0.0
      %v3421 = vmax.f32 %v2034, 0.0
      %v3422 = vmax.f32 %v2036, 0.0
      %v3423 = vmax.f32 %v2387, 0.0
      %v3424 = vmax.f32 %v2389, 0.0
      %v3425 = vmax.f32 %v2740, 0.0
      %v3426 = vmax.f32 %v2742, 0.0
      %v3427 = vmax.f32 %v3093, 0.0
      %v3428 = vmax.f32 %v3095, 0.0
      %v3429 = vmax.f32 %v2040, 0.0
      %v3430 = vmax.f32 %v2042, 0.0
      %v3431 = vmax.f32 %v2393, 0.0
      %v3432 = vmax.f32 %v2395, 0.0
      %v3433 = vmax.f32 %v2746, 0.0
      %v3434 = vmax.f32 %v2748, 0.0
      %v3435 = vmax.f32 %v3099, 0.0
      %v3436 = vmax.f32 %v3101, 0.0
      %v3437 = vmax.f32 %v2044, 0.0
      %v3438 = vmax.f32 %v2046, 0.0
      %v3439 = vmax.f32 %v2397, 0.0
      %v3440 = vmax.f32 %v2399, 0.0
      %v3441 = vmax.f32 %v2750, 0.0
      %v3442 = vmax.f32 %v2752, 0.0
      %v3443 = vmax.f32 %v3103, 0.0
      %v3444 = vmax.f32 %v3105, 0.0
      %v3445 = vmax.f32 %v2050, 0.0
      %v3446 = vmax.f32 %v2052, 0.0
      %v3447 = vmax.f32 %v2403, 0.0
      %v3448 = vmax.f32 %v2405, 0.0
      %v3449 = vmax.f32 %v2756, 0.0
      %v3450 = vmax.f32 %v2758, 0.0
      %v3451 = vmax.f32 %v3109, 0.0
      %v3452 = vmax.f32 %v3111, 0.0
      %v3453 = vmax.f32 %v2054, 0.0
      %v3454 = vmax.f32 %v2056, 0.0
      %v3455 = vmax.f32 %v2407, 0.0
      %v3456 = vmax.f32 %v2409, 0.0
      %v3457 = vmax.f32 %v2760, 0.0
      %v3458 = vmax.f32 %v2762, 0.0
      %v3459 = vmax.f32 %v3113, 0.0
      %v3460 = vmax.f32 %v3115, 0.0
      %v3461 = vmax.f32 %v2060, 0.0
      %v3462 = vmax.f32 %v2062, 0.0
      %v3463 = vmax.f32 %v2413, 0.0
      %v3464 = vmax.f32 %v2415, 0.0
      %v3465 = vmax.f32 %v2766, 0.0
      %v3466 = vmax.f32 %v2768, 0.0
      %v3467 = vmax.f32 %v3119, 0.0
      %v3468 = vmax.f32 %v3121, 0.0
      %v3469 = vmax.f32 %v2064, 0.0
      %v3470 = vmax.f32 %v2066, 0.0
      %v3471 = vmax.f32 %v2417, 0.0
      %v3472 = vmax.f32 %v2419, 0.0
      %v3473 = vmax.f32 %v2770, 0.0
      %v3474 = vmax.f32 %v2772, 0.0
      %v3475 = vmax.f32 %v3123, 0.0
      %v3476 = vmax.f32 %v3125, 0.0
      %v3477 = vmax.f32 %v2070, 0.0
      %v3478 = vmax.f32 %v2072, 0.0
      %v3479 = vmax.f32 %v2423, 0.0
      %v3480 = vmax.f32 %v2425, 0.0
      %v3481 = vmax.f32 %v2776, 0.0
      %v3482 = vmax.f32 %v2778, 0.0
      %v3483 = vmax.f32 %v3129, 0.0
      %v3484 = vmax.f32 %v3131, 0.0
      %v3485 = vmax.f32 %v2074, 0.0
      %v3486 = vmax.f32 %v2076, 0.0
      %v3487 = vmax.f32 %v2427, 0.0
      %v3488 = vmax.f32 %v2429, 0.0
      %v3489 = vmax.f32 %v2780, 0.0
      %v3490 = vmax.f32 %v2782, 0.0
      %v3491 = vmax.f32 %v3133, 0.0
      %v3492 = vmax.f32 %v3135, 0.0
      %v3493 = vmax.f32 %v2080, 0.0
      %v3494 = vmax.f32 %v2082, 0.0
      %v3495 = vmax.f32 %v2433, 0.0
      %v3496 = vmax.f32 %v2435, 0.0
      %v3497 = vmax.f32 %v2786, 0.0
      %v3498 = vmax.f32 %v2788, 0.0
      %v3499 = vmax.f32 %v3139, 0.0
      %v3500 = vmax.f32 %v3141, 0.0
      %v3501 = vmax.f32 %v2084, 0.0
      %v3502 = vmax.f32 %v2086, 0.0
      %v3503 = vmax.f32 %v2437, 0.0
      %v3504 = vmax.f32 %v2439, 0.0
      %v3505 = vmax.f32 %v2790, 0.0
      %v3506 = vmax.f32 %v2792, 0.0
      %v3507 = vmax.f32 %v3143, 0.0
      %v3508 = vmax.f32 %v3145, 0.0
      %v3509 = vmax.f32 %v2090, 0.0
      %v3510 = vmax.f32 %v2092, 0.0
      %v3511 = vmax.f32 %v2443, 0.0
      %v3512 = vmax.f32 %v2445, 0.0
      %v3513 = vmax.f32 %v2796, 0.0
      %v3514 = vmax.f32 %v2798, 0.0
      %v3515 = vmax.f32 %v3149, 0.0
      %v3516 = vmax.f32 %v3151, 0.0
      %v3517 = vmax.f32 %v2094, 0.0
      %v3518 = vmax.f32 %v2096, 0.0
      %v3519 = vmax.f32 %v2447, 0.0
      %v3520 = vmax.f32 %v2449, 0.0
      %v3521 = vmax.f32 %v2800, 0.0
      %v3522 = vmax.f32 %v2802, 0.0
      %v3523 = vmax.f32 %v3153, 0.0
      %v3524 = vmax.f32 %v3155, 0.0
      %v3525 = vmax.f32 %v2100, 0.0
      %v3526 = vmax.f32 %v2102, 0.0
      %v3527 = vmax.f32 %v2453, 0.0
      %v3528 = vmax.f32 %v2455, 0.0
      %v3529 = vmax.f32 %v2806, 0.0
      %v3530 = vmax.f32 %v2808, 0.0
      %v3531 = vmax.f32 %v3159, 0.0
      %v3532 = vmax.f32 %v3161, 0.0
      %v3533 = vmax.f32 %v2104, 0.0
      %v3534 = vmax.f32 %v2106, 0.0
      %v3535 = vmax.f32 %v2457, 0.0
      %v3536 = vmax.f32 %v2459, 0.0
      %v3537 = vmax.f32 %v2810, 0.0
      %v3538 = vmax.f32 %v2812, 0.0
      %v3539 = vmax.f32 %v3163, 0.0
      %v3540 = vmax.f32 %v3165, 0.0
      %v3541 = vmax.f32 %v2110, 0.0
      %v3542 = vmax.f32 %v2112, 0.0
      %v3543 = vmax.f32 %v2463, 0.0
      %v3544 = vmax.f32 %v2465, 0.0
      %v3545 = vmax.f32 %v2816, 0.0
      %v3546 = vmax.f32 %v2818, 0.0
      %v3547 = vmax.f32 %v3169, 0.0
      %v3548 = vmax.f32 %v3171, 0.0
      %v3549 = vmax.f32 %v2114, 0.0
      %v3550 = vmax.f32 %v2116, 0.0
      %v3551 = vmax.f32 %v2467, 0.0
      %v3552 = vmax.f32 %v2469, 0.0
      %v3553 = vmax.f32 %v2820, 0.0
      %v3554 = vmax.f32 %v2822, 0.0
      %v3555 = vmax.f32 %v3173, 0.0
      %v3556 = vmax.f32 %v3175, 0.0
      %v3557 = vmax.f32 %v2120, 0.0
      %v3558 = vmax.f32 %v2122, 0.0
      %v3559 = vmax.f32 %v2473, 0.0
      %v3560 = vmax.f32 %v2475, 0.0
      %v3561 = vmax.f32 %v2826, 0.0
      %v3562 = vmax.f32 %v2828, 0.0
      %v3563 = vmax.f32 %v3179, 0.0
      %v3564 = vmax.f32 %v3181, 0.0
      %v3565 = vmax.f32 %v2124, 0.0
      %v3566 = vmax.f32 %v2126, 0.0
      %v3567 = vmax.f32 %v2477, 0.0
      %v3568 = vmax.f32 %v2479, 0.0
      %v3569 = vmax.f32 %v2830, 0.0
      %v3570 = vmax.f32 %v2832, 0.0
      %v3571 = vmax.f32 %v3183, 0.0
      %v3572 = vmax.f32 %v3185, 0.0
      %v3573 = vmax.f32 %v2130, 0.0
      %v3574 = vmax.f32 %v2132, 0.0
      %v3575 = vmax.f32 %v2483, 0.0
      %v3576 = vmax.f32 %v2485, 0.0
      %v3577 = vmax.f32 %v2836, 0.0
      %v3578 = vmax.f32 %v2838, 0.0
      %v3579 = vmax.f32 %v3189, 0.0
      %v3580 = vmax.f32 %v3191, 0.0
      %v3581 = vmax.f32 %v2134, 0.0
      %v3582 = vmax.f32 %v2136, 0.0
      %v3583 = vmax.f32 %v2487, 0.0
      %v3584 = vmax.f32 %v2489, 0.0
      %v3585 = vmax.f32 %v2840, 0.0
      %v3586 = vmax.f32 %v2842, 0.0
      %v3587 = vmax.f32 %v3193, 0.0
      %v3588 = vmax.f32 %v3195, 0.0
      %v3589 = vmax.f32 %v2140, 0.0
      %v3590 = vmax.f32 %v2142, 0.0
      %v3591 = vmax.f32 %v2493, 0.0
      %v3592 = vmax.f32 %v2495, 0.0
      %v3593 = vmax.f32 %v2846, 0.0
      %v3594 = vmax.f32 %v2848, 0.0
      %v3595 = vmax.f32 %v3199, 0.0
      %v3596 = vmax.f32 %v3201, 0.0
      %v3597 = vmax.f32 %v2144, 0.0
      %v3598 = vmax.f32 %v2146, 0.0
      %v3599 = vmax.f32 %v2497, 0.0
      %v3600 = vmax.f32 %v2499, 0.0
      %v3601 = vmax.f32 %v2850, 0.0
      %v3602 = vmax.f32 %v2852, 0.0
      %v3603 = vmax.f32 %v3203, 0.0
      %v3604 = vmax.f32 %v3205, 0.0
      %v3605 = vmax.f32 %v2150, 0.0
      %v3606 = vmax.f32 %v2152, 0.0
      %v3607 = vmax.f32 %v2503, 0.0
      %v3608 = vmax.f32 %v2505, 0.0
      %v3609 = vmax.f32 %v2856, 0.0
      %v3610 = vmax.f32 %v2858, 0.0
      %v3611 = vmax.f32 %v3209, 0.0
      %v3612 = vmax.f32 %v3211, 0.0
      %v3613 = vmax.f32 %v2154, 0.0
      %v3614 = vmax.f32 %v2156, 0.0
      %v3615 = vmax.f32 %v2507, 0.0
      %v3616 = vmax.f32 %v2509, 0.0
      %v3617 = vmax.f32 %v2860, 0.0
      %v3618 = vmax.f32 %v2862, 0.0
      %v3619 = vmax.f32 %v3213, 0.0
      %v3620 = vmax.f32 %v3215, 0.0
      %v3621 = vmax.f32 %v2160, 0.0
      %v3622 = vmax.f32 %v2162, 0.0
      %v3623 = vmax.f32 %v2513, 0.0
      %v3624 = vmax.f32 %v2515, 0.0
      %v3625 = vmax.f32 %v2866, 0.0
      %v3626 = vmax.f32 %v2868, 0.0
      %v3627 = vmax.f32 %v3219, 0.0
      %v3628 = vmax.f32 %v3221, 0.0
      %v3629 = vmax.f32 %v2164, 0.0
      %v3630 = vmax.f32 %v2166, 0.0
      %v3631 = vmax.f32 %v2517, 0.0
      %v3632 = vmax.f32 %v2519, 0.0
      %v3633 = vmax.f32 %v2870, 0.0
      %v3634 = vmax.f32 %v2872, 0.0
      %v3635 = vmax.f32 %v3223, 0.0
      %v3636 = vmax.f32 %v3225, 0.0
      %v3637 = vmax.f32 %v2170, 0.0
      %v3638 = vmax.f32 %v2172, 0.0
      %v3639 = vmax.f32 %v2523, 0.0
      %v3640 = vmax.f32 %v2525, 0.0
      %v3641 = vmax.f32 %v2876, 0.0
      %v3642 = vmax.f32 %v2878, 0.0
      %v3643 = vmax.f32 %v3229, 0.0
      %v3644 = vmax.f32 %v3231, 0.0
      %v3645 = vmax.f32 %v2174, 0.0
      %v3646 = vmax.f32 %v2176, 0.0
      %v3647 = vmax.f32 %v2527, 0.0
      %v3648 = vmax.f32 %v2529, 0.0
      %v3649 = vmax.f32 %v2880, 0.0
      %v3650 = vmax.f32 %v2882, 0.0
      %v3651 = vmax.f32 %v3233, 0.0
      %v3652 = vmax.f32 %v3235, 0.0
      %v3653 = vmax.f32 %v2180, 0.0
      %v3654 = vmax.f32 %v2182, 0.0
      %v3655 = vmax.f32 %v2533, 0.0
      %v3656 = vmax.f32 %v2535, 0.0
      %v3657 = vmax.f32 %v2886, 0.0
      %v3658 = vmax.f32 %v2888, 0.0
      %v3659 = vmax.f32 %v3239, 0.0
      %v3660 = vmax.f32 %v3241, 0.0
      %v3661 = vmax.f32 %v2184, 0.0
      %v3662 = vmax.f32 %v2186, 0.0
      %v3663 = vmax.f32 %v2537, 0.0
      %v3664 = vmax.f32 %v2539, 0.0
      %v3665 = vmax.f32 %v2890, 0.0
      %v3666 = vmax.f32 %v2892, 0.0
      %v3667 = vmax.f32 %v3243, 0.0
      %v3668 = vmax.f32 %v3245, 0.0
      %v3669 = vmax.f32 %v2190, 0.0
      %v3670 = vmax.f32 %v2192, 0.0
      %v3671 = vmax.f32 %v2543, 0.0
      %v3672 = vmax.f32 %v2545, 0.0
      %v3673 = vmax.f32 %v2896, 0.0
      %v3674 = vmax.f32 %v2898, 0.0
      %v3675 = vmax.f32 %v3249, 0.0
      %v3676 = vmax.f32 %v3251, 0.0
      %v3677 = vmax.f32 %v2194, 0.0
      %v3678 = vmax.f32 %v2196, 0.0
      %v3679 = vmax.f32 %v2547, 0.0
      %v3680 = vmax.f32 %v2549, 0.0
      %v3681 = vmax.f32 %v2900, 0.0
      %v3682 = vmax.f32 %v2902, 0.0
      %v3683 = vmax.f32 %v3253, 0.0
      %v3684 = vmax.f32 %v3255, 0.0
      %v3685 = vmax.f32 %v2200, 0.0
      %v3686 = vmax.f32 %v2202, 0.0
      %v3687 = vmax.f32 %v2553, 0.0
      %v3688 = vmax.f32 %v2555, 0.0
      %v3689 = vmax.f32 %v2906, 0.0
      %v3690 = vmax.f32 %v2908, 0.0
      %v3691 = vmax.f32 %v3259, 0.0
      %v3692 = vmax.f32 %v3261, 0.0
      %v3693 = vmax.f32 %v2204, 0.0
      %v3694 = vmax.f32 %v2206, 0.0
      %v3695 = vmax.f32 %v2557, 0.0
      %v3696 = vmax.f32 %v2559, 0.0
      %v3697 = vmax.f32 %v2910, 0.0
      %v3698 = vmax.f32 %v2912, 0.0
      %v3699 = vmax.f32 %v3263, 0.0
      %v3700 = vmax.f32 %v3265, 0.0
      %v3701 = vmax.f32 %v2210, 0.0
      %v3702 = vmax.f32 %v2212, 0.0
      %v3703 = vmax.f32 %v2563, 0.0
      %v3704 = vmax.f32 %v2565, 0.0
      %v3705 = vmax.f32 %v2916, 0.0
      %v3706 = vmax.f32 %v2918, 0.0
      %v3707 = vmax.f32 %v3269, 0.0
      %v3708 = vmax.f32 %v3271, 0.0
      %v3709 = vmax.f32 %v2214, 0.0
      %v3710 = vmax.f32 %v2216, 0.0
      %v3711 = vmax.f32 %v2567, 0.0
      %v3712 = vmax.f32 %v2569, 0.0
      %v3713 = vmax.f32 %v2920, 0.0
      %v3714 = vmax.f32 %v2922, 0.0
      %v3715 = vmax.f32 %v3273, 0.0
      %v3716 = vmax.f32 %v3275, 0.0
      %v3717 = vmax.f32 %v2220, 0.0
      %v3718 = vmax.f32 %v2222, 0.0
      %v3719 = vmax.f32 %v2573, 0.0
      %v3720 = vmax.f32 %v2575, 0.0
      %v3721 = vmax.f32 %v2926, 0.0
      %v3722 = vmax.f32 %v2928, 0.0
      %v3723 = vmax.f32 %v3279, 0.0
      %v3724 = vmax.f32 %v3281, 0.0
      %v3725 = vmax.f32 %v2224, 0.0
      %v3726 = vmax.f32 %v2226, 0.0
      %v3727 = vmax.f32 %v2577, 0.0
      %v3728 = vmax.f32 %v2579, 0.0
      %v3729 = vmax.f32 %v2930, 0.0
      %v3730 = vmax.f32 %v2932, 0.0
      %v3731 = vmax.f32 %v3283, 0.0
      %v3732 = vmax.f32 %v3285, 0.0
      %v3733 = vmax.f32 %v2230, 0.0
      %v3734 = vmax.f32 %v2232, 0.0
      %v3735 = vmax.f32 %v2583, 0.0
      %v3736 = vmax.f32 %v2585, 0.0
      %v3737 = vmax.f32 %v2936, 0.0
      %v3738 = vmax.f32 %v2938, 0.0
      %v3739 = vmax.f32 %v3289, 0.0
      %v3740 = vmax.f32 %v3291, 0.0
      %v3741 = vmax.f32 %v2234, 0.0
      %v3742 = vmax.f32 %v2236, 0.0
      %v3743 = vmax.f32 %v2587, 0.0
      %v3744 = vmax.f32 %v2589, 0.0
      %v3745 = vmax.f32 %v2940, 0.0
      %v3746 = vmax.f32 %v2942, 0.0
      %v3747 = vmax.f32 %v3293, 0.0
      %v3748 = vmax.f32 %v3295, 0.0
      %v3749 = vmax.f32 %v2240, 0.0
      %v3750 = vmax.f32 %v2242, 0.0
      %v3751 = vmax.f32 %v2593, 0.0
      %v3752 = vmax.f32 %v2595, 0.0
      %v3753 = vmax.f32 %v2946, 0.0
      %v3754 = vmax.f32 %v2948, 0.0
      %v3755 = vmax.f32 %v3299, 0.0
      %v3756 = vmax.f32 %v3301, 0.0
      %v3757 = vmax.f32 %v2244, 0.0
      %v3758 = vmax.f32 %v2246, 0.0
      %v3759 = vmax.f32 %v2597, 0.0
      %v3760 = vmax.f32 %v2599, 0.0
      %v3761 = vmax.f32 %v2950, 0.0
      %v3762 = vmax.f32 %v2952, 0.0
      %v3763 = vmax.f32 %v3303, 0.0
      %v3764 = vmax.f32 %v3305, 0.0
      %v3765 = vmax.f32 %v2250, 0.0
      %v3766 = vmax.f32 %v2252, 0.0
      %v3767 = vmax.f32 %v2603, 0.0
      %v3768 = vmax.f32 %v2605, 0.0
      %v3769 = vmax.f32 %v2956, 0.0
      %v3770 = vmax.f32 %v2958, 0.0
      %v3771 = vmax.f32 %v3309, 0.0
      %v3772 = vmax.f32 %v3311, 0.0
      %v3773 = vmax.f32 %v2254, 0.0
      %v3774 = vmax.f32 %v2256, 0.0
      %v3775 = vmax.f32 %v2607, 0.0
      %v3776 = vmax.f32 %v2609, 0.0
      %v3777 = vmax.f32 %v2960, 0.0
      %v3778 = vmax.f32 %v2962, 0.0
      %v3779 = vmax.f32 %v3313, 0.0
      %v3780 = vmax.f32 %v3315, 0.0
      %v3781 = vmax.f32 %v2260, 0.0
      %v3782 = vmax.f32 %v2262, 0.0
      %v3783 = vmax.f32 %v2613, 0.0
      %v3784 = vmax.f32 %v2615, 0.0
      %v3785 = vmax.f32 %v2966, 0.0
      %v3786 = vmax.f32 %v2968, 0.0
      %v3787 = vmax.f32 %v3319, 0.0
      %v3788 = vmax.f32 %v3321, 0.0
      %v3789 = vmax.f32 %v2264, 0.0
      %v3790 = vmax.f32 %v2266, 0.0
      %v3791 = vmax.f32 %v2617, 0.0
      %v3792 = vmax.f32 %v2619, 0.0
      %v3793 = vmax.f32 %v2970, 0.0
      %v3794 = vmax.f32 %v2972, 0.0
      %v3795 = vmax.f32 %v3323, 0.0
      %v3796 = vmax.f32 %v3325, 0.0
      %v3797 = vmax.f32 %v2270, 0.0
      %v3798 = vmax.f32 %v2272, 0.0
      %v3799 = vmax.f32 %v2623, 0.0
      %v3800 = vmax.f32 %v2625, 0.0
      %v3801 = vmax.f32 %v2976, 0.0
      %v3802 = vmax.f32 %v2978, 0.0
      %v3803 = vmax.f32 %v3329, 0.0
      %v3804 = vmax.f32 %v3331, 0.0
      %v3805 = vmax.f32 %v2274, 0.0
      %v3806 = vmax.f32 %v2276, 0.0
      %v3807 = vmax.f32 %v2627, 0.0
      %v3808 = vmax.f32 %v2629, 0.0
      %v3809 = vmax.f32 %v2980, 0.0
      %v3810 = vmax.f32 %v2982, 0.0
      %v3811 = vmax.f32 %v3333, 0.0
      %v3812 = vmax.f32 %v3335, 0.0
      %v3813 = vmax.f32 %v2280, 0.0
      %v3814 = vmax.f32 %v2282, 0.0
      %v3815 = vmax.f32 %v2633, 0.0
      %v3816 = vmax.f32 %v2635, 0.0
      %v3817 = vmax.f32 %v2986, 0.0
      %v3818 = vmax.f32 %v2988, 0.0
      %v3819 = vmax.f32 %v3339, 0.0
      %v3820 = vmax.f32 %v3341, 0.0
      %v3821 = vmax.f32 %v2284, 0.0
      %v3822 = vmax.f32 %v2286, 0.0
      %v3823 = vmax.f32 %v2637, 0.0
      %v3824 = vmax.f32 %v2639, 0.0
      %v3825 = vmax.f32 %v2990, 0.0
      %v3826 = vmax.f32 %v2992, 0.0
      %v3827 = vmax.f32 %v3343, 0.0
      %v3828 = vmax.f32 %v3345, 0.0
      %v3829 = vmax.f32 %v2290, 0.0
      %v3830 = vmax.f32 %v2292, 0.0
      %v3831 = vmax.f32 %v2643, 0.0
      %v3832 = vmax.f32 %v2645, 0.0
      %v3833 = vmax.f32 %v2996, 0.0
      %v3834 = vmax.f32 %v2998, 0.0
      %v3835 = vmax.f32 %v3349, 0.0
      %v3836 = vmax.f32 %v3351, 0.0
      %v3837 = vmax.f32 %v2294, 0.0
      %v3838 = vmax.f32 %v2296, 0.0
      %v3839 = vmax.f32 %v2647, 0.0
      %v3840 = vmax.f32 %v2649, 0.0
      %v3841 = vmax.f32 %v3000, 0.0
      %v3842 = vmax.f32 %v3002, 0.0
      %v3843 = vmax.f32 %v3353, 0.0
      %v3844 = vmax.f32 %v3355, 0.0
      %v3845 = vmax.f32 %v2300, 0.0
      %v3846 = vmax.f32 %v2302, 0.0
      %v3847 = vmax.f32 %v2653, 0.0
      %v3848 = vmax.f32 %v2655, 0.0
      %v3849 = vmax.f32 %v3006, 0.0
      %v3850 = vmax.f32 %v3008, 0.0
      %v3851 = vmax.f32 %v3359, 0.0
      %v3852 = vmax.f32 %v3361, 0.0
      %v3853 = vmax.f32 %v2304, 0.0
      %v3854 = vmax.f32 %v2306, 0.0
      %v3855 = vmax.f32 %v2657, 0.0
      %v3856 = vmax.f32 %v2659, 0.0
      %v3857 = vmax.f32 %v3010, 0.0
      %v3858 = vmax.f32 %v3012, 0.0
      %v3859 = vmax.f32 %v3363, 0.0
      %v3860 = vmax.f32 %v3365, 0.0
      %v3861 = vmax.f32 %v2310, 0.0
      %v3862 = vmax.f32 %v2312, 0.0
      %v3863 = vmax.f32 %v2663, 0.0
      %v3864 = vmax.f32 %v2665, 0.0
      %v3865 = vmax.f32 %v3016, 0.0
      %v3866 = vmax.f32 %v3018, 0.0
      %v3867 = vmax.f32 %v3369, 0.0
      %v3868 = vmax.f32 %v3371, 0.0
      %v3869 = vmax.f32 %v2314, 0.0
      %v3870 = vmax.f32 %v2316, 0.0
      %v3871 = vmax.f32 %v2667, 0.0
      %v3872 = vmax.f32 %v2669, 0.0
      %v3873 = vmax.f32 %v3020, 0.0
      %v3874 = vmax.f32 %v3022, 0.0
      %v3875 = vmax.f32 %v3373, 0.0
      %v3876 = vmax.f32 %v3375, 0.0
      %v3877 = vmax.f32 %v2320, 0.0
      %v3878 = vmax.f32 %v2322, 0.0
      %v3879 = vmax.f32 %v2673, 0.0
      %v3880 = vmax.f32 %v2675, 0.0
      %v3881 = vmax.f32 %v3026, 0.0
      %v3882 = vmax.f32 %v3028, 0.0
      %v3883 = vmax.f32 %v3379, 0.0
      %v3884 = vmax.f32 %v3381, 0.0
      %v3885 = vmax.f32 %v2324, 0.0
      %v3886 = vmax.f32 %v2326, 0.0
      %v3887 = vmax.f32 %v2677, 0.0
      %v3888 = vmax.f32 %v2679, 0.0
      %v3889 = vmax.f32 %v3030, 0.0
      %v3890 = vmax.f32 %v3032, 0.0
      %v3891 = vmax.f32 %v3383, 0.0
      %v3892 = vmax.f32 %v3385, 0.0
      %v3893 = vmax.f32 %v2330, 0.0
      %v3894 = vmax.f32 %v2332, 0.0
      %v3895 = vmax.f32 %v2683, 0.0
      %v3896 = vmax.f32 %v2685, 0.0
      %v3897 = vmax.f32 %v3036, 0.0
      %v3898 = vmax.f32 %v3038, 0.0
      %v3899 = vmax.f32 %v3389, 0.0
      %v3900 = vmax.f32 %v3391, 0.0
      %v3901 = vmax.f32 %v2334, 0.0
      %v3902 = vmax.f32 %v2336, 0.0
      %v3903 = vmax.f32 %v2687, 0.0
      %v3904 = vmax.f32 %v2689, 0.0
      %v3905 = vmax.f32 %v3040, 0.0
      %v3906 = vmax.f32 %v3042, 0.0
      %v3907 = vmax.f32 %v3393, 0.0
      %v3908 = vmax.f32 %v3395, 0.0
      %3909 = vst [vmem:[%s460] sm:$0xff] %v3397
      %3910 = vst [vmem:[%s460 + $0x8] sm:$0xff] %v3398
      %3911 = vst [vmem:[%s460 + $0x10] sm:$0xff] %v3399
      %3912 = vst [vmem:[%s460 + $0x18] sm:$0xff] %v3400
      %3913 = vst [vmem:[%s460 + $0x20] sm:$0xff] %v3401
      %3914 = vst [vmem:[%s460 + $0x28] sm:$0xff] %v3402
      %3915 = vst [vmem:[%s460 + $0x30] sm:$0xff] %v3403
      %3916 = vst [vmem:[%s460 + $0x38] sm:$0xff] %v3404
      %3917 = vst [vmem:[%s460 + $0x40] sm:$0xff] %v3405
      %3918 = vst [vmem:[%s460 + $0x48] sm:$0xff] %v3406
      %3919 = vst [vmem:[%s460 + $0x50] sm:$0xff] %v3407
      %3920 = vst [vmem:[%s460 + $0x58] sm:$0xff] %v3408
      %3921 = vst [vmem:[%s460 + $0x60] sm:$0xff] %v3409
      %3922 = vst [vmem:[%s460 + $0x68] sm:$0xff] %v3410
      %3923 = vst [vmem:[%s460 + $0x70] sm:$0xff] %v3411
      %3924 = vst [vmem:[%s460 + $0x78] sm:$0xff] %v3412
      %3925 = vst [vmem:[%s460 + $0x80] sm:$0xff] %v3413
      %3926 = vst [vmem:[%s460 + $0x88] sm:$0xff] %v3414
      %3927 = vst [vmem:[%s460 + $0x90] sm:$0xff] %v3415
      %3928 = vst [vmem:[%s460 + $0x98] sm:$0xff] %v3416
      %3929 = vst [vmem:[%s460 + $0xa0] sm:$0xff] %v3417
      %3930 = vst [vmem:[%s460 + $0xa8] sm:$0xff] %v3418
      %3931 = vst [vmem:[%s460 + $0xb0] sm:$0xff] %v3419
      %3932 = vst [vmem:[%s460 + $0xb8] sm:$0xff] %v3420
      %3933 = vst [vmem:[%s460 + $0xc0] sm:$0xff] %v3421
      %3934 = vst [vmem:[%s460 + $0xc8] sm:$0xff] %v3422
      %3935 = vst [vmem:[%s460 + $0xd0] sm:$0xff] %v3423
      %3936 = vst [vmem:[%s460 + $0xd8] sm:$0xff] %v3424
      %3937 = vst [vmem:[%s460 + $0xe0] sm:$0xff] %v3425
      %3938 = vst [vmem:[%s460 + $0xe8] sm:$0xff] %v3426
      %3939 = vst [vmem:[%s460 + $0xf0] sm:$0xff] %v3427
      %3940 = vst [vmem:[%s460 + $0xf8] sm:$0xff] %v3428
      %3941 = vst [vmem:[%s460 + $0x100] sm:$0xff] %v3429
      %3942 = vst [vmem:[%s460 + $0x108] sm:$0xff] %v3430
      %3943 = vst [vmem:[%s460 + $0x110] sm:$0xff] %v3431
      %3944 = vst [vmem:[%s460 + $0x118] sm:$0xff] %v3432
      %3945 = vst [vmem:[%s460 + $0x120] sm:$0xff] %v3433
      %3946 = vst [vmem:[%s460 + $0x128] sm:$0xff] %v3434
      %3947 = vst [vmem:[%s460 + $0x130] sm:$0xff] %v3435
      %3948 = vst [vmem:[%s460 + $0x138] sm:$0xff] %v3436
      %3949 = vst [vmem:[%s460 + $0x140] sm:$0xff] %v3437
      %3950 = vst [vmem:[%s460 + $0x148] sm:$0xff] %v3438
      %3951 = vst [vmem:[%s460 + $0x150] sm:$0xff] %v3439
      %3952 = vst [vmem:[%s460 + $0x158] sm:$0xff] %v3440
      %3953 = vst [vmem:[%s460 + $0x160] sm:$0xff] %v3441
      %3954 = vst [vmem:[%s460 + $0x168] sm:$0xff] %v3442
      %3955 = vst [vmem:[%s460 + $0x170] sm:$0xff] %v3443
      %3956 = vst [vmem:[%s460 + $0x178] sm:$0xff] %v3444
      %3957 = vst [vmem:[%s460 + $0x180] sm:$0xff] %v3445
      %3958 = vst [vmem:[%s460 + $0x188] sm:$0xff] %v3446
      %3959 = vst [vmem:[%s460 + $0x190] sm:$0xff] %v3447
      %3960 = vst [vmem:[%s460 + $0x198] sm:$0xff] %v3448
      %3961 = vst [vmem:[%s460 + $0x1a0] sm:$0xff] %v3449
      %3962 = vst [vmem:[%s460 + $0x1a8] sm:$0xff] %v3450
      %3963 = vst [vmem:[%s460 + $0x1b0] sm:$0xff] %v3451
      %3964 = vst [vmem:[%s460 + $0x1b8] sm:$0xff] %v3452
      %3965 = vst [vmem:[%s460 + $0x1c0] sm:$0xff] %v3453
      %3966 = vst [vmem:[%s460 + $0x1c8] sm:$0xff] %v3454
      %3967 = vst [vmem:[%s460 + $0x1d0] sm:$0xff] %v3455
      %3968 = vst [vmem:[%s460 + $0x1d8] sm:$0xff] %v3456
      %3969 = vst [vmem:[%s460 + $0x1e0] sm:$0xff] %v3457
      %3970 = vst [vmem:[%s460 + $0x1e8] sm:$0xff] %v3458
      %3971 = vst [vmem:[%s460 + $0x1f0] sm:$0xff] %v3459
      %3972 = vst [vmem:[%s460 + $0x1f8] sm:$0xff] %v3460
      %3973 = vst [vmem:[%s460 + $0x200] sm:$0xff] %v3461
      %3974 = vst [vmem:[%s460 + $0x208] sm:$0xff] %v3462
      %3975 = vst [vmem:[%s460 + $0x210] sm:$0xff] %v3463
      %3976 = vst [vmem:[%s460 + $0x218] sm:$0xff] %v3464
      %3977 = vst [vmem:[%s460 + $0x220] sm:$0xff] %v3465
      %3978 = vst [vmem:[%s460 + $0x228] sm:$0xff] %v3466
      %3979 = vst [vmem:[%s460 + $0x230] sm:$0xff] %v3467
      %3980 = vst [vmem:[%s460 + $0x238] sm:$0xff] %v3468
      %3981 = vst [vmem:[%s460 + $0x240] sm:$0xff] %v3469
      %3982 = vst [vmem:[%s460 + $0x248] sm:$0xff] %v3470
      %3983 = vst [vmem:[%s460 + $0x250] sm:$0xff] %v3471
      %3984 = vst [vmem:[%s460 + $0x258] sm:$0xff] %v3472
      %3985 = vst [vmem:[%s460 + $0x260] sm:$0xff] %v3473
      %3986 = vst [vmem:[%s460 + $0x268] sm:$0xff] %v3474
      %3987 = vst [vmem:[%s460 + $0x270] sm:$0xff] %v3475
      %3988 = vst [vmem:[%s460 + $0x278] sm:$0xff] %v3476
      %3989 = vst [vmem:[%s460 + $0x280] sm:$0xff] %v3477
      %3990 = vst [vmem:[%s460 + $0x288] sm:$0xff] %v3478
      %3991 = vst [vmem:[%s460 + $0x290] sm:$0xff] %v3479
      %3992 = vst [vmem:[%s460 + $0x298] sm:$0xff] %v3480
      %3993 = vst [vmem:[%s460 + $0x2a0] sm:$0xff] %v3481
      %3994 = vst [vmem:[%s460 + $0x2a8] sm:$0xff] %v3482
      %3995 = vst [vmem:[%s460 + $0x2b0] sm:$0xff] %v3483
      %3996 = vst [vmem:[%s460 + $0x2b8] sm:$0xff] %v3484
      %3997 = vst [vmem:[%s460 + $0x2c0] sm:$0xff] %v3485
      %3998 = vst [vmem:[%s460 + $0x2c8] sm:$0xff] %v3486
      %3999 = vst [vmem:[%s460 + $0x2d0] sm:$0xff] %v3487
      %4000 = vst [vmem:[%s460 + $0x2d8] sm:$0xff] %v3488
      %4001 = vst [vmem:[%s460 + $0x2e0] sm:$0xff] %v3489
      %4002 = vst [vmem:[%s460 + $0x2e8] sm:$0xff] %v3490
      %4003 = vst [vmem:[%s460 + $0x2f0] sm:$0xff] %v3491
      %4004 = vst [vmem:[%s460 + $0x2f8] sm:$0xff] %v3492
      %4005 = vst [vmem:[%s460 + $0x300] sm:$0xff] %v3493
      %4006 = vst [vmem:[%s460 + $0x308] sm:$0xff] %v3494
      %4007 = vst [vmem:[%s460 + $0x310] sm:$0xff] %v3495
      %4008 = vst [vmem:[%s460 + $0x318] sm:$0xff] %v3496
      %4009 = vst [vmem:[%s460 + $0x320] sm:$0xff] %v3497
      %4010 = vst [vmem:[%s460 + $0x328] sm:$0xff] %v3498
      %4011 = vst [vmem:[%s460 + $0x330] sm:$0xff] %v3499
      %4012 = vst [vmem:[%s460 + $0x338] sm:$0xff] %v3500
      %4013 = vst [vmem:[%s460 + $0x340] sm:$0xff] %v3501
      %4014 = vst [vmem:[%s460 + $0x348] sm:$0xff] %v3502
      %4015 = vst [vmem:[%s460 + $0x350] sm:$0xff] %v3503
      %4016 = vst [vmem:[%s460 + $0x358] sm:$0xff] %v3504
      %4017 = vst [vmem:[%s460 + $0x360] sm:$0xff] %v3505
      %4018 = vst [vmem:[%s460 + $0x368] sm:$0xff] %v3506
      %4019 = vst [vmem:[%s460 + $0x370] sm:$0xff] %v3507
      %4020 = vst [vmem:[%s460 + $0x378] sm:$0xff] %v3508
      %4021 = vst [vmem:[%s460 + $0x380] sm:$0xff] %v3509
      %4022 = vst [vmem:[%s460 + $0x388] sm:$0xff] %v3510
      %4023 = vst [vmem:[%s460 + $0x390] sm:$0xff] %v3511
      %4024 = vst [vmem:[%s460 + $0x398] sm:$0xff] %v3512
      %4025 = vst [vmem:[%s460 + $0x3a0] sm:$0xff] %v3513
      %4026 = vst [vmem:[%s460 + $0x3a8] sm:$0xff] %v3514
      %4027 = vst [vmem:[%s460 + $0x3b0] sm:$0xff] %v3515
      %4028 = vst [vmem:[%s460 + $0x3b8] sm:$0xff] %v3516
      %4029 = vst [vmem:[%s460 + $0x3c0] sm:$0xff] %v3517
      %4030 = vst [vmem:[%s460 + $0x3c8] sm:$0xff] %v3518
      %4031 = vst [vmem:[%s460 + $0x3d0] sm:$0xff] %v3519
      %4032 = vst [vmem:[%s460 + $0x3d8] sm:$0xff] %v3520
      %4033 = vst [vmem:[%s460 + $0x3e0] sm:$0xff] %v3521
      %4034 = vst [vmem:[%s460 + $0x3e8] sm:$0xff] %v3522
      %4035 = vst [vmem:[%s460 + $0x3f0] sm:$0xff] %v3523
      %4036 = vst [vmem:[%s460 + $0x3f8] sm:$0xff] %v3524
      %4037 = vst [vmem:[%s460 + $0x400] sm:$0xff] %v3525
      %4038 = vst [vmem:[%s460 + $0x408] sm:$0xff] %v3526
      %4039 = vst [vmem:[%s460 + $0x410] sm:$0xff] %v3527
      %4040 = vst [vmem:[%s460 + $0x418] sm:$0xff] %v3528
      %4041 = vst [vmem:[%s460 + $0x420] sm:$0xff] %v3529
      %4042 = vst [vmem:[%s460 + $0x428] sm:$0xff] %v3530
      %4043 = vst [vmem:[%s460 + $0x430] sm:$0xff] %v3531
      %4044 = vst [vmem:[%s460 + $0x438] sm:$0xff] %v3532
      %4045 = vst [vmem:[%s460 + $0x440] sm:$0xff] %v3533
      %4046 = vst [vmem:[%s460 + $0x448] sm:$0xff] %v3534
      %4047 = vst [vmem:[%s460 + $0x450] sm:$0xff] %v3535
      %4048 = vst [vmem:[%s460 + $0x458] sm:$0xff] %v3536
      %4049 = vst [vmem:[%s460 + $0x460] sm:$0xff] %v3537
      %4050 = vst [vmem:[%s460 + $0x468] sm:$0xff] %v3538
      %4051 = vst [vmem:[%s460 + $0x470] sm:$0xff] %v3539
      %4052 = vst [vmem:[%s460 + $0x478] sm:$0xff] %v3540
      %4053 = vst [vmem:[%s460 + $0x480] sm:$0xff] %v3541
      %4054 = vst [vmem:[%s460 + $0x488] sm:$0xff] %v3542
      %4055 = vst [vmem:[%s460 + $0x490] sm:$0xff] %v3543
      %4056 = vst [vmem:[%s460 + $0x498] sm:$0xff] %v3544
      %4057 = vst [vmem:[%s460 + $0x4a0] sm:$0xff] %v3545
      %4058 = vst [vmem:[%s460 + $0x4a8] sm:$0xff] %v3546
      %4059 = vst [vmem:[%s460 + $0x4b0] sm:$0xff] %v3547
      %4060 = vst [vmem:[%s460 + $0x4b8] sm:$0xff] %v3548
      %4061 = vst [vmem:[%s460 + $0x4c0] sm:$0xff] %v3549
      %4062 = vst [vmem:[%s460 + $0x4c8] sm:$0xff] %v3550
      %4063 = vst [vmem:[%s460 + $0x4d0] sm:$0xff] %v3551
      %4064 = vst [vmem:[%s460 + $0x4d8] sm:$0xff] %v3552
      %4065 = vst [vmem:[%s460 + $0x4e0] sm:$0xff] %v3553
      %4066 = vst [vmem:[%s460 + $0x4e8] sm:$0xff] %v3554
      %4067 = vst [vmem:[%s460 + $0x4f0] sm:$0xff] %v3555
      %4068 = vst [vmem:[%s460 + $0x4f8] sm:$0xff] %v3556
      %4069 = vst [vmem:[%s460 + $0x500] sm:$0xff] %v3557
      %4070 = vst [vmem:[%s460 + $0x508] sm:$0xff] %v3558
      %4071 = vst [vmem:[%s460 + $0x510] sm:$0xff] %v3559
      %4072 = vst [vmem:[%s460 + $0x518] sm:$0xff] %v3560
      %4073 = vst [vmem:[%s460 + $0x520] sm:$0xff] %v3561
      %4074 = vst [vmem:[%s460 + $0x528] sm:$0xff] %v3562
      %4075 = vst [vmem:[%s460 + $0x530] sm:$0xff] %v3563
      %4076 = vst [vmem:[%s460 + $0x538] sm:$0xff] %v3564
      %4077 = vst [vmem:[%s460 + $0x540] sm:$0xff] %v3565
      %4078 = vst [vmem:[%s460 + $0x548] sm:$0xff] %v3566
      %4079 = vst [vmem:[%s460 + $0x550] sm:$0xff] %v3567
      %4080 = vst [vmem:[%s460 + $0x558] sm:$0xff] %v3568
      %4081 = vst [vmem:[%s460 + $0x560] sm:$0xff] %v3569
      %4082 = vst [vmem:[%s460 + $0x568] sm:$0xff] %v3570
      %4083 = vst [vmem:[%s460 + $0x570] sm:$0xff] %v3571
      %4084 = vst [vmem:[%s460 + $0x578] sm:$0xff] %v3572
      %4085 = vst [vmem:[%s460 + $0x580] sm:$0xff] %v3573
      %4086 = vst [vmem:[%s460 + $0x588] sm:$0xff] %v3574
      %4087 = vst [vmem:[%s460 + $0x590] sm:$0xff] %v3575
      %4088 = vst [vmem:[%s460 + $0x598] sm:$0xff] %v3576
      %4089 = vst [vmem:[%s460 + $0x5a0] sm:$0xff] %v3577
      %4090 = vst [vmem:[%s460 + $0x5a8] sm:$0xff] %v3578
      %4091 = vst [vmem:[%s460 + $0x5b0] sm:$0xff] %v3579
      %4092 = vst [vmem:[%s460 + $0x5b8] sm:$0xff] %v3580
      %4093 = vst [vmem:[%s460 + $0x5c0] sm:$0xff] %v3581
      %4094 = vst [vmem:[%s460 + $0x5c8] sm:$0xff] %v3582
      %4095 = vst [vmem:[%s460 + $0x5d0] sm:$0xff] %v3583
      %4096 = vst [vmem:[%s460 + $0x5d8] sm:$0xff] %v3584
      %4097 = vst [vmem:[%s460 + $0x5e0] sm:$0xff] %v3585
      %4098 = vst [vmem:[%s460 + $0x5e8] sm:$0xff] %v3586
      %4099 = vst [vmem:[%s460 + $0x5f0] sm:$0xff] %v3587
      %4100 = vst [vmem:[%s460 + $0x5f8] sm:$0xff] %v3588
      %4101 = vst [vmem:[%s460 + $0x600] sm:$0xff] %v3589
      %4102 = vst [vmem:[%s460 + $0x608] sm:$0xff] %v3590
      %4103 = vst [vmem:[%s460 + $0x610] sm:$0xff] %v3591
      %4104 = vst [vmem:[%s460 + $0x618] sm:$0xff] %v3592
      %4105 = vst [vmem:[%s460 + $0x620] sm:$0xff] %v3593
      %4106 = vst [vmem:[%s460 + $0x628] sm:$0xff] %v3594
      %4107 = vst [vmem:[%s460 + $0x630] sm:$0xff] %v3595
      %4108 = vst [vmem:[%s460 + $0x638] sm:$0xff] %v3596
      %4109 = vst [vmem:[%s460 + $0x640] sm:$0xff] %v3597
      %4110 = vst [vmem:[%s460 + $0x648] sm:$0xff] %v3598
      %4111 = vst [vmem:[%s460 + $0x650] sm:$0xff] %v3599
      %4112 = vst [vmem:[%s460 + $0x658] sm:$0xff] %v3600
      %4113 = vst [vmem:[%s460 + $0x660] sm:$0xff] %v3601
      %4114 = vst [vmem:[%s460 + $0x668] sm:$0xff] %v3602
      %4115 = vst [vmem:[%s460 + $0x670] sm:$0xff] %v3603
      %4116 = vst [vmem:[%s460 + $0x678] sm:$0xff] %v3604
      %4117 = vst [vmem:[%s460 + $0x680] sm:$0xff] %v3605
      %4118 = vst [vmem:[%s460 + $0x688] sm:$0xff] %v3606
      %4119 = vst [vmem:[%s460 + $0x690] sm:$0xff] %v3607
      %4120 = vst [vmem:[%s460 + $0x698] sm:$0xff] %v3608
      %4121 = vst [vmem:[%s460 + $0x6a0] sm:$0xff] %v3609
      %4122 = vst [vmem:[%s460 + $0x6a8] sm:$0xff] %v3610
      %4123 = vst [vmem:[%s460 + $0x6b0] sm:$0xff] %v3611
      %4124 = vst [vmem:[%s460 + $0x6b8] sm:$0xff] %v3612
      %4125 = vst [vmem:[%s460 + $0x6c0] sm:$0xff] %v3613
      %4126 = vst [vmem:[%s460 + $0x6c8] sm:$0xff] %v3614
      %4127 = vst [vmem:[%s460 + $0x6d0] sm:$0xff] %v3615
      %4128 = vst [vmem:[%s460 + $0x6d8] sm:$0xff] %v3616
      %4129 = vst [vmem:[%s460 + $0x6e0] sm:$0xff] %v3617
      %4130 = vst [vmem:[%s460 + $0x6e8] sm:$0xff] %v3618
      %4131 = vst [vmem:[%s460 + $0x6f0] sm:$0xff] %v3619
      %4132 = vst [vmem:[%s460 + $0x6f8] sm:$0xff] %v3620
      %4133 = vst [vmem:[%s460 + $0x700] sm:$0xff] %v3621
      %4134 = vst [vmem:[%s460 + $0x708] sm:$0xff] %v3622
      %4135 = vst [vmem:[%s460 + $0x710] sm:$0xff] %v3623
      %4136 = vst [vmem:[%s460 + $0x718] sm:$0xff] %v3624
      %4137 = vst [vmem:[%s460 + $0x720] sm:$0xff] %v3625
      %4138 = vst [vmem:[%s460 + $0x728] sm:$0xff] %v3626
      %4139 = vst [vmem:[%s460 + $0x730] sm:$0xff] %v3627
      %4140 = vst [vmem:[%s460 + $0x738] sm:$0xff] %v3628
      %4141 = vst [vmem:[%s460 + $0x740] sm:$0xff] %v3629
      %4142 = vst [vmem:[%s460 + $0x748] sm:$0xff] %v3630
      %4143 = vst [vmem:[%s460 + $0x750] sm:$0xff] %v3631
      %4144 = vst [vmem:[%s460 + $0x758] sm:$0xff] %v3632
      %4145 = vst [vmem:[%s460 + $0x760] sm:$0xff] %v3633
      %4146 = vst [vmem:[%s460 + $0x768] sm:$0xff] %v3634
      %4147 = vst [vmem:[%s460 + $0x770] sm:$0xff] %v3635
      %4148 = vst [vmem:[%s460 + $0x778] sm:$0xff] %v3636
      %4149 = vst [vmem:[%s460 + $0x780] sm:$0xff] %v3637
      %4150 = vst [vmem:[%s460 + $0x788] sm:$0xff] %v3638
      %4151 = vst [vmem:[%s460 + $0x790] sm:$0xff] %v3639
      %4152 = vst [vmem:[%s460 + $0x798] sm:$0xff] %v3640
      %4153 = vst [vmem:[%s460 + $0x7a0] sm:$0xff] %v3641
      %4154 = vst [vmem:[%s460 + $0x7a8] sm:$0xff] %v3642
      %4155 = vst [vmem:[%s460 + $0x7b0] sm:$0xff] %v3643
      %4156 = vst [vmem:[%s460 + $0x7b8] sm:$0xff] %v3644
      %4157 = vst [vmem:[%s460 + $0x7c0] sm:$0xff] %v3645
      %4158 = vst [vmem:[%s460 + $0x7c8] sm:$0xff] %v3646
      %4159 = vst [vmem:[%s460 + $0x7d0] sm:$0xff] %v3647
      %4160 = vst [vmem:[%s460 + $0x7d8] sm:$0xff] %v3648
      %4161 = vst [vmem:[%s460 + $0x7e0] sm:$0xff] %v3649
      %4162 = vst [vmem:[%s460 + $0x7e8] sm:$0xff] %v3650
      %4163 = vst [vmem:[%s460 + $0x7f0] sm:$0xff] %v3651
      %4164 = vst [vmem:[%s460 + $0x7f8] sm:$0xff] %v3652
      %4165 = vst [vmem:[%s460 + $0x800] sm:$0xff] %v3653
      %4166 = vst [vmem:[%s460 + $0x808] sm:$0xff] %v3654
      %4167 = vst [vmem:[%s460 + $0x810] sm:$0xff] %v3655
      %4168 = vst [vmem:[%s460 + $0x818] sm:$0xff] %v3656
      %4169 = vst [vmem:[%s460 + $0x820] sm:$0xff] %v3657
      %4170 = vst [vmem:[%s460 + $0x828] sm:$0xff] %v3658
      %4171 = vst [vmem:[%s460 + $0x830] sm:$0xff] %v3659
      %4172 = vst [vmem:[%s460 + $0x838] sm:$0xff] %v3660
      %4173 = vst [vmem:[%s460 + $0x840] sm:$0xff] %v3661
      %4174 = vst [vmem:[%s460 + $0x848] sm:$0xff] %v3662
      %4175 = vst [vmem:[%s460 + $0x850] sm:$0xff] %v3663
      %4176 = vst [vmem:[%s460 + $0x858] sm:$0xff] %v3664
      %4177 = vst [vmem:[%s460 + $0x860] sm:$0xff] %v3665
      %4178 = vst [vmem:[%s460 + $0x868] sm:$0xff] %v3666
      %4179 = vst [vmem:[%s460 + $0x870] sm:$0xff] %v3667
      %4180 = vst [vmem:[%s460 + $0x878] sm:$0xff] %v3668
      %4181 = vst [vmem:[%s460 + $0x880] sm:$0xff] %v3669
      %4182 = vst [vmem:[%s460 + $0x888] sm:$0xff] %v3670
      %4183 = vst [vmem:[%s460 + $0x890] sm:$0xff] %v3671
      %4184 = vst [vmem:[%s460 + $0x898] sm:$0xff] %v3672
      %4185 = vst [vmem:[%s460 + $0x8a0] sm:$0xff] %v3673
      %4186 = vst [vmem:[%s460 + $0x8a8] sm:$0xff] %v3674
      %4187 = vst [vmem:[%s460 + $0x8b0] sm:$0xff] %v3675
      %4188 = vst [vmem:[%s460 + $0x8b8] sm:$0xff] %v3676
      %4189 = vst [vmem:[%s460 + $0x8c0] sm:$0xff] %v3677
      %4190 = vst [vmem:[%s460 + $0x8c8] sm:$0xff] %v3678
      %4191 = vst [vmem:[%s460 + $0x8d0] sm:$0xff] %v3679
      %4192 = vst [vmem:[%s460 + $0x8d8] sm:$0xff] %v3680
      %4193 = vst [vmem:[%s460 + $0x8e0] sm:$0xff] %v3681
      %4194 = vst [vmem:[%s460 + $0x8e8] sm:$0xff] %v3682
      %4195 = vst [vmem:[%s460 + $0x8f0] sm:$0xff] %v3683
      %4196 = vst [vmem:[%s460 + $0x8f8] sm:$0xff] %v3684
      %4197 = vst [vmem:[%s460 + $0x900] sm:$0xff] %v3685
      %4198 = vst [vmem:[%s460 + $0x908] sm:$0xff] %v3686
      %4199 = vst [vmem:[%s460 + $0x910] sm:$0xff] %v3687
      %4200 = vst [vmem:[%s460 + $0x918] sm:$0xff] %v3688
      %4201 = vst [vmem:[%s460 + $0x920] sm:$0xff] %v3689
      %4202 = vst [vmem:[%s460 + $0x928] sm:$0xff] %v3690
      %4203 = vst [vmem:[%s460 + $0x930] sm:$0xff] %v3691
      %4204 = vst [vmem:[%s460 + $0x938] sm:$0xff] %v3692
      %4205 = vst [vmem:[%s460 + $0x940] sm:$0xff] %v3693
      %4206 = vst [vmem:[%s460 + $0x948] sm:$0xff] %v3694
      %4207 = vst [vmem:[%s460 + $0x950] sm:$0xff] %v3695
      %4208 = vst [vmem:[%s460 + $0x958] sm:$0xff] %v3696
      %4209 = vst [vmem:[%s460 + $0x960] sm:$0xff] %v3697
      %4210 = vst [vmem:[%s460 + $0x968] sm:$0xff] %v3698
      %4211 = vst [vmem:[%s460 + $0x970] sm:$0xff] %v3699
      %4212 = vst [vmem:[%s460 + $0x978] sm:$0xff] %v3700
      %4213 = vst [vmem:[%s460 + $0x980] sm:$0xff] %v3701
      %4214 = vst [vmem:[%s460 + $0x988] sm:$0xff] %v3702
      %4215 = vst [vmem:[%s460 + $0x990] sm:$0xff] %v3703
      %4216 = vst [vmem:[%s460 + $0x998] sm:$0xff] %v3704
      %4217 = vst [vmem:[%s460 + $0x9a0] sm:$0xff] %v3705
      %4218 = vst [vmem:[%s460 + $0x9a8] sm:$0xff] %v3706
      %4219 = vst [vmem:[%s460 + $0x9b0] sm:$0xff] %v3707
      %4220 = vst [vmem:[%s460 + $0x9b8] sm:$0xff] %v3708
      %4221 = vst [vmem:[%s460 + $0x9c0] sm:$0xff] %v3709
      %4222 = vst [vmem:[%s460 + $0x9c8] sm:$0xff] %v3710
      %4223 = vst [vmem:[%s460 + $0x9d0] sm:$0xff] %v3711
      %4224 = vst [vmem:[%s460 + $0x9d8] sm:$0xff] %v3712
      %4225 = vst [vmem:[%s460 + $0x9e0] sm:$0xff] %v3713
      %4226 = vst [vmem:[%s460 + $0x9e8] sm:$0xff] %v3714
      %4227 = vst [vmem:[%s460 + $0x9f0] sm:$0xff] %v3715
      %4228 = vst [vmem:[%s460 + $0x9f8] sm:$0xff] %v3716
      %4229 = vst [vmem:[%s460 + $0xa00] sm:$0xff] %v3717
      %4230 = vst [vmem:[%s460 + $0xa08] sm:$0xff] %v3718
      %4231 = vst [vmem:[%s460 + $0xa10] sm:$0xff] %v3719
      %4232 = vst [vmem:[%s460 + $0xa18] sm:$0xff] %v3720
      %4233 = vst [vmem:[%s460 + $0xa20] sm:$0xff] %v3721
      %4234 = vst [vmem:[%s460 + $0xa28] sm:$0xff] %v3722
      %4235 = vst [vmem:[%s460 + $0xa30] sm:$0xff] %v3723
      %4236 = vst [vmem:[%s460 + $0xa38] sm:$0xff] %v3724
      %4237 = vst [vmem:[%s460 + $0xa40] sm:$0xff] %v3725
      %4238 = vst [vmem:[%s460 + $0xa48] sm:$0xff] %v3726
      %4239 = vst [vmem:[%s460 + $0xa50] sm:$0xff] %v3727
      %4240 = vst [vmem:[%s460 + $0xa58] sm:$0xff] %v3728
      %4241 = vst [vmem:[%s460 + $0xa60] sm:$0xff] %v3729
      %4242 = vst [vmem:[%s460 + $0xa68] sm:$0xff] %v3730
      %4243 = vst [vmem:[%s460 + $0xa70] sm:$0xff] %v3731
      %4244 = vst [vmem:[%s460 + $0xa78] sm:$0xff] %v3732
      %4245 = vst [vmem:[%s460 + $0xa80] sm:$0xff] %v3733
      %4246 = vst [vmem:[%s460 + $0xa88] sm:$0xff] %v3734
      %4247 = vst [vmem:[%s460 + $0xa90] sm:$0xff] %v3735
      %4248 = vst [vmem:[%s460 + $0xa98] sm:$0xff] %v3736
      %4249 = vst [vmem:[%s460 + $0xaa0] sm:$0xff] %v3737
      %4250 = vst [vmem:[%s460 + $0xaa8] sm:$0xff] %v3738
      %4251 = vst [vmem:[%s460 + $0xab0] sm:$0xff] %v3739
      %4252 = vst [vmem:[%s460 + $0xab8] sm:$0xff] %v3740
      %4253 = vst [vmem:[%s460 + $0xac0] sm:$0xff] %v3741
      %4254 = vst [vmem:[%s460 + $0xac8] sm:$0xff] %v3742
      %4255 = vst [vmem:[%s460 + $0xad0] sm:$0xff] %v3743
      %4256 = vst [vmem:[%s460 + $0xad8] sm:$0xff] %v3744
      %4257 = vst [vmem:[%s460 + $0xae0] sm:$0xff] %v3745
      %4258 = vst [vmem:[%s460 + $0xae8] sm:$0xff] %v3746
      %4259 = vst [vmem:[%s460 + $0xaf0] sm:$0xff] %v3747
      %4260 = vst [vmem:[%s460 + $0xaf8] sm:$0xff] %v3748
      %4261 = vst [vmem:[%s460 + $0xb00] sm:$0xff] %v3749
      %4262 = vst [vmem:[%s460 + $0xb08] sm:$0xff] %v3750
      %4263 = vst [vmem:[%s460 + $0xb10] sm:$0xff] %v3751
      %4264 = vst [vmem:[%s460 + $0xb18] sm:$0xff] %v3752
      %4265 = vst [vmem:[%s460 + $0xb20] sm:$0xff] %v3753
      %4266 = vst [vmem:[%s460 + $0xb28] sm:$0xff] %v3754
      %4267 = vst [vmem:[%s460 + $0xb30] sm:$0xff] %v3755
      %4268 = vst [vmem:[%s460 + $0xb38] sm:$0xff] %v3756
      %4269 = vst [vmem:[%s460 + $0xb40] sm:$0xff] %v3757
      %4270 = vst [vmem:[%s460 + $0xb48] sm:$0xff] %v3758
      %4271 = vst [vmem:[%s460 + $0xb50] sm:$0xff] %v3759
      %4272 = vst [vmem:[%s460 + $0xb58] sm:$0xff] %v3760
      %4273 = vst [vmem:[%s460 + $0xb60] sm:$0xff] %v3761
      %4274 = vst [vmem:[%s460 + $0xb68] sm:$0xff] %v3762
      %4275 = vst [vmem:[%s460 + $0xb70] sm:$0xff] %v3763
      %4276 = vst [vmem:[%s460 + $0xb78] sm:$0xff] %v3764
      %4277 = vst [vmem:[%s460 + $0xb80] sm:$0xff] %v3765
      %4278 = vst [vmem:[%s460 + $0xb88] sm:$0xff] %v3766
      %4279 = vst [vmem:[%s460 + $0xb90] sm:$0xff] %v3767
      %4280 = vst [vmem:[%s460 + $0xb98] sm:$0xff] %v3768
      %4281 = vst [vmem:[%s460 + $0xba0] sm:$0xff] %v3769
      %4282 = vst [vmem:[%s460 + $0xba8] sm:$0xff] %v3770
      %4283 = vst [vmem:[%s460 + $0xbb0] sm:$0xff] %v3771
      %4284 = vst [vmem:[%s460 + $0xbb8] sm:$0xff] %v3772
      %4285 = vst [vmem:[%s460 + $0xbc0] sm:$0xff] %v3773
      %4286 = vst [vmem:[%s460 + $0xbc8] sm:$0xff] %v3774
      %4287 = vst [vmem:[%s460 + $0xbd0] sm:$0xff] %v3775
      %4288 = vst [vmem:[%s460 + $0xbd8] sm:$0xff] %v3776
      %4289 = vst [vmem:[%s460 + $0xbe0] sm:$0xff] %v3777
      %4290 = vst [vmem:[%s460 + $0xbe8] sm:$0xff] %v3778
      %4291 = vst [vmem:[%s460 + $0xbf0] sm:$0xff] %v3779
      %4292 = vst [vmem:[%s460 + $0xbf8] sm:$0xff] %v3780
      %4293 = vst [vmem:[%s460 + $0xc00] sm:$0xff] %v3781
      %4294 = vst [vmem:[%s460 + $0xc08] sm:$0xff] %v3782
      %4295 = vst [vmem:[%s460 + $0xc10] sm:$0xff] %v3783
      %4296 = vst [vmem:[%s460 + $0xc18] sm:$0xff] %v3784
      %4297 = vst [vmem:[%s460 + $0xc20] sm:$0xff] %v3785
      %4298 = vst [vmem:[%s460 + $0xc28] sm:$0xff] %v3786
      %4299 = vst [vmem:[%s460 + $0xc30] sm:$0xff] %v3787
      %4300 = vst [vmem:[%s460 + $0xc38] sm:$0xff] %v3788
      %4301 = vst [vmem:[%s460 + $0xc40] sm:$0xff] %v3789
      %4302 = vst [vmem:[%s460 + $0xc48] sm:$0xff] %v3790
      %4303 = vst [vmem:[%s460 + $0xc50] sm:$0xff] %v3791
      %4304 = vst [vmem:[%s460 + $0xc58] sm:$0xff] %v3792
      %4305 = vst [vmem:[%s460 + $0xc60] sm:$0xff] %v3793
      %4306 = vst [vmem:[%s460 + $0xc68] sm:$0xff] %v3794
      %4307 = vst [vmem:[%s460 + $0xc70] sm:$0xff] %v3795
      %4308 = vst [vmem:[%s460 + $0xc78] sm:$0xff] %v3796
      %4309 = vst [vmem:[%s460 + $0xc80] sm:$0xff] %v3797
      %4310 = vst [vmem:[%s460 + $0xc88] sm:$0xff] %v3798
      %4311 = vst [vmem:[%s460 + $0xc90] sm:$0xff] %v3799
      %4312 = vst [vmem:[%s460 + $0xc98] sm:$0xff] %v3800
      %4313 = vst [vmem:[%s460 + $0xca0] sm:$0xff] %v3801
      %4314 = vst [vmem:[%s460 + $0xca8] sm:$0xff] %v3802
      %4315 = vst [vmem:[%s460 + $0xcb0] sm:$0xff] %v3803
      %4316 = vst [vmem:[%s460 + $0xcb8] sm:$0xff] %v3804
      %4317 = vst [vmem:[%s460 + $0xcc0] sm:$0xff] %v3805
      %4318 = vst [vmem:[%s460 + $0xcc8] sm:$0xff] %v3806
      %4319 = vst [vmem:[%s460 + $0xcd0] sm:$0xff] %v3807
      %4320 = vst [vmem:[%s460 + $0xcd8] sm:$0xff] %v3808
      %4321 = vst [vmem:[%s460 + $0xce0] sm:$0xff] %v3809
      %4322 = vst [vmem:[%s460 + $0xce8] sm:$0xff] %v3810
      %4323 = vst [vmem:[%s460 + $0xcf0] sm:$0xff] %v3811
      %4324 = vst [vmem:[%s460 + $0xcf8] sm:$0xff] %v3812
      %4325 = vst [vmem:[%s460 + $0xd00] sm:$0xff] %v3813
      %4326 = vst [vmem:[%s460 + $0xd08] sm:$0xff] %v3814
      %4327 = vst [vmem:[%s460 + $0xd10] sm:$0xff] %v3815
      %4328 = vst [vmem:[%s460 + $0xd18] sm:$0xff] %v3816
      %4329 = vst [vmem:[%s460 + $0xd20] sm:$0xff] %v3817
      %4330 = vst [vmem:[%s460 + $0xd28] sm:$0xff] %v3818
      %4331 = vst [vmem:[%s460 + $0xd30] sm:$0xff] %v3819
      %4332 = vst [vmem:[%s460 + $0xd38] sm:$0xff] %v3820
      %4333 = vst [vmem:[%s460 + $0xd40] sm:$0xff] %v3821
      %4334 = vst [vmem:[%s460 + $0xd48] sm:$0xff] %v3822
      %4335 = vst [vmem:[%s460 + $0xd50] sm:$0xff] %v3823
      %4336 = vst [vmem:[%s460 + $0xd58] sm:$0xff] %v3824
      %4337 = vst [vmem:[%s460 + $0xd60] sm:$0xff] %v3825
      %4338 = vst [vmem:[%s460 + $0xd68] sm:$0xff] %v3826
      %4339 = vst [vmem:[%s460 + $0xd70] sm:$0xff] %v3827
      %4340 = vst [vmem:[%s460 + $0xd78] sm:$0xff] %v3828
      %4341 = vst [vmem:[%s460 + $0xd80] sm:$0xff] %v3829
      %4342 = vst [vmem:[%s460 + $0xd88] sm:$0xff] %v3830
      %4343 = vst [vmem:[%s460 + $0xd90] sm:$0xff] %v3831
      %4344 = vst [vmem:[%s460 + $0xd98] sm:$0xff] %v3832
      %4345 = vst [vmem:[%s460 + $0xda0] sm:$0xff] %v3833
      %4346 = vst [vmem:[%s460 + $0xda8] sm:$0xff] %v3834
      %4347 = vst [vmem:[%s460 + $0xdb0] sm:$0xff] %v3835
      %4348 = vst [vmem:[%s460 + $0xdb8] sm:$0xff] %v3836
      %4349 = vst [vmem:[%s460 + $0xdc0] sm:$0xff] %v3837
      %4350 = vst [vmem:[%s460 + $0xdc8] sm:$0xff] %v3838
      %4351 = vst [vmem:[%s460 + $0xdd0] sm:$0xff] %v3839
      %4352 = vst [vmem:[%s460 + $0xdd8] sm:$0xff] %v3840
      %4353 = vst [vmem:[%s460 + $0xde0] sm:$0xff] %v3841
      %4354 = vst [vmem:[%s460 + $0xde8] sm:$0xff] %v3842
      %4355 = vst [vmem:[%s460 + $0xdf0] sm:$0xff] %v3843
      %4356 = vst [vmem:[%s460 + $0xdf8] sm:$0xff] %v3844
      %4357 = vst [vmem:[%s460 + $0xe00] sm:$0xff] %v3845
      %4358 = vst [vmem:[%s460 + $0xe08] sm:$0xff] %v3846
      %4359 = vst [vmem:[%s460 + $0xe10] sm:$0xff] %v3847
      %4360 = vst [vmem:[%s460 + $0xe18] sm:$0xff] %v3848
      %4361 = vst [vmem:[%s460 + $0xe20] sm:$0xff] %v3849
      %4362 = vst [vmem:[%s460 + $0xe28] sm:$0xff] %v3850
      %4363 = vst [vmem:[%s460 + $0xe30] sm:$0xff] %v3851
      %4364 = vst [vmem:[%s460 + $0xe38] sm:$0xff] %v3852
      %4365 = vst [vmem:[%s460 + $0xe40] sm:$0xff] %v3853
      %4366 = vst [vmem:[%s460 + $0xe48] sm:$0xff] %v3854
      %4367 = vst [vmem:[%s460 + $0xe50] sm:$0xff] %v3855
      %4368 = vst [vmem:[%s460 + $0xe58] sm:$0xff] %v3856
      %4369 = vst [vmem:[%s460 + $0xe60] sm:$0xff] %v3857
      %4370 = vst [vmem:[%s460 + $0xe68] sm:$0xff] %v3858
      %4371 = vst [vmem:[%s460 + $0xe70] sm:$0xff] %v3859
      %4372 = vst [vmem:[%s460 + $0xe78] sm:$0xff] %v3860
      %4373 = vst [vmem:[%s460 + $0xe80] sm:$0xff] %v3861
      %4374 = vst [vmem:[%s460 + $0xe88] sm:$0xff] %v3862
      %4375 = vst [vmem:[%s460 + $0xe90] sm:$0xff] %v3863
      %4376 = vst [vmem:[%s460 + $0xe98] sm:$0xff] %v3864
      %4377 = vst [vmem:[%s460 + $0xea0] sm:$0xff] %v3865
      %4378 = vst [vmem:[%s460 + $0xea8] sm:$0xff] %v3866
      %4379 = vst [vmem:[%s460 + $0xeb0] sm:$0xff] %v3867
      %4380 = vst [vmem:[%s460 + $0xeb8] sm:$0xff] %v3868
      %4381 = vst [vmem:[%s460 + $0xec0] sm:$0xff] %v3869
      %4382 = vst [vmem:[%s460 + $0xec8] sm:$0xff] %v3870
      %4383 = vst [vmem:[%s460 + $0xed0] sm:$0xff] %v3871
      %4384 = vst [vmem:[%s460 + $0xed8] sm:$0xff] %v3872
      %4385 = vst [vmem:[%s460 + $0xee0] sm:$0xff] %v3873
      %4386 = vst [vmem:[%s460 + $0xee8] sm:$0xff] %v3874
      %4387 = vst [vmem:[%s460 + $0xef0] sm:$0xff] %v3875
      %4388 = vst [vmem:[%s460 + $0xef8] sm:$0xff] %v3876
      %4389 = vst [vmem:[%s460 + $0xf00] sm:$0xff] %v3877
      %4390 = vst [vmem:[%s460 + $0xf08] sm:$0xff] %v3878
      %4391 = vst [vmem:[%s460 + $0xf10] sm:$0xff] %v3879
      %4392 = vst [vmem:[%s460 + $0xf18] sm:$0xff] %v3880
      %4393 = vst [vmem:[%s460 + $0xf20] sm:$0xff] %v3881
      %4394 = vst [vmem:[%s460 + $0xf28] sm:$0xff] %v3882
      %4395 = vst [vmem:[%s460 + $0xf30] sm:$0xff] %v3883
      %4396 = vst [vmem:[%s460 + $0xf38] sm:$0xff] %v3884
      %4397 = vst [vmem:[%s460 + $0xf40] sm:$0xff] %v3885
      %4398 = vst [vmem:[%s460 + $0xf48] sm:$0xff] %v3886
      %4399 = vst [vmem:[%s460 + $0xf50] sm:$0xff] %v3887
      %4400 = vst [vmem:[%s460 + $0xf58] sm:$0xff] %v3888
      %4401 = vst [vmem:[%s460 + $0xf60] sm:$0xff] %v3889
      %4402 = vst [vmem:[%s460 + $0xf68] sm:$0xff] %v3890
      %4403 = vst [vmem:[%s460 + $0xf70] sm:$0xff] %v3891
      %4404 = vst [vmem:[%s460 + $0xf78] sm:$0xff] %v3892
      %4405 = vst [vmem:[%s460 + $0xf80] sm:$0xff] %v3893
      %4406 = vst [vmem:[%s460 + $0xf88] sm:$0xff] %v3894
      %4407 = vst [vmem:[%s460 + $0xf90] sm:$0xff] %v3895
      %4408 = vst [vmem:[%s460 + $0xf98] sm:$0xff] %v3896
      %4409 = vst [vmem:[%s460 + $0xfa0] sm:$0xff] %v3897
      %4410 = vst [vmem:[%s460 + $0xfa8] sm:$0xff] %v3898
      %4411 = vst [vmem:[%s460 + $0xfb0] sm:$0xff] %v3899
      %4412 = vst [vmem:[%s460 + $0xfb8] sm:$0xff] %v3900
      %4413 = vst [vmem:[%s460 + $0xfc0] sm:$0xff] %v3901
      %4414 = vst [vmem:[%s460 + $0xfc8] sm:$0xff] %v3902
      %4415 = vst [vmem:[%s460 + $0xfd0] sm:$0xff] %v3903
      %4416 = vst [vmem:[%s460 + $0xfd8] sm:$0xff] %v3904
      %4417 = vst [vmem:[%s460 + $0xfe0] sm:$0xff] %v3905
      %4418 = vst [vmem:[%s460 + $0xfe8] sm:$0xff] %v3906
      %4419 = vst [vmem:[%s460 + $0xff0] sm:$0xff] %v3907
      %4420 = vst [vmem:[%s460 + $0xff8] sm:$0xff] %v3908
      %v4421 = vld [vmem:[%s455] sm:$0xf]
      %v4422 = vld [vmem:[%s8] sm:$0x3]
      %v4423 = vld [vmem:[%s9] sm:$0xf]
      %4425 = vset.pattern.permute.xlu0 0
      %4426 = vperm.xlu0 %4425, %v4423
      %v4427 = vpop.permute.xlu0 %4426
      %v4431 = vunpack.c.l.s4 1983009808
      %v4432 = vunpack.c.0.s8 %v4431
      %v4433 = vlaneseq
      %v4434 = vshrl.u32 %v4433, 7
      %v4435 = vsub.s32 %v4432, %v4434
      %v4436 = vrot.slane %v4421, %v4435
      %v4437 = vcombine.high %v4436, %v4436
      %vm4438 = vcmask 31744
      %v4440 = vsel %vm4438, %v4422, 0
      %vm4442 = vcmask 1041408
      %v4444 = vsel %vm4442, %v4436, 0
      %v4447 = vsel %vm4442, %v4437, 0
      %4449 = vmatprep.subr.bf16.mxu0 0
      %4450 = vmatpush1.bf16.msra.mxu0 0
      %4451 = vmatprep.subr.bf16.mxu0 0
      %4452 = vmatpush1.bf16.msra.mxu0 0
      %4453 = vmatprep.subr.bf16.mxu0 0
      %4454 = vmatpush1.bf16.msra.mxu0 0
      %4455 = vmatprep.subr.bf16.mxu0 0
      %4456 = vmatpush1.bf16.msra.mxu0 0
      %4457 = vmatprep.subr.bf16.mxu0 0
      %4458 = vmatpush1.bf16.msra.mxu0 0
      %4459 = vmatprep.subr.bf16.mxu0 0
      %4460 = vmatpush1.bf16.msra.mxu0 0
      %4461 = vmatprep.subr.bf16.mxu0 0
      %4462 = vmatpush1.bf16.msra.mxu0 0
      %4463 = vmatprep.subr.bf16.mxu0 %v4447
      %4464 = vmatpush1.bf16.msra.mxu0 %v4444
      %4465 = vmatprep.subr.bf16.mxu0 0
      %4466 = vmatpush2.bf16.msra.mxu0 0
      %4467 = vmatprep.subr.bf16.mxu0 0
      %4468 = vmatpush2.bf16.msra.mxu0 0
      %4469 = vmatprep.subr.bf16.mxu0 0
      %4470 = vmatpush2.bf16.msra.mxu0 0
      %4471 = vmatprep.subr.bf16.mxu0 0
      %4472 = vmatpush2.bf16.msra.mxu0 0
      %4473 = vmatprep.subr.bf16.mxu0 0
      %4474 = vmatpush2.bf16.msra.mxu0 0
      %4475 = vmatprep.subr.bf16.mxu0 0
      %4476 = vmatpush2.bf16.msra.mxu0 0
      %4477 = vmatprep.subr.bf16.mxu0 0
      %4478 = vmatpush2.bf16.msra.mxu0 0
      %4479 = vmatprep.subr.bf16.mxu0 0
      %4480 = vmatpush2.bf16.msra.mxu0 0
      %4481 = vmatprep.mubr.bf16.mxu0 0
      %4482 = vmatmul.mubr.bf16.gmra.mxu0 %v4440
      %v4483 = vpop.f32.mrf.mxu0
      %v4484 = vadd.f32 %v4427, %v4483
      %v4485 = vpop.f32.mrf.mxu0
      %v4486 = vadd.f32 %v4427, %v4485
      %v4487 = vpop.f32.mrf.mxu0
      %v4488 = vpop.f32.mrf.mxu0
      %4489 = vdwg.mxu0
      %v4490 = vmax.f32 %v4484, 0.0
      %v4491 = vmax.f32 %v4486, 0.0
      %v4492 = vld [vmem:[%s10] sm:$0xf]
      %v4493 = vld [vmem:[%s10 + $0x4] sm:$0xf]
      %v4494 = vld [vmem:[%s10 + $0x8] sm:$0xf]
      %v4495 = vld [vmem:[%s10 + $0xc] sm:$0xf]
      %v4496 = vld [vmem:[%s10 + $0x10] sm:$0xf]
      %v4497 = vld [vmem:[%s10 + $0x14] sm:$0xf]
      %v4498 = vld [vmem:[%s10 + $0x18] sm:$0xf]
      %v4499 = vld [vmem:[%s10 + $0x1c] sm:$0xf]
      %v4500 = vld [vmem:[%s10 + $0x20] sm:$0xf]
      %v4501 = vld [vmem:[%s10 + $0x24] sm:$0xf]
      %v4502 = vld [vmem:[%s10 + $0x28] sm:$0xf]
      %v4503 = vld [vmem:[%s10 + $0x2c] sm:$0xf]
      %v4504 = vld [vmem:[%s10 + $0x30] sm:$0xf]
      %v4505 = vld [vmem:[%s10 + $0x34] sm:$0xf]
      %v4506 = vld [vmem:[%s10 + $0x38] sm:$0xf]
      %v4507 = vld [vmem:[%s10 + $0x3c] sm:$0xf]
      %v4508 = vpack.c.bf16 %v4490, %v4490
      %v4509 = vpack.c.bf16 %v4491, %v4491
      %v4510 = vld [vmem:[%s11] sm:$0xff]
      %v4511 = vld [vmem:[%s11 + $0x8] sm:$0xff]
      %v4512 = vld [vmem:[%s11 + $0x10] sm:$0xff]
      %v4513 = vld [vmem:[%s11 + $0x18] sm:$0xff]
      %v4514 = vld [vmem:[%s11 + $0x20] sm:$0xff]
      %v4515 = vld [vmem:[%s11 + $0x28] sm:$0xff]
      %v4516 = vld [vmem:[%s11 + $0x30] sm:$0xff]
      %v4517 = vld [vmem:[%s11 + $0x38] sm:$0xff]
      %v4518 = vld [vmem:[%s11 + $0x40] sm:$0xff]
      %v4519 = vld [vmem:[%s11 + $0x48] sm:$0xff]
      %v4520 = vld [vmem:[%s11 + $0x50] sm:$0xff]
      %v4521 = vld [vmem:[%s11 + $0x58] sm:$0xff]
      %v4522 = vld [vmem:[%s11 + $0x60] sm:$0xff]
      %v4523 = vld [vmem:[%s11 + $0x68] sm:$0xff]
      %v4524 = vld [vmem:[%s11 + $0x70] sm:$0xff]
      %v4525 = vld [vmem:[%s11 + $0x78] sm:$0xff]
      %4527 = vset.pattern.permute.xlu0 0
      %4528 = vperm.xlu0 %4527, %v4510
      %v4529 = vpop.permute.xlu0 %4528
      %4532 = vset.pattern.permute.xlu0 0
      %4533 = vperm.xlu0 %4532, %v4511
      %v4534 = vpop.permute.xlu0 %4533
      %4537 = vset.pattern.permute.xlu0 0
      %4538 = vperm.xlu0 %4537, %v4512
      %v4539 = vpop.permute.xlu0 %4538
      %4542 = vset.pattern.permute.xlu0 0
      %4543 = vperm.xlu0 %4542, %v4513
      %v4544 = vpop.permute.xlu0 %4543
      %4547 = vset.pattern.permute.xlu0 0
      %4548 = vperm.xlu0 %4547, %v4514
      %v4549 = vpop.permute.xlu0 %4548
      %4552 = vset.pattern.permute.xlu0 0
      %4553 = vperm.xlu0 %4552, %v4515
      %v4554 = vpop.permute.xlu0 %4553
      %4557 = vset.pattern.permute.xlu0 0
      %4558 = vperm.xlu0 %4557, %v4516
      %v4559 = vpop.permute.xlu0 %4558
      %4562 = vset.pattern.permute.xlu0 0
      %4563 = vperm.xlu0 %4562, %v4517
      %v4564 = vpop.permute.xlu0 %4563
      %4567 = vset.pattern.permute.xlu0 0
      %4568 = vperm.xlu0 %4567, %v4518
      %v4569 = vpop.permute.xlu0 %4568
      %4572 = vset.pattern.permute.xlu0 0
      %4573 = vperm.xlu0 %4572, %v4519
      %v4574 = vpop.permute.xlu0 %4573
      %4577 = vset.pattern.permute.xlu0 0
      %4578 = vperm.xlu0 %4577, %v4520
      %v4579 = vpop.permute.xlu0 %4578
      %4582 = vset.pattern.permute.xlu0 0
      %4583 = vperm.xlu0 %4582, %v4521
      %v4584 = vpop.permute.xlu0 %4583
      %4587 = vset.pattern.permute.xlu0 0
      %4588 = vperm.xlu0 %4587, %v4522
      %v4589 = vpop.permute.xlu0 %4588
      %4592 = vset.pattern.permute.xlu0 0
      %4593 = vperm.xlu0 %4592, %v4523
      %v4594 = vpop.permute.xlu0 %4593
      %4597 = vset.pattern.permute.xlu0 0
      %4598 = vperm.xlu0 %4597, %v4524
      %v4599 = vpop.permute.xlu0 %4598
      %4602 = vset.pattern.permute.xlu0 0
      %4603 = vperm.xlu0 %4602, %v4525
      %v4604 = vpop.permute.xlu0 %4603
      %v4622 = vunpack.c.l.b16 %v4492
      %v4623 = vunpack.c.l.b16 %v4493
      %v4624 = vunpack.c.l.b16 %v4494
      %v4625 = vunpack.c.l.b16 %v4495
      %v4626 = vunpack.c.l.b16 %v4496
      %v4627 = vunpack.c.l.b16 %v4497
      %v4628 = vunpack.c.l.b16 %v4498
      %v4629 = vunpack.c.l.b16 %v4499
      %v4630 = vunpack.c.l.b16 %v4500
      %v4631 = vunpack.c.l.b16 %v4501
      %v4632 = vunpack.c.l.b16 %v4502
      %v4633 = vunpack.c.l.b16 %v4503
      %v4634 = vunpack.c.l.b16 %v4504
      %v4635 = vunpack.c.l.b16 %v4505
      %v4636 = vunpack.c.l.b16 %v4506
      %v4637 = vunpack.c.l.b16 %v4507
      %v4638 = vpack.c.b16 %v4623, %v4622
      %v4639 = vpack.c.b16 %v4625, %v4624
      %v4640 = vpack.c.b16 %v4627, %v4626
      %v4641 = vpack.c.b16 %v4629, %v4628
      %v4642 = vpack.c.b16 %v4631, %v4630
      %v4643 = vpack.c.b16 %v4633, %v4632
      %v4644 = vpack.c.b16 %v4635, %v4634
      %v4645 = vpack.c.b16 %v4637, %v4636
      %v4647 = vsel %vm4438, %v4638, 0
      %v4650 = vsel %vm4438, %v4639, 0
      %v4653 = vsel %vm4438, %v4640, 0
      %v4656 = vsel %vm4438, %v4641, 0
      %v4659 = vsel %vm4438, %v4642, 0
      %v4662 = vsel %vm4438, %v4643, 0
      %v4665 = vsel %vm4438, %v4644, 0
      %v4668 = vsel %vm4438, %v4645, 0
      %v4671 = vsel %vm4442, %v4508, 0
      %v4674 = vsel %vm4442, %v4509, 0
      %4676 = vmatprep.subr.bf16.mxu0 0
      %4677 = vmatpush1.bf16.msra.mxu0 0
      %4678 = vmatprep.subr.bf16.mxu0 0
      %4679 = vmatpush1.bf16.msra.mxu0 0
      %4680 = vmatprep.subr.bf16.mxu0 0
      %4681 = vmatpush1.bf16.msra.mxu0 0
      %4682 = vmatprep.subr.bf16.mxu0 0
      %4683 = vmatpush1.bf16.msra.mxu0 0
      %4684 = vmatprep.subr.bf16.mxu0 0
      %4685 = vmatpush1.bf16.msra.mxu0 0
      %4686 = vmatprep.subr.bf16.mxu0 0
      %4687 = vmatpush1.bf16.msra.mxu0 0
      %4688 = vmatprep.subr.bf16.mxu0 0
      %4689 = vmatpush1.bf16.msra.mxu0 0
      %4690 = vmatprep.subr.bf16.mxu0 %v4674
      %4691 = vmatpush1.bf16.msra.mxu0 %v4671
      %4692 = vmatprep.subr.bf16.mxu0 0
      %4693 = vmatpush2.bf16.msra.mxu0 0
      %4694 = vmatprep.subr.bf16.mxu0 0
      %4695 = vmatpush2.bf16.msra.mxu0 0
      %4696 = vmatprep.subr.bf16.mxu0 0
      %4697 = vmatpush2.bf16.msra.mxu0 0
      %4698 = vmatprep.subr.bf16.mxu0 0
      %4699 = vmatpush2.bf16.msra.mxu0 0
      %4700 = vmatprep.subr.bf16.mxu0 0
      %4701 = vmatpush2.bf16.msra.mxu0 0
      %4702 = vmatprep.subr.bf16.mxu0 0
      %4703 = vmatpush2.bf16.msra.mxu0 0
      %4704 = vmatprep.subr.bf16.mxu0 0
      %4705 = vmatpush2.bf16.msra.mxu0 0
      %4706 = vmatprep.subr.bf16.mxu0 0
      %4707 = vmatpush2.bf16.msra.mxu0 0
      %4708 = vmatprep.mubr.bf16.mxu0 0
      %4709 = vmatmul.mubr.bf16.gmra.mxu0 %v4647
      %v4710 = vpop.f32.mrf.mxu0
      %v4711 = vadd.f32 %v4529, %v4710
      %v4712 = vpop.f32.mrf.mxu0
      %v4713 = vadd.f32 %v4529, %v4712
      %v4714 = vpop.f32.mrf.mxu0
      %v4715 = vadd.f32 %v4534, %v4714
      %v4716 = vpop.f32.mrf.mxu0
      %v4717 = vadd.f32 %v4534, %v4716
      %4718 = vmatprep.mubr.bf16.mxu0 0
      %4719 = vmatmul.mubr.bf16.gmra.mxu0 %v4650
      %v4720 = vpop.f32.mrf.mxu0
      %v4721 = vadd.f32 %v4539, %v4720
      %v4722 = vpop.f32.mrf.mxu0
      %v4723 = vadd.f32 %v4539, %v4722
      %v4724 = vpop.f32.mrf.mxu0
      %v4725 = vadd.f32 %v4544, %v4724
      %v4726 = vpop.f32.mrf.mxu0
      %v4727 = vadd.f32 %v4544, %v4726
      %4728 = vmatprep.mubr.bf16.mxu0 0
      %4729 = vmatmul.mubr.bf16.gmra.mxu0 %v4653
      %v4730 = vpop.f32.mrf.mxu0
      %v4731 = vadd.f32 %v4549, %v4730
      %v4732 = vpop.f32.mrf.mxu0
      %v4733 = vadd.f32 %v4549, %v4732
      %v4734 = vpop.f32.mrf.mxu0
      %v4735 = vadd.f32 %v4554, %v4734
      %v4736 = vpop.f32.mrf.mxu0
      %v4737 = vadd.f32 %v4554, %v4736
      %4738 = vmatprep.mubr.bf16.mxu0 0
      %4739 = vmatmul.mubr.bf16.gmra.mxu0 %v4656
      %v4740 = vpop.f32.mrf.mxu0
      %v4741 = vadd.f32 %v4559, %v4740
      %v4742 = vpop.f32.mrf.mxu0
      %v4743 = vadd.f32 %v4559, %v4742
      %v4744 = vpop.f32.mrf.mxu0
      %v4745 = vadd.f32 %v4564, %v4744
      %v4746 = vpop.f32.mrf.mxu0
      %v4747 = vadd.f32 %v4564, %v4746
      %4748 = vmatprep.mubr.bf16.mxu0 0
      %4749 = vmatmul.mubr.bf16.gmra.mxu0 %v4659
      %v4750 = vpop.f32.mrf.mxu0
      %v4751 = vadd.f32 %v4569, %v4750
      %v4752 = vpop.f32.mrf.mxu0
      %v4753 = vadd.f32 %v4569, %v4752
      %v4754 = vpop.f32.mrf.mxu0
      %v4755 = vadd.f32 %v4574, %v4754
      %v4756 = vpop.f32.mrf.mxu0
      %v4757 = vadd.f32 %v4574, %v4756
      %4758 = vmatprep.mubr.bf16.mxu0 0
      %4759 = vmatmul.mubr.bf16.gmra.mxu0 %v4662
      %v4760 = vpop.f32.mrf.mxu0
      %v4761 = vadd.f32 %v4579, %v4760
      %v4762 = vpop.f32.mrf.mxu0
      %v4763 = vadd.f32 %v4579, %v4762
      %v4764 = vpop.f32.mrf.mxu0
      %v4765 = vadd.f32 %v4584, %v4764
      %v4766 = vpop.f32.mrf.mxu0
      %v4767 = vadd.f32 %v4584, %v4766
      %4768 = vmatprep.mubr.bf16.mxu0 0
      %4769 = vmatmul.mubr.bf16.gmra.mxu0 %v4665
      %v4770 = vpop.f32.mrf.mxu0
      %v4771 = vadd.f32 %v4589, %v4770
      %v4772 = vpop.f32.mrf.mxu0
      %v4773 = vadd.f32 %v4589, %v4772
      %v4774 = vpop.f32.mrf.mxu0
      %v4775 = vadd.f32 %v4594, %v4774
      %v4776 = vpop.f32.mrf.mxu0
      %v4777 = vadd.f32 %v4594, %v4776
      %4778 = vmatprep.mubr.bf16.mxu0 0
      %4779 = vmatmul.mubr.bf16.gmra.mxu0 %v4668
      %v4780 = vpop.f32.mrf.mxu0
      %v4781 = vadd.f32 %v4599, %v4780
      %v4782 = vpop.f32.mrf.mxu0
      %v4783 = vadd.f32 %v4599, %v4782
      %v4784 = vpop.f32.mrf.mxu0
      %v4785 = vadd.f32 %v4604, %v4784
      %v4786 = vpop.f32.mrf.mxu0
      %v4787 = vadd.f32 %v4604, %v4786
      %4788 = vdwg.mxu0
      %v4789 = vmax.f32 %v4711, 0.0
      %v4790 = vmax.f32 %v4713, 0.0
      %v4791 = vmax.f32 %v4715, 0.0
      %v4792 = vmax.f32 %v4717, 0.0
      %v4793 = vmax.f32 %v4721, 0.0
      %v4794 = vmax.f32 %v4723, 0.0
      %v4795 = vmax.f32 %v4725, 0.0
      %v4796 = vmax.f32 %v4727, 0.0
      %v4797 = vmax.f32 %v4731, 0.0
      %v4798 = vmax.f32 %v4733, 0.0
      %v4799 = vmax.f32 %v4735, 0.0
      %v4800 = vmax.f32 %v4737, 0.0
      %v4801 = vmax.f32 %v4741, 0.0
      %v4802 = vmax.f32 %v4743, 0.0
      %v4803 = vmax.f32 %v4745, 0.0
      %v4804 = vmax.f32 %v4747, 0.0
      %v4805 = vmax.f32 %v4751, 0.0
      %v4806 = vmax.f32 %v4753, 0.0
      %v4807 = vmax.f32 %v4755, 0.0
      %v4808 = vmax.f32 %v4757, 0.0
      %v4809 = vmax.f32 %v4761, 0.0
      %v4810 = vmax.f32 %v4763, 0.0
      %v4811 = vmax.f32 %v4765, 0.0
      %v4812 = vmax.f32 %v4767, 0.0
      %v4813 = vmax.f32 %v4771, 0.0
      %v4814 = vmax.f32 %v4773, 0.0
      %v4815 = vmax.f32 %v4775, 0.0
      %v4816 = vmax.f32 %v4777, 0.0
      %v4817 = vmax.f32 %v4781, 0.0
      %v4818 = vmax.f32 %v4783, 0.0
      %v4819 = vmax.f32 %v4785, 0.0
      %v4820 = vmax.f32 %v4787, 0.0
      %v4821 = vld [vmem:[%s12] sm:$0xff]
      %v4822 = vld [vmem:[%s12 + $0x8] sm:$0xff]
      %v4823 = vld [vmem:[%s12 + $0x10] sm:$0xff]
      %v4824 = vld [vmem:[%s12 + $0x18] sm:$0xff]
      %v4825 = vld [vmem:[%s12 + $0x20] sm:$0xff]
      %v4826 = vld [vmem:[%s12 + $0x28] sm:$0xff]
      %v4827 = vld [vmem:[%s12 + $0x30] sm:$0xff]
      %v4828 = vld [vmem:[%s12 + $0x38] sm:$0xff]
      %v4829 = vld [vmem:[%s12 + $0x40] sm:$0xff]
      %v4830 = vld [vmem:[%s12 + $0x48] sm:$0xff]
      %v4831 = vld [vmem:[%s12 + $0x50] sm:$0xff]
      %v4832 = vld [vmem:[%s12 + $0x58] sm:$0xff]
      %v4833 = vld [vmem:[%s12 + $0x60] sm:$0xff]
      %v4834 = vld [vmem:[%s12 + $0x68] sm:$0xff]
      %v4835 = vld [vmem:[%s12 + $0x70] sm:$0xff]
      %v4836 = vld [vmem:[%s12 + $0x78] sm:$0xff]
      %v4837 = vld [vmem:[%s12 + $0x80] sm:$0xff]
      %v4838 = vld [vmem:[%s12 + $0x88] sm:$0xff]
      %v4839 = vld [vmem:[%s12 + $0x90] sm:$0xff]
      %v4840 = vld [vmem:[%s12 + $0x98] sm:$0xff]
      %v4841 = vld [vmem:[%s12 + $0xa0] sm:$0xff]
      %v4842 = vld [vmem:[%s12 + $0xa8] sm:$0xff]
      %v4843 = vld [vmem:[%s12 + $0xb0] sm:$0xff]
      %v4844 = vld [vmem:[%s12 + $0xb8] sm:$0xff]
      %v4845 = vld [vmem:[%s12 + $0xc0] sm:$0xff]
      %v4846 = vld [vmem:[%s12 + $0xc8] sm:$0xff]
      %v4847 = vld [vmem:[%s12 + $0xd0] sm:$0xff]
      %v4848 = vld [vmem:[%s12 + $0xd8] sm:$0xff]
      %v4849 = vld [vmem:[%s12 + $0xe0] sm:$0xff]
      %v4850 = vld [vmem:[%s12 + $0xe8] sm:$0xff]
      %v4851 = vld [vmem:[%s12 + $0xf0] sm:$0xff]
      %v4852 = vld [vmem:[%s12 + $0xf8] sm:$0xff]
      %v4853 = vld [vmem:[%s12 + $0x100] sm:$0xff]
      %v4854 = vld [vmem:[%s12 + $0x108] sm:$0xff]
      %v4855 = vld [vmem:[%s12 + $0x110] sm:$0xff]
      %v4856 = vld [vmem:[%s12 + $0x118] sm:$0xff]
      %v4857 = vld [vmem:[%s12 + $0x120] sm:$0xff]
      %v4858 = vld [vmem:[%s12 + $0x128] sm:$0xff]
      %v4859 = vld [vmem:[%s12 + $0x130] sm:$0xff]
      %v4860 = vld [vmem:[%s12 + $0x138] sm:$0xff]
      %v4861 = vld [vmem:[%s12 + $0x140] sm:$0xff]
      %v4862 = vld [vmem:[%s12 + $0x148] sm:$0xff]
      %v4863 = vld [vmem:[%s12 + $0x150] sm:$0xff]
      %v4864 = vld [vmem:[%s12 + $0x158] sm:$0xff]
      %v4865 = vld [vmem:[%s12 + $0x160] sm:$0xff]
      %v4866 = vld [vmem:[%s12 + $0x168] sm:$0xff]
      %v4867 = vld [vmem:[%s12 + $0x170] sm:$0xff]
      %v4868 = vld [vmem:[%s12 + $0x178] sm:$0xff]
      %v4869 = vld [vmem:[%s12 + $0x180] sm:$0xff]
      %v4870 = vld [vmem:[%s12 + $0x188] sm:$0xff]
      %v4871 = vld [vmem:[%s12 + $0x190] sm:$0xff]
      %v4872 = vld [vmem:[%s12 + $0x198] sm:$0xff]
      %v4873 = vld [vmem:[%s12 + $0x1a0] sm:$0xff]
      %v4874 = vld [vmem:[%s12 + $0x1a8] sm:$0xff]
      %v4875 = vld [vmem:[%s12 + $0x1b0] sm:$0xff]
      %v4876 = vld [vmem:[%s12 + $0x1b8] sm:$0xff]
      %v4877 = vld [vmem:[%s12 + $0x1c0] sm:$0xff]
      %v4878 = vld [vmem:[%s12 + $0x1c8] sm:$0xff]
      %v4879 = vld [vmem:[%s12 + $0x1d0] sm:$0xff]
      %v4880 = vld [vmem:[%s12 + $0x1d8] sm:$0xff]
      %v4881 = vld [vmem:[%s12 + $0x1e0] sm:$0xff]
      %v4882 = vld [vmem:[%s12 + $0x1e8] sm:$0xff]
      %v4883 = vld [vmem:[%s12 + $0x1f0] sm:$0xff]
      %v4884 = vld [vmem:[%s12 + $0x1f8] sm:$0xff]
      %v4885 = vld [vmem:[%s12 + $0x200] sm:$0xff]
      %v4886 = vld [vmem:[%s12 + $0x208] sm:$0xff]
      %v4887 = vld [vmem:[%s12 + $0x210] sm:$0xff]
      %v4888 = vld [vmem:[%s12 + $0x218] sm:$0xff]
      %v4889 = vld [vmem:[%s12 + $0x220] sm:$0xff]
      %v4890 = vld [vmem:[%s12 + $0x228] sm:$0xff]
      %v4891 = vld [vmem:[%s12 + $0x230] sm:$0xff]
      %v4892 = vld [vmem:[%s12 + $0x238] sm:$0xff]
      %v4893 = vld [vmem:[%s12 + $0x240] sm:$0xff]
      %v4894 = vld [vmem:[%s12 + $0x248] sm:$0xff]
      %v4895 = vld [vmem:[%s12 + $0x250] sm:$0xff]
      %v4896 = vld [vmem:[%s12 + $0x258] sm:$0xff]
      %v4897 = vld [vmem:[%s12 + $0x260] sm:$0xff]
      %v4898 = vld [vmem:[%s12 + $0x268] sm:$0xff]
      %v4899 = vld [vmem:[%s12 + $0x270] sm:$0xff]
      %v4900 = vld [vmem:[%s12 + $0x278] sm:$0xff]
      %v4901 = vld [vmem:[%s12 + $0x280] sm:$0xff]
      %v4902 = vld [vmem:[%s12 + $0x288] sm:$0xff]
      %v4903 = vld [vmem:[%s12 + $0x290] sm:$0xff]
      %v4904 = vld [vmem:[%s12 + $0x298] sm:$0xff]
      %v4905 = vld [vmem:[%s12 + $0x2a0] sm:$0xff]
      %v4906 = vld [vmem:[%s12 + $0x2a8] sm:$0xff]
      %v4907 = vld [vmem:[%s12 + $0x2b0] sm:$0xff]
      %v4908 = vld [vmem:[%s12 + $0x2b8] sm:$0xff]
      %v4909 = vld [vmem:[%s12 + $0x2c0] sm:$0xff]
      %v4910 = vld [vmem:[%s12 + $0x2c8] sm:$0xff]
      %v4911 = vld [vmem:[%s12 + $0x2d0] sm:$0xff]
      %v4912 = vld [vmem:[%s12 + $0x2d8] sm:$0xff]
      %v4913 = vld [vmem:[%s12 + $0x2e0] sm:$0xff]
      %v4914 = vld [vmem:[%s12 + $0x2e8] sm:$0xff]
      %v4915 = vld [vmem:[%s12 + $0x2f0] sm:$0xff]
      %v4916 = vld [vmem:[%s12 + $0x2f8] sm:$0xff]
      %v4917 = vld [vmem:[%s12 + $0x300] sm:$0xff]
      %v4918 = vld [vmem:[%s12 + $0x308] sm:$0xff]
      %v4919 = vld [vmem:[%s12 + $0x310] sm:$0xff]
      %v4920 = vld [vmem:[%s12 + $0x318] sm:$0xff]
      %v4921 = vld [vmem:[%s12 + $0x320] sm:$0xff]
      %v4922 = vld [vmem:[%s12 + $0x328] sm:$0xff]
      %v4923 = vld [vmem:[%s12 + $0x330] sm:$0xff]
      %v4924 = vld [vmem:[%s12 + $0x338] sm:$0xff]
      %v4925 = vld [vmem:[%s12 + $0x340] sm:$0xff]
      %v4926 = vld [vmem:[%s12 + $0x348] sm:$0xff]
      %v4927 = vld [vmem:[%s12 + $0x350] sm:$0xff]
      %v4928 = vld [vmem:[%s12 + $0x358] sm:$0xff]
      %v4929 = vld [vmem:[%s12 + $0x360] sm:$0xff]
      %v4930 = vld [vmem:[%s12 + $0x368] sm:$0xff]
      %v4931 = vld [vmem:[%s12 + $0x370] sm:$0xff]
      %v4932 = vld [vmem:[%s12 + $0x378] sm:$0xff]
      %v4933 = vld [vmem:[%s12 + $0x380] sm:$0xff]
      %v4934 = vld [vmem:[%s12 + $0x388] sm:$0xff]
      %v4935 = vld [vmem:[%s12 + $0x390] sm:$0xff]
      %v4936 = vld [vmem:[%s12 + $0x398] sm:$0xff]
      %v4937 = vld [vmem:[%s12 + $0x3a0] sm:$0xff]
      %v4938 = vld [vmem:[%s12 + $0x3a8] sm:$0xff]
      %v4939 = vld [vmem:[%s12 + $0x3b0] sm:$0xff]
      %v4940 = vld [vmem:[%s12 + $0x3b8] sm:$0xff]
      %v4941 = vld [vmem:[%s12 + $0x3c0] sm:$0xff]
      %v4942 = vld [vmem:[%s12 + $0x3c8] sm:$0xff]
      %v4943 = vld [vmem:[%s12 + $0x3d0] sm:$0xff]
      %v4944 = vld [vmem:[%s12 + $0x3d8] sm:$0xff]
      %v4945 = vld [vmem:[%s12 + $0x3e0] sm:$0xff]
      %v4946 = vld [vmem:[%s12 + $0x3e8] sm:$0xff]
      %v4947 = vld [vmem:[%s12 + $0x3f0] sm:$0xff]
      %v4948 = vld [vmem:[%s12 + $0x3f8] sm:$0xff]
      %v4949 = vld [vmem:[%s12 + $0x400] sm:$0xff]
      %v4950 = vld [vmem:[%s12 + $0x408] sm:$0xff]
      %v4951 = vld [vmem:[%s12 + $0x410] sm:$0xff]
      %v4952 = vld [vmem:[%s12 + $0x418] sm:$0xff]
      %v4953 = vld [vmem:[%s12 + $0x420] sm:$0xff]
      %v4954 = vld [vmem:[%s12 + $0x428] sm:$0xff]
      %v4955 = vld [vmem:[%s12 + $0x430] sm:$0xff]
      %v4956 = vld [vmem:[%s12 + $0x438] sm:$0xff]
      %v4957 = vld [vmem:[%s12 + $0x440] sm:$0xff]
      %v4958 = vld [vmem:[%s12 + $0x448] sm:$0xff]
      %v4959 = vld [vmem:[%s12 + $0x450] sm:$0xff]
      %v4960 = vld [vmem:[%s12 + $0x458] sm:$0xff]
      %v4961 = vld [vmem:[%s12 + $0x460] sm:$0xff]
      %v4962 = vld [vmem:[%s12 + $0x468] sm:$0xff]
      %v4963 = vld [vmem:[%s12 + $0x470] sm:$0xff]
      %v4964 = vld [vmem:[%s12 + $0x478] sm:$0xff]
      %v4965 = vld [vmem:[%s12 + $0x480] sm:$0xff]
      %v4966 = vld [vmem:[%s12 + $0x488] sm:$0xff]
      %v4967 = vld [vmem:[%s12 + $0x490] sm:$0xff]
      %v4968 = vld [vmem:[%s12 + $0x498] sm:$0xff]
      %v4969 = vld [vmem:[%s12 + $0x4a0] sm:$0xff]
      %v4970 = vld [vmem:[%s12 + $0x4a8] sm:$0xff]
      %v4971 = vld [vmem:[%s12 + $0x4b0] sm:$0xff]
      %v4972 = vld [vmem:[%s12 + $0x4b8] sm:$0xff]
      %v4973 = vld [vmem:[%s12 + $0x4c0] sm:$0xff]
      %v4974 = vld [vmem:[%s12 + $0x4c8] sm:$0xff]
      %v4975 = vld [vmem:[%s12 + $0x4d0] sm:$0xff]
      %v4976 = vld [vmem:[%s12 + $0x4d8] sm:$0xff]
      %v4977 = vld [vmem:[%s12 + $0x4e0] sm:$0xff]
      %v4978 = vld [vmem:[%s12 + $0x4e8] sm:$0xff]
      %v4979 = vld [vmem:[%s12 + $0x4f0] sm:$0xff]
      %v4980 = vld [vmem:[%s12 + $0x4f8] sm:$0xff]
      %v4981 = vld [vmem:[%s12 + $0x500] sm:$0xff]
      %v4982 = vld [vmem:[%s12 + $0x508] sm:$0xff]
      %v4983 = vld [vmem:[%s12 + $0x510] sm:$0xff]
      %v4984 = vld [vmem:[%s12 + $0x518] sm:$0xff]
      %v4985 = vld [vmem:[%s12 + $0x520] sm:$0xff]
      %v4986 = vld [vmem:[%s12 + $0x528] sm:$0xff]
      %v4987 = vld [vmem:[%s12 + $0x530] sm:$0xff]
      %v4988 = vld [vmem:[%s12 + $0x538] sm:$0xff]
      %v4989 = vld [vmem:[%s12 + $0x540] sm:$0xff]
      %v4990 = vld [vmem:[%s12 + $0x548] sm:$0xff]
      %v4991 = vld [vmem:[%s12 + $0x550] sm:$0xff]
      %v4992 = vld [vmem:[%s12 + $0x558] sm:$0xff]
      %v4993 = vld [vmem:[%s12 + $0x560] sm:$0xff]
      %v4994 = vld [vmem:[%s12 + $0x568] sm:$0xff]
      %v4995 = vld [vmem:[%s12 + $0x570] sm:$0xff]
      %v4996 = vld [vmem:[%s12 + $0x578] sm:$0xff]
      %v4997 = vld [vmem:[%s12 + $0x580] sm:$0xff]
      %v4998 = vld [vmem:[%s12 + $0x588] sm:$0xff]
      %v4999 = vld [vmem:[%s12 + $0x590] sm:$0xff]
      %v5000 = vld [vmem:[%s12 + $0x598] sm:$0xff]
      %v5001 = vld [vmem:[%s12 + $0x5a0] sm:$0xff]
      %v5002 = vld [vmem:[%s12 + $0x5a8] sm:$0xff]
      %v5003 = vld [vmem:[%s12 + $0x5b0] sm:$0xff]
      %v5004 = vld [vmem:[%s12 + $0x5b8] sm:$0xff]
      %v5005 = vld [vmem:[%s12 + $0x5c0] sm:$0xff]
      %v5006 = vld [vmem:[%s12 + $0x5c8] sm:$0xff]
      %v5007 = vld [vmem:[%s12 + $0x5d0] sm:$0xff]
      %v5008 = vld [vmem:[%s12 + $0x5d8] sm:$0xff]
      %v5009 = vld [vmem:[%s12 + $0x5e0] sm:$0xff]
      %v5010 = vld [vmem:[%s12 + $0x5e8] sm:$0xff]
      %v5011 = vld [vmem:[%s12 + $0x5f0] sm:$0xff]
      %v5012 = vld [vmem:[%s12 + $0x5f8] sm:$0xff]
      %v5013 = vld [vmem:[%s12 + $0x600] sm:$0xff]
      %v5014 = vld [vmem:[%s12 + $0x608] sm:$0xff]
      %v5015 = vld [vmem:[%s12 + $0x610] sm:$0xff]
      %v5016 = vld [vmem:[%s12 + $0x618] sm:$0xff]
      %v5017 = vld [vmem:[%s12 + $0x620] sm:$0xff]
      %v5018 = vld [vmem:[%s12 + $0x628] sm:$0xff]
      %v5019 = vld [vmem:[%s12 + $0x630] sm:$0xff]
      %v5020 = vld [vmem:[%s12 + $0x638] sm:$0xff]
      %v5021 = vld [vmem:[%s12 + $0x640] sm:$0xff]
      %v5022 = vld [vmem:[%s12 + $0x648] sm:$0xff]
      %v5023 = vld [vmem:[%s12 + $0x650] sm:$0xff]
      %v5024 = vld [vmem:[%s12 + $0x658] sm:$0xff]
      %v5025 = vld [vmem:[%s12 + $0x660] sm:$0xff]
      %v5026 = vld [vmem:[%s12 + $0x668] sm:$0xff]
      %v5027 = vld [vmem:[%s12 + $0x670] sm:$0xff]
      %v5028 = vld [vmem:[%s12 + $0x678] sm:$0xff]
      %v5029 = vld [vmem:[%s12 + $0x680] sm:$0xff]
      %v5030 = vld [vmem:[%s12 + $0x688] sm:$0xff]
      %v5031 = vld [vmem:[%s12 + $0x690] sm:$0xff]
      %v5032 = vld [vmem:[%s12 + $0x698] sm:$0xff]
      %v5033 = vld [vmem:[%s12 + $0x6a0] sm:$0xff]
      %v5034 = vld [vmem:[%s12 + $0x6a8] sm:$0xff]
      %v5035 = vld [vmem:[%s12 + $0x6b0] sm:$0xff]
      %v5036 = vld [vmem:[%s12 + $0x6b8] sm:$0xff]
      %v5037 = vld [vmem:[%s12 + $0x6c0] sm:$0xff]
      %v5038 = vld [vmem:[%s12 + $0x6c8] sm:$0xff]
      %v5039 = vld [vmem:[%s12 + $0x6d0] sm:$0xff]
      %v5040 = vld [vmem:[%s12 + $0x6d8] sm:$0xff]
      %v5041 = vld [vmem:[%s12 + $0x6e0] sm:$0xff]
      %v5042 = vld [vmem:[%s12 + $0x6e8] sm:$0xff]
      %v5043 = vld [vmem:[%s12 + $0x6f0] sm:$0xff]
      %v5044 = vld [vmem:[%s12 + $0x6f8] sm:$0xff]
      %v5045 = vld [vmem:[%s12 + $0x700] sm:$0xff]
      %v5046 = vld [vmem:[%s12 + $0x708] sm:$0xff]
      %v5047 = vld [vmem:[%s12 + $0x710] sm:$0xff]
      %v5048 = vld [vmem:[%s12 + $0x718] sm:$0xff]
      %v5049 = vld [vmem:[%s12 + $0x720] sm:$0xff]
      %v5050 = vld [vmem:[%s12 + $0x728] sm:$0xff]
      %v5051 = vld [vmem:[%s12 + $0x730] sm:$0xff]
      %v5052 = vld [vmem:[%s12 + $0x738] sm:$0xff]
      %v5053 = vld [vmem:[%s12 + $0x740] sm:$0xff]
      %v5054 = vld [vmem:[%s12 + $0x748] sm:$0xff]
      %v5055 = vld [vmem:[%s12 + $0x750] sm:$0xff]
      %v5056 = vld [vmem:[%s12 + $0x758] sm:$0xff]
      %v5057 = vld [vmem:[%s12 + $0x760] sm:$0xff]
      %v5058 = vld [vmem:[%s12 + $0x768] sm:$0xff]
      %v5059 = vld [vmem:[%s12 + $0x770] sm:$0xff]
      %v5060 = vld [vmem:[%s12 + $0x778] sm:$0xff]
      %v5061 = vld [vmem:[%s12 + $0x780] sm:$0xff]
      %v5062 = vld [vmem:[%s12 + $0x788] sm:$0xff]
      %v5063 = vld [vmem:[%s12 + $0x790] sm:$0xff]
      %v5064 = vld [vmem:[%s12 + $0x798] sm:$0xff]
      %v5065 = vld [vmem:[%s12 + $0x7a0] sm:$0xff]
      %v5066 = vld [vmem:[%s12 + $0x7a8] sm:$0xff]
      %v5067 = vld [vmem:[%s12 + $0x7b0] sm:$0xff]
      %v5068 = vld [vmem:[%s12 + $0x7b8] sm:$0xff]
      %v5069 = vld [vmem:[%s12 + $0x7c0] sm:$0xff]
      %v5070 = vld [vmem:[%s12 + $0x7c8] sm:$0xff]
      %v5071 = vld [vmem:[%s12 + $0x7d0] sm:$0xff]
      %v5072 = vld [vmem:[%s12 + $0x7d8] sm:$0xff]
      %v5073 = vld [vmem:[%s12 + $0x7e0] sm:$0xff]
      %v5074 = vld [vmem:[%s12 + $0x7e8] sm:$0xff]
      %v5075 = vld [vmem:[%s12 + $0x7f0] sm:$0xff]
      %v5076 = vld [vmem:[%s12 + $0x7f8] sm:$0xff]
      %5077 = vmatprep.subr.mxu0 %v4942
      %5078 = vmatpush1.msra.mxu0 %v4941
      %5079 = vmatprep.subr.mxu0 %v4934
      %5080 = vmatpush1.msra.mxu0 %v4933
      %5081 = vmatprep.subr.mxu0 %v4926
      %5082 = vmatpush1.msra.mxu0 %v4925
      %5083 = vmatprep.subr.mxu0 %v4918
      %5084 = vmatpush1.msra.mxu0 %v4917
      %5085 = vmatprep.subr.mxu0 %v4910
      %5086 = vmatpush1.msra.mxu0 %v4909
      %5087 = vmatprep.subr.mxu0 %v4902
      %5088 = vmatpush1.msra.mxu0 %v4901
      %5089 = vmatprep.subr.mxu0 %v4894
      %5090 = vmatpush1.msra.mxu0 %v4893
      %5091 = vmatprep.subr.mxu0 %v4886
      %5092 = vmatpush1.msra.mxu0 %v4885
      %5093 = vmatprep.subr.mxu0 %v4878
      %5094 = vmatpush1.msra.mxu0 %v4877
      %5095 = vmatprep.subr.mxu0 %v4870
      %5096 = vmatpush1.msra.mxu0 %v4869
      %5097 = vmatprep.subr.mxu0 %v4862
      %5098 = vmatpush1.msra.mxu0 %v4861
      %5099 = vmatprep.subr.mxu0 %v4854
      %5100 = vmatpush1.msra.mxu0 %v4853
      %5101 = vmatprep.subr.mxu0 %v4846
      %5102 = vmatpush1.msra.mxu0 %v4845
      %5103 = vmatprep.subr.mxu0 %v4838
      %5104 = vmatpush1.msra.mxu0 %v4837
      %5105 = vmatprep.subr.mxu0 %v4830
      %5106 = vmatpush1.msra.mxu0 %v4829
      %5107 = vmatprep.subr.mxu0 %v4822
      %5108 = vmatpush1.msra.mxu0 %v4821
      %5109 = vmatprep.subr.mxu0 %v5070
      %5110 = vmatpush2.msra.mxu0 %v5069
      %5111 = vmatprep.subr.mxu0 %v5062
      %5112 = vmatpush2.msra.mxu0 %v5061
      %5113 = vmatprep.subr.mxu0 %v5054
      %5114 = vmatpush2.msra.mxu0 %v5053
      %5115 = vmatprep.subr.mxu0 %v5046
      %5116 = vmatpush2.msra.mxu0 %v5045
      %5117 = vmatprep.subr.mxu0 %v5038
      %5118 = vmatpush2.msra.mxu0 %v5037
      %5119 = vmatprep.subr.mxu0 %v5030
      %5120 = vmatpush2.msra.mxu0 %v5029
      %5121 = vmatprep.subr.mxu0 %v5022
      %5122 = vmatpush2.msra.mxu0 %v5021
      %5123 = vmatprep.subr.mxu0 %v5014
      %5124 = vmatpush2.msra.mxu0 %v5013
      %5125 = vmatprep.subr.mxu0 %v5006
      %5126 = vmatpush2.msra.mxu0 %v5005
      %5127 = vmatprep.subr.mxu0 %v4998
      %5128 = vmatpush2.msra.mxu0 %v4997
      %5129 = vmatprep.subr.mxu0 %v4990
      %5130 = vmatpush2.msra.mxu0 %v4989
      %5131 = vmatprep.subr.mxu0 %v4982
      %5132 = vmatpush2.msra.mxu0 %v4981
      %5133 = vmatprep.subr.mxu0 %v4974
      %5134 = vmatpush2.msra.mxu0 %v4973
      %5135 = vmatprep.subr.mxu0 %v4966
      %5136 = vmatpush2.msra.mxu0 %v4965
      %5137 = vmatprep.subr.mxu0 %v4958
      %5138 = vmatpush2.msra.mxu0 %v4957
      %5139 = vmatprep.subr.mxu0 %v4950
      %5140 = vmatpush2.msra.mxu0 %v4949
      %5141 = vmatprep.mubr.f32.mxu0 %v4790
      %5142 = vmatmul.mubr.f32.gmra.mxu0 %v4789
      %v5143 = vpop.f32.mrf.mxu0
      %v5144 = vadd.f32 0.0, %v5143
      %v5145 = vpop.f32.mrf.mxu0
      %v5146 = vadd.f32 0.0, %v5145
      %5147 = vmatprep.mubr.f32.mxu0 %v4792
      %5148 = vmatmul.mubr.f32.gmra.mxu0 %v4791
      %v5149 = vpop.f32.mrf.mxu0
      %v5150 = vadd.f32 0.0, %v5149
      %v5151 = vpop.f32.mrf.mxu0
      %v5152 = vadd.f32 0.0, %v5151
      %5153 = vmatprep.mubr.f32.mxu0 %v4794
      %5154 = vmatmul.mubr.f32.gmra.mxu0 %v4793
      %v5155 = vpop.f32.mrf.mxu0
      %v5156 = vadd.f32 0.0, %v5155
      %v5157 = vpop.f32.mrf.mxu0
      %v5158 = vadd.f32 0.0, %v5157
      %5159 = vmatprep.mubr.f32.mxu0 %v4796
      %5160 = vmatmul.mubr.f32.gmra.mxu0 %v4795
      %v5161 = vpop.f32.mrf.mxu0
      %v5162 = vadd.f32 0.0, %v5161
      %v5163 = vpop.f32.mrf.mxu0
      %v5164 = vadd.f32 0.0, %v5163
      %5165 = vmatprep.mubr.f32.mxu0 %v4798
      %5166 = vmatmul.mubr.f32.gmra.mxu0 %v4797
      %v5167 = vpop.f32.mrf.mxu0
      %v5168 = vadd.f32 0.0, %v5167
      %v5169 = vpop.f32.mrf.mxu0
      %v5170 = vadd.f32 0.0, %v5169
      %5171 = vmatprep.mubr.f32.mxu0 %v4800
      %5172 = vmatmul.mubr.f32.gmra.mxu0 %v4799
      %v5173 = vpop.f32.mrf.mxu0
      %v5174 = vadd.f32 0.0, %v5173
      %v5175 = vpop.f32.mrf.mxu0
      %v5176 = vadd.f32 0.0, %v5175
      %5177 = vmatprep.mubr.f32.mxu0 %v4802
      %5178 = vmatmul.mubr.f32.gmra.mxu0 %v4801
      %v5179 = vpop.f32.mrf.mxu0
      %v5180 = vadd.f32 0.0, %v5179
      %v5181 = vpop.f32.mrf.mxu0
      %v5182 = vadd.f32 0.0, %v5181
      %5183 = vmatprep.mubr.f32.mxu0 %v4804
      %5184 = vmatmul.mubr.f32.gmra.mxu0 %v4803
      %v5185 = vpop.f32.mrf.mxu0
      %v5186 = vadd.f32 0.0, %v5185
      %v5187 = vpop.f32.mrf.mxu0
      %v5188 = vadd.f32 0.0, %v5187
      %5189 = vmatprep.mubr.f32.mxu0 %v4806
      %5190 = vmatmul.mubr.f32.gmra.mxu0 %v4805
      %v5191 = vpop.f32.mrf.mxu0
      %v5192 = vadd.f32 0.0, %v5191
      %v5193 = vpop.f32.mrf.mxu0
      %v5194 = vadd.f32 0.0, %v5193
      %5195 = vmatprep.mubr.f32.mxu0 %v4808
      %5196 = vmatmul.mubr.f32.gmra.mxu0 %v4807
      %v5197 = vpop.f32.mrf.mxu0
      %v5198 = vadd.f32 0.0, %v5197
      %v5199 = vpop.f32.mrf.mxu0
      %v5200 = vadd.f32 0.0, %v5199
      %5201 = vmatprep.mubr.f32.mxu0 %v4810
      %5202 = vmatmul.mubr.f32.gmra.mxu0 %v4809
      %v5203 = vpop.f32.mrf.mxu0
      %v5204 = vadd.f32 0.0, %v5203
      %v5205 = vpop.f32.mrf.mxu0
      %v5206 = vadd.f32 0.0, %v5205
      %5207 = vmatprep.mubr.f32.mxu0 %v4812
      %5208 = vmatmul.mubr.f32.gmra.mxu0 %v4811
      %v5209 = vpop.f32.mrf.mxu0
      %v5210 = vadd.f32 0.0, %v5209
      %v5211 = vpop.f32.mrf.mxu0
      %v5212 = vadd.f32 0.0, %v5211
      %5213 = vmatprep.mubr.f32.mxu0 %v4814
      %5214 = vmatmul.mubr.f32.gmra.mxu0 %v4813
      %v5215 = vpop.f32.mrf.mxu0
      %v5216 = vadd.f32 0.0, %v5215
      %v5217 = vpop.f32.mrf.mxu0
      %v5218 = vadd.f32 0.0, %v5217
      %5219 = vmatprep.mubr.f32.mxu0 %v4816
      %5220 = vmatmul.mubr.f32.gmra.mxu0 %v4815
      %v5221 = vpop.f32.mrf.mxu0
      %v5222 = vadd.f32 0.0, %v5221
      %v5223 = vpop.f32.mrf.mxu0
      %v5224 = vadd.f32 0.0, %v5223
      %5225 = vmatprep.mubr.f32.mxu0 %v4818
      %5226 = vmatmul.mubr.f32.gmra.mxu0 %v4817
      %v5227 = vpop.f32.mrf.mxu0
      %v5228 = vadd.f32 0.0, %v5227
      %v5229 = vpop.f32.mrf.mxu0
      %v5230 = vadd.f32 0.0, %v5229
      %5231 = vmatprep.mubr.f32.mxu0 %v4820
      %5232 = vmatmul.mubr.f32.gmra.mxu0 %v4819
      %v5233 = vpop.f32.mrf.mxu0
      %v5234 = vadd.f32 0.0, %v5233
      %v5235 = vpop.f32.mrf.mxu0
      %v5236 = vadd.f32 0.0, %v5235
      %5237 = vdwg.mxu0
      %5238 = vmatprep.subr.mxu0 %v4944
      %5239 = vmatpush1.msra.mxu0 %v4943
      %5240 = vmatprep.subr.mxu0 %v4936
      %5241 = vmatpush1.msra.mxu0 %v4935
      %5242 = vmatprep.subr.mxu0 %v4928
      %5243 = vmatpush1.msra.mxu0 %v4927
      %5244 = vmatprep.subr.mxu0 %v4920
      %5245 = vmatpush1.msra.mxu0 %v4919
      %5246 = vmatprep.subr.mxu0 %v4912
      %5247 = vmatpush1.msra.mxu0 %v4911
      %5248 = vmatprep.subr.mxu0 %v4904
      %5249 = vmatpush1.msra.mxu0 %v4903
      %5250 = vmatprep.subr.mxu0 %v4896
      %5251 = vmatpush1.msra.mxu0 %v4895
      %5252 = vmatprep.subr.mxu0 %v4888
      %5253 = vmatpush1.msra.mxu0 %v4887
      %5254 = vmatprep.subr.mxu0 %v4880
      %5255 = vmatpush1.msra.mxu0 %v4879
      %5256 = vmatprep.subr.mxu0 %v4872
      %5257 = vmatpush1.msra.mxu0 %v4871
      %5258 = vmatprep.subr.mxu0 %v4864
      %5259 = vmatpush1.msra.mxu0 %v4863
      %5260 = vmatprep.subr.mxu0 %v4856
      %5261 = vmatpush1.msra.mxu0 %v4855
      %5262 = vmatprep.subr.mxu0 %v4848
      %5263 = vmatpush1.msra.mxu0 %v4847
      %5264 = vmatprep.subr.mxu0 %v4840
      %5265 = vmatpush1.msra.mxu0 %v4839
      %5266 = vmatprep.subr.mxu0 %v4832
      %5267 = vmatpush1.msra.mxu0 %v4831
      %5268 = vmatprep.subr.mxu0 %v4824
      %5269 = vmatpush1.msra.mxu0 %v4823
      %5270 = vmatprep.subr.mxu0 %v5072
      %5271 = vmatpush2.msra.mxu0 %v5071
      %5272 = vmatprep.subr.mxu0 %v5064
      %5273 = vmatpush2.msra.mxu0 %v5063
      %5274 = vmatprep.subr.mxu0 %v5056
      %5275 = vmatpush2.msra.mxu0 %v5055
      %5276 = vmatprep.subr.mxu0 %v5048
      %5277 = vmatpush2.msra.mxu0 %v5047
      %5278 = vmatprep.subr.mxu0 %v5040
      %5279 = vmatpush2.msra.mxu0 %v5039
      %5280 = vmatprep.subr.mxu0 %v5032
      %5281 = vmatpush2.msra.mxu0 %v5031
      %5282 = vmatprep.subr.mxu0 %v5024
      %5283 = vmatpush2.msra.mxu0 %v5023
      %5284 = vmatprep.subr.mxu0 %v5016
      %5285 = vmatpush2.msra.mxu0 %v5015
      %5286 = vmatprep.subr.mxu0 %v5008
      %5287 = vmatpush2.msra.mxu0 %v5007
      %5288 = vmatprep.subr.mxu0 %v5000
      %5289 = vmatpush2.msra.mxu0 %v4999
      %5290 = vmatprep.subr.mxu0 %v4992
      %5291 = vmatpush2.msra.mxu0 %v4991
      %5292 = vmatprep.subr.mxu0 %v4984
      %5293 = vmatpush2.msra.mxu0 %v4983
      %5294 = vmatprep.subr.mxu0 %v4976
      %5295 = vmatpush2.msra.mxu0 %v4975
      %5296 = vmatprep.subr.mxu0 %v4968
      %5297 = vmatpush2.msra.mxu0 %v4967
      %5298 = vmatprep.subr.mxu0 %v4960
      %5299 = vmatpush2.msra.mxu0 %v4959
      %5300 = vmatprep.subr.mxu0 %v4952
      %5301 = vmatpush2.msra.mxu0 %v4951
      %5302 = vmatprep.mubr.f32.mxu0 %v4790
      %5303 = vmatmul.mubr.f32.gmra.mxu0 %v4789
      %v5304 = vpop.f32.mrf.mxu0
      %v5305 = vadd.f32 0.0, %v5304
      %v5306 = vpop.f32.mrf.mxu0
      %v5307 = vadd.f32 0.0, %v5306
      %5308 = vmatprep.mubr.f32.mxu0 %v4792
      %5309 = vmatmul.mubr.f32.gmra.mxu0 %v4791
      %v5310 = vpop.f32.mrf.mxu0
      %v5311 = vadd.f32 0.0, %v5310
      %v5312 = vpop.f32.mrf.mxu0
      %v5313 = vadd.f32 0.0, %v5312
      %5314 = vmatprep.mubr.f32.mxu0 %v4794
      %5315 = vmatmul.mubr.f32.gmra.mxu0 %v4793
      %v5316 = vpop.f32.mrf.mxu0
      %v5317 = vadd.f32 0.0, %v5316
      %v5318 = vpop.f32.mrf.mxu0
      %v5319 = vadd.f32 0.0, %v5318
      %5320 = vmatprep.mubr.f32.mxu0 %v4796
      %5321 = vmatmul.mubr.f32.gmra.mxu0 %v4795
      %v5322 = vpop.f32.mrf.mxu0
      %v5323 = vadd.f32 0.0, %v5322
      %v5324 = vpop.f32.mrf.mxu0
      %v5325 = vadd.f32 0.0, %v5324
      %5326 = vmatprep.mubr.f32.mxu0 %v4798
      %5327 = vmatmul.mubr.f32.gmra.mxu0 %v4797
      %v5328 = vpop.f32.mrf.mxu0
      %v5329 = vadd.f32 0.0, %v5328
      %v5330 = vpop.f32.mrf.mxu0
      %v5331 = vadd.f32 0.0, %v5330
      %5332 = vmatprep.mubr.f32.mxu0 %v4800
      %5333 = vmatmul.mubr.f32.gmra.mxu0 %v4799
      %v5334 = vpop.f32.mrf.mxu0
      %v5335 = vadd.f32 0.0, %v5334
      %v5336 = vpop.f32.mrf.mxu0
      %v5337 = vadd.f32 0.0, %v5336
      %5338 = vmatprep.mubr.f32.mxu0 %v4802
      %5339 = vmatmul.mubr.f32.gmra.mxu0 %v4801
      %v5340 = vpop.f32.mrf.mxu0
      %v5341 = vadd.f32 0.0, %v5340
      %v5342 = vpop.f32.mrf.mxu0
      %v5343 = vadd.f32 0.0, %v5342
      %5344 = vmatprep.mubr.f32.mxu0 %v4804
      %5345 = vmatmul.mubr.f32.gmra.mxu0 %v4803
      %v5346 = vpop.f32.mrf.mxu0
      %v5347 = vadd.f32 0.0, %v5346
      %v5348 = vpop.f32.mrf.mxu0
      %v5349 = vadd.f32 0.0, %v5348
      %5350 = vmatprep.mubr.f32.mxu0 %v4806
      %5351 = vmatmul.mubr.f32.gmra.mxu0 %v4805
      %v5352 = vpop.f32.mrf.mxu0
      %v5353 = vadd.f32 0.0, %v5352
      %v5354 = vpop.f32.mrf.mxu0
      %v5355 = vadd.f32 0.0, %v5354
      %5356 = vmatprep.mubr.f32.mxu0 %v4808
      %5357 = vmatmul.mubr.f32.gmra.mxu0 %v4807
      %v5358 = vpop.f32.mrf.mxu0
      %v5359 = vadd.f32 0.0, %v5358
      %v5360 = vpop.f32.mrf.mxu0
      %v5361 = vadd.f32 0.0, %v5360
      %5362 = vmatprep.mubr.f32.mxu0 %v4810
      %5363 = vmatmul.mubr.f32.gmra.mxu0 %v4809
      %v5364 = vpop.f32.mrf.mxu0
      %v5365 = vadd.f32 0.0, %v5364
      %v5366 = vpop.f32.mrf.mxu0
      %v5367 = vadd.f32 0.0, %v5366
      %5368 = vmatprep.mubr.f32.mxu0 %v4812
      %5369 = vmatmul.mubr.f32.gmra.mxu0 %v4811
      %v5370 = vpop.f32.mrf.mxu0
      %v5371 = vadd.f32 0.0, %v5370
      %v5372 = vpop.f32.mrf.mxu0
      %v5373 = vadd.f32 0.0, %v5372
      %5374 = vmatprep.mubr.f32.mxu0 %v4814
      %5375 = vmatmul.mubr.f32.gmra.mxu0 %v4813
      %v5376 = vpop.f32.mrf.mxu0
      %v5377 = vadd.f32 0.0, %v5376
      %v5378 = vpop.f32.mrf.mxu0
      %v5379 = vadd.f32 0.0, %v5378
      %5380 = vmatprep.mubr.f32.mxu0 %v4816
      %5381 = vmatmul.mubr.f32.gmra.mxu0 %v4815
      %v5382 = vpop.f32.mrf.mxu0
      %v5383 = vadd.f32 0.0, %v5382
      %v5384 = vpop.f32.mrf.mxu0
      %v5385 = vadd.f32 0.0, %v5384
      %5386 = vmatprep.mubr.f32.mxu0 %v4818
      %5387 = vmatmul.mubr.f32.gmra.mxu0 %v4817
      %v5388 = vpop.f32.mrf.mxu0
      %v5389 = vadd.f32 0.0, %v5388
      %v5390 = vpop.f32.mrf.mxu0
      %v5391 = vadd.f32 0.0, %v5390
      %5392 = vmatprep.mubr.f32.mxu0 %v4820
      %5393 = vmatmul.mubr.f32.gmra.mxu0 %v4819
      %v5394 = vpop.f32.mrf.mxu0
      %v5395 = vadd.f32 0.0, %v5394
      %v5396 = vpop.f32.mrf.mxu0
      %v5397 = vadd.f32 0.0, %v5396
      %5398 = vdwg.mxu0
      %5399 = vmatprep.subr.mxu0 %v4946
      %5400 = vmatpush1.msra.mxu0 %v4945
      %5401 = vmatprep.subr.mxu0 %v4938
      %5402 = vmatpush1.msra.mxu0 %v4937
      %5403 = vmatprep.subr.mxu0 %v4930
      %5404 = vmatpush1.msra.mxu0 %v4929
      %5405 = vmatprep.subr.mxu0 %v4922
      %5406 = vmatpush1.msra.mxu0 %v4921
      %5407 = vmatprep.subr.mxu0 %v4914
      %5408 = vmatpush1.msra.mxu0 %v4913
      %5409 = vmatprep.subr.mxu0 %v4906
      %5410 = vmatpush1.msra.mxu0 %v4905
      %5411 = vmatprep.subr.mxu0 %v4898
      %5412 = vmatpush1.msra.mxu0 %v4897
      %5413 = vmatprep.subr.mxu0 %v4890
      %5414 = vmatpush1.msra.mxu0 %v4889
      %5415 = vmatprep.subr.mxu0 %v4882
      %5416 = vmatpush1.msra.mxu0 %v4881
      %5417 = vmatprep.subr.mxu0 %v4874
      %5418 = vmatpush1.msra.mxu0 %v4873
      %5419 = vmatprep.subr.mxu0 %v4866
      %5420 = vmatpush1.msra.mxu0 %v4865
      %5421 = vmatprep.subr.mxu0 %v4858
      %5422 = vmatpush1.msra.mxu0 %v4857
      %5423 = vmatprep.subr.mxu0 %v4850
      %5424 = vmatpush1.msra.mxu0 %v4849
      %5425 = vmatprep.subr.mxu0 %v4842
      %5426 = vmatpush1.msra.mxu0 %v4841
      %5427 = vmatprep.subr.mxu0 %v4834
      %5428 = vmatpush1.msra.mxu0 %v4833
      %5429 = vmatprep.subr.mxu0 %v4826
      %5430 = vmatpush1.msra.mxu0 %v4825
      %5431 = vmatprep.subr.mxu0 %v5074
      %5432 = vmatpush2.msra.mxu0 %v5073
      %5433 = vmatprep.subr.mxu0 %v5066
      %5434 = vmatpush2.msra.mxu0 %v5065
      %5435 = vmatprep.subr.mxu0 %v5058
      %5436 = vmatpush2.msra.mxu0 %v5057
      %5437 = vmatprep.subr.mxu0 %v5050
      %5438 = vmatpush2.msra.mxu0 %v5049
      %5439 = vmatprep.subr.mxu0 %v5042
      %5440 = vmatpush2.msra.mxu0 %v5041
      %5441 = vmatprep.subr.mxu0 %v5034
      %5442 = vmatpush2.msra.mxu0 %v5033
      %5443 = vmatprep.subr.mxu0 %v5026
      %5444 = vmatpush2.msra.mxu0 %v5025
      %5445 = vmatprep.subr.mxu0 %v5018
      %5446 = vmatpush2.msra.mxu0 %v5017
      %5447 = vmatprep.subr.mxu0 %v5010
      %5448 = vmatpush2.msra.mxu0 %v5009
      %5449 = vmatprep.subr.mxu0 %v5002
      %5450 = vmatpush2.msra.mxu0 %v5001
      %5451 = vmatprep.subr.mxu0 %v4994
      %5452 = vmatpush2.msra.mxu0 %v4993
      %5453 = vmatprep.subr.mxu0 %v4986
      %5454 = vmatpush2.msra.mxu0 %v4985
      %5455 = vmatprep.subr.mxu0 %v4978
      %5456 = vmatpush2.msra.mxu0 %v4977
      %5457 = vmatprep.subr.mxu0 %v4970
      %5458 = vmatpush2.msra.mxu0 %v4969
      %5459 = vmatprep.subr.mxu0 %v4962
      %5460 = vmatpush2.msra.mxu0 %v4961
      %5461 = vmatprep.subr.mxu0 %v4954
      %5462 = vmatpush2.msra.mxu0 %v4953
      %5463 = vmatprep.mubr.f32.mxu0 %v4790
      %5464 = vmatmul.mubr.f32.gmra.mxu0 %v4789
      %v5465 = vpop.f32.mrf.mxu0
      %v5466 = vadd.f32 0.0, %v5465
      %v5467 = vpop.f32.mrf.mxu0
      %v5468 = vadd.f32 0.0, %v5467
      %5469 = vmatprep.mubr.f32.mxu0 %v4792
      %5470 = vmatmul.mubr.f32.gmra.mxu0 %v4791
      %v5471 = vpop.f32.mrf.mxu0
      %v5472 = vadd.f32 0.0, %v5471
      %v5473 = vpop.f32.mrf.mxu0
      %v5474 = vadd.f32 0.0, %v5473
      %5475 = vmatprep.mubr.f32.mxu0 %v4794
      %5476 = vmatmul.mubr.f32.gmra.mxu0 %v4793
      %v5477 = vpop.f32.mrf.mxu0
      %v5478 = vadd.f32 0.0, %v5477
      %v5479 = vpop.f32.mrf.mxu0
      %v5480 = vadd.f32 0.0, %v5479
      %5481 = vmatprep.mubr.f32.mxu0 %v4796
      %5482 = vmatmul.mubr.f32.gmra.mxu0 %v4795
      %v5483 = vpop.f32.mrf.mxu0
      %v5484 = vadd.f32 0.0, %v5483
      %v5485 = vpop.f32.mrf.mxu0
      %v5486 = vadd.f32 0.0, %v5485
      %5487 = vmatprep.mubr.f32.mxu0 %v4798
      %5488 = vmatmul.mubr.f32.gmra.mxu0 %v4797
      %v5489 = vpop.f32.mrf.mxu0
      %v5490 = vadd.f32 0.0, %v5489
      %v5491 = vpop.f32.mrf.mxu0
      %v5492 = vadd.f32 0.0, %v5491
      %5493 = vmatprep.mubr.f32.mxu0 %v4800
      %5494 = vmatmul.mubr.f32.gmra.mxu0 %v4799
      %v5495 = vpop.f32.mrf.mxu0
      %v5496 = vadd.f32 0.0, %v5495
      %v5497 = vpop.f32.mrf.mxu0
      %v5498 = vadd.f32 0.0, %v5497
      %5499 = vmatprep.mubr.f32.mxu0 %v4802
      %5500 = vmatmul.mubr.f32.gmra.mxu0 %v4801
      %v5501 = vpop.f32.mrf.mxu0
      %v5502 = vadd.f32 0.0, %v5501
      %v5503 = vpop.f32.mrf.mxu0
      %v5504 = vadd.f32 0.0, %v5503
      %5505 = vmatprep.mubr.f32.mxu0 %v4804
      %5506 = vmatmul.mubr.f32.gmra.mxu0 %v4803
      %v5507 = vpop.f32.mrf.mxu0
      %v5508 = vadd.f32 0.0, %v5507
      %v5509 = vpop.f32.mrf.mxu0
      %v5510 = vadd.f32 0.0, %v5509
      %5511 = vmatprep.mubr.f32.mxu0 %v4806
      %5512 = vmatmul.mubr.f32.gmra.mxu0 %v4805
      %v5513 = vpop.f32.mrf.mxu0
      %v5514 = vadd.f32 0.0, %v5513
      %v5515 = vpop.f32.mrf.mxu0
      %v5516 = vadd.f32 0.0, %v5515
      %5517 = vmatprep.mubr.f32.mxu0 %v4808
      %5518 = vmatmul.mubr.f32.gmra.mxu0 %v4807
      %v5519 = vpop.f32.mrf.mxu0
      %v5520 = vadd.f32 0.0, %v5519
      %v5521 = vpop.f32.mrf.mxu0
      %v5522 = vadd.f32 0.0, %v5521
      %5523 = vmatprep.mubr.f32.mxu0 %v4810
      %5524 = vmatmul.mubr.f32.gmra.mxu0 %v4809
      %v5525 = vpop.f32.mrf.mxu0
      %v5526 = vadd.f32 0.0, %v5525
      %v5527 = vpop.f32.mrf.mxu0
      %v5528 = vadd.f32 0.0, %v5527
      %5529 = vmatprep.mubr.f32.mxu0 %v4812
      %5530 = vmatmul.mubr.f32.gmra.mxu0 %v4811
      %v5531 = vpop.f32.mrf.mxu0
      %v5532 = vadd.f32 0.0, %v5531
      %v5533 = vpop.f32.mrf.mxu0
      %v5534 = vadd.f32 0.0, %v5533
      %5535 = vmatprep.mubr.f32.mxu0 %v4814
      %5536 = vmatmul.mubr.f32.gmra.mxu0 %v4813
      %v5537 = vpop.f32.mrf.mxu0
      %v5538 = vadd.f32 0.0, %v5537
      %v5539 = vpop.f32.mrf.mxu0
      %v5540 = vadd.f32 0.0, %v5539
      %5541 = vmatprep.mubr.f32.mxu0 %v4816
      %5542 = vmatmul.mubr.f32.gmra.mxu0 %v4815
      %v5543 = vpop.f32.mrf.mxu0
      %v5544 = vadd.f32 0.0, %v5543
      %v5545 = vpop.f32.mrf.mxu0
      %v5546 = vadd.f32 0.0, %v5545
      %5547 = vmatprep.mubr.f32.mxu0 %v4818
      %5548 = vmatmul.mubr.f32.gmra.mxu0 %v4817
      %v5549 = vpop.f32.mrf.mxu0
      %v5550 = vadd.f32 0.0, %v5549
      %v5551 = vpop.f32.mrf.mxu0
      %v5552 = vadd.f32 0.0, %v5551
      %5553 = vmatprep.mubr.f32.mxu0 %v4820
      %5554 = vmatmul.mubr.f32.gmra.mxu0 %v4819
      %v5555 = vpop.f32.mrf.mxu0
      %v5556 = vadd.f32 0.0, %v5555
      %v5557 = vpop.f32.mrf.mxu0
      %v5558 = vadd.f32 0.0, %v5557
      %5559 = vdwg.mxu0
      %5560 = vmatprep.subr.mxu0 %v4948
      %5561 = vmatpush1.msra.mxu0 %v4947
      %5562 = vmatprep.subr.mxu0 %v4940
      %5563 = vmatpush1.msra.mxu0 %v4939
      %5564 = vmatprep.subr.mxu0 %v4932
      %5565 = vmatpush1.msra.mxu0 %v4931
      %5566 = vmatprep.subr.mxu0 %v4924
      %5567 = vmatpush1.msra.mxu0 %v4923
      %5568 = vmatprep.subr.mxu0 %v4916
      %5569 = vmatpush1.msra.mxu0 %v4915
      %5570 = vmatprep.subr.mxu0 %v4908
      %5571 = vmatpush1.msra.mxu0 %v4907
      %5572 = vmatprep.subr.mxu0 %v4900
      %5573 = vmatpush1.msra.mxu0 %v4899
      %5574 = vmatprep.subr.mxu0 %v4892
      %5575 = vmatpush1.msra.mxu0 %v4891
      %5576 = vmatprep.subr.mxu0 %v4884
      %5577 = vmatpush1.msra.mxu0 %v4883
      %5578 = vmatprep.subr.mxu0 %v4876
      %5579 = vmatpush1.msra.mxu0 %v4875
      %5580 = vmatprep.subr.mxu0 %v4868
      %5581 = vmatpush1.msra.mxu0 %v4867
      %5582 = vmatprep.subr.mxu0 %v4860
      %5583 = vmatpush1.msra.mxu0 %v4859
      %5584 = vmatprep.subr.mxu0 %v4852
      %5585 = vmatpush1.msra.mxu0 %v4851
      %5586 = vmatprep.subr.mxu0 %v4844
      %5587 = vmatpush1.msra.mxu0 %v4843
      %5588 = vmatprep.subr.mxu0 %v4836
      %5589 = vmatpush1.msra.mxu0 %v4835
      %5590 = vmatprep.subr.mxu0 %v4828
      %5591 = vmatpush1.msra.mxu0 %v4827
      %5592 = vmatprep.subr.mxu0 %v5076
      %5593 = vmatpush2.msra.mxu0 %v5075
      %5594 = vmatprep.subr.mxu0 %v5068
      %5595 = vmatpush2.msra.mxu0 %v5067
      %5596 = vmatprep.subr.mxu0 %v5060
      %5597 = vmatpush2.msra.mxu0 %v5059
      %5598 = vmatprep.subr.mxu0 %v5052
      %5599 = vmatpush2.msra.mxu0 %v5051
      %5600 = vmatprep.subr.mxu0 %v5044
      %5601 = vmatpush2.msra.mxu0 %v5043
      %5602 = vmatprep.subr.mxu0 %v5036
      %5603 = vmatpush2.msra.mxu0 %v5035
      %5604 = vmatprep.subr.mxu0 %v5028
      %5605 = vmatpush2.msra.mxu0 %v5027
      %5606 = vmatprep.subr.mxu0 %v5020
      %5607 = vmatpush2.msra.mxu0 %v5019
      %5608 = vmatprep.subr.mxu0 %v5012
      %5609 = vmatpush2.msra.mxu0 %v5011
      %5610 = vmatprep.subr.mxu0 %v5004
      %5611 = vmatpush2.msra.mxu0 %v5003
      %5612 = vmatprep.subr.mxu0 %v4996
      %5613 = vmatpush2.msra.mxu0 %v4995
      %5614 = vmatprep.subr.mxu0 %v4988
      %5615 = vmatpush2.msra.mxu0 %v4987
      %5616 = vmatprep.subr.mxu0 %v4980
      %5617 = vmatpush2.msra.mxu0 %v4979
      %5618 = vmatprep.subr.mxu0 %v4972
      %5619 = vmatpush2.msra.mxu0 %v4971
      %5620 = vmatprep.subr.mxu0 %v4964
      %5621 = vmatpush2.msra.mxu0 %v4963
      %5622 = vmatprep.subr.mxu0 %v4956
      %5623 = vmatpush2.msra.mxu0 %v4955
      %5624 = vmatprep.mubr.f32.mxu0 %v4790
      %5625 = vmatmul.mubr.f32.gmra.mxu0 %v4789
      %v5626 = vpop.f32.mrf.mxu0
      %v5627 = vadd.f32 0.0, %v5626
      %v5628 = vpop.f32.mrf.mxu0
      %v5629 = vadd.f32 0.0, %v5628
      %5630 = vmatprep.mubr.f32.mxu0 %v4792
      %5631 = vmatmul.mubr.f32.gmra.mxu0 %v4791
      %v5632 = vpop.f32.mrf.mxu0
      %v5633 = vadd.f32 0.0, %v5632
      %v5634 = vpop.f32.mrf.mxu0
      %v5635 = vadd.f32 0.0, %v5634
      %5636 = vmatprep.mubr.f32.mxu0 %v4794
      %5637 = vmatmul.mubr.f32.gmra.mxu0 %v4793
      %v5638 = vpop.f32.mrf.mxu0
      %v5639 = vadd.f32 0.0, %v5638
      %v5640 = vpop.f32.mrf.mxu0
      %v5641 = vadd.f32 0.0, %v5640
      %5642 = vmatprep.mubr.f32.mxu0 %v4796
      %5643 = vmatmul.mubr.f32.gmra.mxu0 %v4795
      %v5644 = vpop.f32.mrf.mxu0
      %v5645 = vadd.f32 0.0, %v5644
      %v5646 = vpop.f32.mrf.mxu0
      %v5647 = vadd.f32 0.0, %v5646
      %5648 = vmatprep.mubr.f32.mxu0 %v4798
      %5649 = vmatmul.mubr.f32.gmra.mxu0 %v4797
      %v5650 = vpop.f32.mrf.mxu0
      %v5651 = vadd.f32 0.0, %v5650
      %v5652 = vpop.f32.mrf.mxu0
      %v5653 = vadd.f32 0.0, %v5652
      %5654 = vmatprep.mubr.f32.mxu0 %v4800
      %5655 = vmatmul.mubr.f32.gmra.mxu0 %v4799
      %v5656 = vpop.f32.mrf.mxu0
      %v5657 = vadd.f32 0.0, %v5656
      %v5658 = vpop.f32.mrf.mxu0
      %v5659 = vadd.f32 0.0, %v5658
      %5660 = vmatprep.mubr.f32.mxu0 %v4802
      %5661 = vmatmul.mubr.f32.gmra.mxu0 %v4801
      %v5662 = vpop.f32.mrf.mxu0
      %v5663 = vadd.f32 0.0, %v5662
      %v5664 = vpop.f32.mrf.mxu0
      %v5665 = vadd.f32 0.0, %v5664
      %5666 = vmatprep.mubr.f32.mxu0 %v4804
      %5667 = vmatmul.mubr.f32.gmra.mxu0 %v4803
      %v5668 = vpop.f32.mrf.mxu0
      %v5669 = vadd.f32 0.0, %v5668
      %v5670 = vpop.f32.mrf.mxu0
      %v5671 = vadd.f32 0.0, %v5670
      %5672 = vmatprep.mubr.f32.mxu0 %v4806
      %5673 = vmatmul.mubr.f32.gmra.mxu0 %v4805
      %v5674 = vpop.f32.mrf.mxu0
      %v5675 = vadd.f32 0.0, %v5674
      %v5676 = vpop.f32.mrf.mxu0
      %v5677 = vadd.f32 0.0, %v5676
      %5678 = vmatprep.mubr.f32.mxu0 %v4808
      %5679 = vmatmul.mubr.f32.gmra.mxu0 %v4807
      %v5680 = vpop.f32.mrf.mxu0
      %v5681 = vadd.f32 0.0, %v5680
      %v5682 = vpop.f32.mrf.mxu0
      %v5683 = vadd.f32 0.0, %v5682
      %5684 = vmatprep.mubr.f32.mxu0 %v4810
      %5685 = vmatmul.mubr.f32.gmra.mxu0 %v4809
      %v5686 = vpop.f32.mrf.mxu0
      %v5687 = vadd.f32 0.0, %v5686
      %v5688 = vpop.f32.mrf.mxu0
      %v5689 = vadd.f32 0.0, %v5688
      %5690 = vmatprep.mubr.f32.mxu0 %v4812
      %5691 = vmatmul.mubr.f32.gmra.mxu0 %v4811
      %v5692 = vpop.f32.mrf.mxu0
      %v5693 = vadd.f32 0.0, %v5692
      %v5694 = vpop.f32.mrf.mxu0
      %v5695 = vadd.f32 0.0, %v5694
      %5696 = vmatprep.mubr.f32.mxu0 %v4814
      %5697 = vmatmul.mubr.f32.gmra.mxu0 %v4813
      %v5698 = vpop.f32.mrf.mxu0
      %v5699 = vadd.f32 0.0, %v5698
      %v5700 = vpop.f32.mrf.mxu0
      %v5701 = vadd.f32 0.0, %v5700
      %5702 = vmatprep.mubr.f32.mxu0 %v4816
      %5703 = vmatmul.mubr.f32.gmra.mxu0 %v4815
      %v5704 = vpop.f32.mrf.mxu0
      %v5705 = vadd.f32 0.0, %v5704
      %v5706 = vpop.f32.mrf.mxu0
      %v5707 = vadd.f32 0.0, %v5706
      %5708 = vmatprep.mubr.f32.mxu0 %v4818
      %5709 = vmatmul.mubr.f32.gmra.mxu0 %v4817
      %v5710 = vpop.f32.mrf.mxu0
      %v5711 = vadd.f32 0.0, %v5710
      %v5712 = vpop.f32.mrf.mxu0
      %v5713 = vadd.f32 0.0, %v5712
      %5714 = vmatprep.mubr.f32.mxu0 %v4820
      %5715 = vmatmul.mubr.f32.gmra.mxu0 %v4819
      %v5716 = vpop.f32.mrf.mxu0
      %v5717 = vadd.f32 0.0, %v5716
      %v5718 = vpop.f32.mrf.mxu0
      %v5719 = vadd.f32 0.0, %v5718
      %5720 = vdwg.mxu0
      %5721 = vst [vmem:[%s460 + $0x1000] sm:$0xff] %v5144
      %5722 = vst [vmem:[%s460 + $0x1008] sm:$0xff] %v5146
      %5723 = vst [vmem:[%s460 + $0x1010] sm:$0xff] %v5305
      %5724 = vst [vmem:[%s460 + $0x1018] sm:$0xff] %v5307
      %5725 = vst [vmem:[%s460 + $0x1020] sm:$0xff] %v5466
      %5726 = vst [vmem:[%s460 + $0x1028] sm:$0xff] %v5468
      %5727 = vst [vmem:[%s460 + $0x1030] sm:$0xff] %v5627
      %5728 = vst [vmem:[%s460 + $0x1038] sm:$0xff] %v5629
      %5729 = vst [vmem:[%s460 + $0x1040] sm:$0xff] %v5150
      %5730 = vst [vmem:[%s460 + $0x1048] sm:$0xff] %v5152
      %5731 = vst [vmem:[%s460 + $0x1050] sm:$0xff] %v5311
      %5732 = vst [vmem:[%s460 + $0x1058] sm:$0xff] %v5313
      %5733 = vst [vmem:[%s460 + $0x1060] sm:$0xff] %v5472
      %5734 = vst [vmem:[%s460 + $0x1068] sm:$0xff] %v5474
      %5735 = vst [vmem:[%s460 + $0x1070] sm:$0xff] %v5633
      %5736 = vst [vmem:[%s460 + $0x1078] sm:$0xff] %v5635
      %5737 = vst [vmem:[%s460 + $0x1080] sm:$0xff] %v5156
      %5738 = vst [vmem:[%s460 + $0x1088] sm:$0xff] %v5158
      %5739 = vst [vmem:[%s460 + $0x1090] sm:$0xff] %v5317
      %5740 = vst [vmem:[%s460 + $0x1098] sm:$0xff] %v5319
      %5741 = vst [vmem:[%s460 + $0x10a0] sm:$0xff] %v5478
      %5742 = vst [vmem:[%s460 + $0x10a8] sm:$0xff] %v5480
      %5743 = vst [vmem:[%s460 + $0x10b0] sm:$0xff] %v5639
      %5744 = vst [vmem:[%s460 + $0x10b8] sm:$0xff] %v5641
      %5745 = vst [vmem:[%s460 + $0x10c0] sm:$0xff] %v5162
      %5746 = vst [vmem:[%s460 + $0x10c8] sm:$0xff] %v5164
      %5747 = vst [vmem:[%s460 + $0x10d0] sm:$0xff] %v5323
      %5748 = vst [vmem:[%s460 + $0x10d8] sm:$0xff] %v5325
      %5749 = vst [vmem:[%s460 + $0x10e0] sm:$0xff] %v5484
      %5750 = vst [vmem:[%s460 + $0x10e8] sm:$0xff] %v5486
      %5751 = vst [vmem:[%s460 + $0x10f0] sm:$0xff] %v5645
      %5752 = vst [vmem:[%s460 + $0x10f8] sm:$0xff] %v5647
      %5753 = vst [vmem:[%s460 + $0x1100] sm:$0xff] %v5168
      %5754 = vst [vmem:[%s460 + $0x1108] sm:$0xff] %v5170
      %5755 = vst [vmem:[%s460 + $0x1110] sm:$0xff] %v5329
      %5756 = vst [vmem:[%s460 + $0x1118] sm:$0xff] %v5331
      %5757 = vst [vmem:[%s460 + $0x1120] sm:$0xff] %v5490
      %5758 = vst [vmem:[%s460 + $0x1128] sm:$0xff] %v5492
      %5759 = vst [vmem:[%s460 + $0x1130] sm:$0xff] %v5651
      %5760 = vst [vmem:[%s460 + $0x1138] sm:$0xff] %v5653
      %5761 = vst [vmem:[%s460 + $0x1140] sm:$0xff] %v5174
      %5762 = vst [vmem:[%s460 + $0x1148] sm:$0xff] %v5176
      %5763 = vst [vmem:[%s460 + $0x1150] sm:$0xff] %v5335
      %5764 = vst [vmem:[%s460 + $0x1158] sm:$0xff] %v5337
      %5765 = vst [vmem:[%s460 + $0x1160] sm:$0xff] %v5496
      %5766 = vst [vmem:[%s460 + $0x1168] sm:$0xff] %v5498
      %5767 = vst [vmem:[%s460 + $0x1170] sm:$0xff] %v5657
      %5768 = vst [vmem:[%s460 + $0x1178] sm:$0xff] %v5659
      %5769 = vst [vmem:[%s460 + $0x1180] sm:$0xff] %v5180
      %5770 = vst [vmem:[%s460 + $0x1188] sm:$0xff] %v5182
      %5771 = vst [vmem:[%s460 + $0x1190] sm:$0xff] %v5341
      %5772 = vst [vmem:[%s460 + $0x1198] sm:$0xff] %v5343
      %5773 = vst [vmem:[%s460 + $0x11a0] sm:$0xff] %v5502
      %5774 = vst [vmem:[%s460 + $0x11a8] sm:$0xff] %v5504
      %5775 = vst [vmem:[%s460 + $0x11b0] sm:$0xff] %v5663
      %5776 = vst [vmem:[%s460 + $0x11b8] sm:$0xff] %v5665
      %5777 = vst [vmem:[%s460 + $0x11c0] sm:$0xff] %v5186
      %5778 = vst [vmem:[%s460 + $0x11c8] sm:$0xff] %v5188
      %5779 = vst [vmem:[%s460 + $0x11d0] sm:$0xff] %v5347
      %5780 = vst [vmem:[%s460 + $0x11d8] sm:$0xff] %v5349
      %5781 = vst [vmem:[%s460 + $0x11e0] sm:$0xff] %v5508
      %5782 = vst [vmem:[%s460 + $0x11e8] sm:$0xff] %v5510
      %5783 = vst [vmem:[%s460 + $0x11f0] sm:$0xff] %v5669
      %5784 = vst [vmem:[%s460 + $0x11f8] sm:$0xff] %v5671
      %5785 = vst [vmem:[%s460 + $0x1200] sm:$0xff] %v5192
      %5786 = vst [vmem:[%s460 + $0x1208] sm:$0xff] %v5194
      %5787 = vst [vmem:[%s460 + $0x1210] sm:$0xff] %v5353
      %5788 = vst [vmem:[%s460 + $0x1218] sm:$0xff] %v5355
      %5789 = vst [vmem:[%s460 + $0x1220] sm:$0xff] %v5514
      %5790 = vst [vmem:[%s460 + $0x1228] sm:$0xff] %v5516
      %5791 = vst [vmem:[%s460 + $0x1230] sm:$0xff] %v5675
      %5792 = vst [vmem:[%s460 + $0x1238] sm:$0xff] %v5677
      %5793 = vst [vmem:[%s460 + $0x1240] sm:$0xff] %v5198
      %5794 = vst [vmem:[%s460 + $0x1248] sm:$0xff] %v5200
      %5795 = vst [vmem:[%s460 + $0x1250] sm:$0xff] %v5359
      %5796 = vst [vmem:[%s460 + $0x1258] sm:$0xff] %v5361
      %5797 = vst [vmem:[%s460 + $0x1260] sm:$0xff] %v5520
      %5798 = vst [vmem:[%s460 + $0x1268] sm:$0xff] %v5522
      %5799 = vst [vmem:[%s460 + $0x1270] sm:$0xff] %v5681
      %5800 = vst [vmem:[%s460 + $0x1278] sm:$0xff] %v5683
      %5801 = vst [vmem:[%s460 + $0x1280] sm:$0xff] %v5204
      %5802 = vst [vmem:[%s460 + $0x1288] sm:$0xff] %v5206
      %5803 = vst [vmem:[%s460 + $0x1290] sm:$0xff] %v5365
      %5804 = vst [vmem:[%s460 + $0x1298] sm:$0xff] %v5367
      %5805 = vst [vmem:[%s460 + $0x12a0] sm:$0xff] %v5526
      %5806 = vst [vmem:[%s460 + $0x12a8] sm:$0xff] %v5528
      %5807 = vst [vmem:[%s460 + $0x12b0] sm:$0xff] %v5687
      %5808 = vst [vmem:[%s460 + $0x12b8] sm:$0xff] %v5689
      %5809 = vst [vmem:[%s460 + $0x12c0] sm:$0xff] %v5210
      %5810 = vst [vmem:[%s460 + $0x12c8] sm:$0xff] %v5212
      %5811 = vst [vmem:[%s460 + $0x12d0] sm:$0xff] %v5371
      %5812 = vst [vmem:[%s460 + $0x12d8] sm:$0xff] %v5373
      %5813 = vst [vmem:[%s460 + $0x12e0] sm:$0xff] %v5532
      %5814 = vst [vmem:[%s460 + $0x12e8] sm:$0xff] %v5534
      %5815 = vst [vmem:[%s460 + $0x12f0] sm:$0xff] %v5693
      %5816 = vst [vmem:[%s460 + $0x12f8] sm:$0xff] %v5695
      %5817 = vst [vmem:[%s460 + $0x1300] sm:$0xff] %v5216
      %5818 = vst [vmem:[%s460 + $0x1308] sm:$0xff] %v5218
      %5819 = vst [vmem:[%s460 + $0x1310] sm:$0xff] %v5377
      %5820 = vst [vmem:[%s460 + $0x1318] sm:$0xff] %v5379
      %5821 = vst [vmem:[%s460 + $0x1320] sm:$0xff] %v5538
      %5822 = vst [vmem:[%s460 + $0x1328] sm:$0xff] %v5540
      %5823 = vst [vmem:[%s460 + $0x1330] sm:$0xff] %v5699
      %5824 = vst [vmem:[%s460 + $0x1338] sm:$0xff] %v5701
      %5825 = vst [vmem:[%s460 + $0x1340] sm:$0xff] %v5222
      %5826 = vst [vmem:[%s460 + $0x1348] sm:$0xff] %v5224
      %5827 = vst [vmem:[%s460 + $0x1350] sm:$0xff] %v5383
      %5828 = vst [vmem:[%s460 + $0x1358] sm:$0xff] %v5385
      %5829 = vst [vmem:[%s460 + $0x1360] sm:$0xff] %v5544
      %5830 = vst [vmem:[%s460 + $0x1368] sm:$0xff] %v5546
      %5831 = vst [vmem:[%s460 + $0x1370] sm:$0xff] %v5705
      %5832 = vst [vmem:[%s460 + $0x1378] sm:$0xff] %v5707
      %5833 = vst [vmem:[%s460 + $0x1380] sm:$0xff] %v5228
      %5834 = vst [vmem:[%s460 + $0x1388] sm:$0xff] %v5230
      %5835 = vst [vmem:[%s460 + $0x1390] sm:$0xff] %v5389
      %5836 = vst [vmem:[%s460 + $0x1398] sm:$0xff] %v5391
      %5837 = vst [vmem:[%s460 + $0x13a0] sm:$0xff] %v5550
      %5838 = vst [vmem:[%s460 + $0x13a8] sm:$0xff] %v5552
      %5839 = vst [vmem:[%s460 + $0x13b0] sm:$0xff] %v5711
      %5840 = vst [vmem:[%s460 + $0x13b8] sm:$0xff] %v5713
      %5841 = vst [vmem:[%s460 + $0x13c0] sm:$0xff] %v5234
      %5842 = vst [vmem:[%s460 + $0x13c8] sm:$0xff] %v5236
      %5843 = vst [vmem:[%s460 + $0x13d0] sm:$0xff] %v5395
      %5844 = vst [vmem:[%s460 + $0x13d8] sm:$0xff] %v5397
      %5845 = vst [vmem:[%s460 + $0x13e0] sm:$0xff] %v5556
      %5846 = vst [vmem:[%s460 + $0x13e8] sm:$0xff] %v5558
      %5847 = vst [vmem:[%s460 + $0x13f0] sm:$0xff] %v5717
      %5848 = vst [vmem:[%s460 + $0x13f8] sm:$0xff] %v5719
      %p5849 = scmp.lt.s32.totalorder %s24, 1
      %s5850 = scalar_select %p5849, %s24, 1
      %s5851 = smul.addr %s5850, 640
      %s5852 = smul.addr %s5851, 8
      %s5853 = scalar_lea.vmem %s13, %s5852
      // Predicated region
      $region73: #{aspp_forward.1} parent=71 // pred_check
        %p5854 = pneg %p325
      $region74: #{aspp_forward.1} parent=71 // pred_check_branch
        %5856 = sbr.rel (%p5854) target = $region76
      $region75: #{aspp_forward.1} parent=71 // pred_region
        _
      $region76: #{aspp_forward.1} parent=71 // pred_fallthru
        _
    $region72: #{aspp_forward.1} parent=5 // pred_fallthru
      _
    %p5857 = scmp.le.s32.totalorder 2, %s19
    // Predicated region
    $region77: #{aspp_forward.1} parent=5 // pred_check
      %p5858 = pneg %p5857
    $region78: #{aspp_forward.1} parent=5 // pred_check_branch
      %5860 = sbr.rel (%p5858) target = $region80
    $region79: #{aspp_forward.1} parent=5 // pred_region
      %s5861 = ssub.s32 %s19, 2
      // Predicated region
      $region81: #{aspp_forward.1} parent=79 // pred_check
        %p5862 = pneg %p331
      $region82: #{aspp_forward.1} parent=79 // pred_check_branch
        %5864 = sbr.rel (%p5862) target = $region84
      $region83: #{aspp_forward.1} parent=79 // pred_region
        %p5865 = scmp.lt.s32.totalorder %s25, 1
        %s5866 = scalar_select %p5865, %s25, 1
        %s5867 = smul.addr %s5866, 640
        %s5868 = smul.addr %s5867, 8
        %s5869 = scalar_lea.vmem %s13, %s5868
      $region84: #{aspp_forward.1} parent=79 // pred_fallthru
        _
    $region80: #{aspp_forward.1} parent=5 // pred_fallthru
      _
  $region6: #{aspp_forward.1} parent=0 // loop_footer
    %s23 = sadd.s32 1, %s19
  $region7: #{aspp_forward.1} parent=0 // loop_footer_branch
    %18 = sbr.rel target = $region3
  $region8: #{aspp_forward.1} parent=0 // loop_exit
    _

</llo_original>
